<compile_context>
chip_gen: v7x
topology: tpu7x:2x2x1
jax: 0.10.0
libtpu: 0.0.40
codegen_flags: <defaults>
</compile_context>

<pallas_src>
import functools
import math

import jax
import jax.numpy as jnp
from jax.experimental import pallas as pl
from jax.experimental.pallas import tpu as pltpu


CFG = dict(vocab=50, max_pos=32, type_vocab=2, H=32, nH=4, dH=8, I=64,
           layers=2, num_labels=3, cls_pad=128)


# ----------------------------- in-kernel helpers -----------------------------

def _layernorm(h, g, b, eps=1e-12):
    """LayerNorm over the last axis (BERT eps = 1e-12), fp32."""
    mu = jnp.mean(h, axis=-1, keepdims=True)
    d = h - mu
    var = jnp.mean(d * d, axis=-1, keepdims=True)
    return d * jax.lax.rsqrt(var + eps) * g + b


def _mm(a, w):
    """Matmul with bf16 MXU operands and fp32 accumulation."""
    return jnp.dot(a.astype(jnp.bfloat16), w.astype(jnp.bfloat16),
                   preferred_element_type=jnp.float32)


# --------------------------------- the kernel --------------------------------

def _bert_kernel(emb_ref, mask_ref,
                 emb_g_ref, emb_b_ref,
                 wqkv_ref, bqkv_ref, wo_ref, bo_ref,
                 ln1_g_ref, ln1_b_ref,
                 w1_ref, b1_ref, w2_ref, b2_ref,
                 ln2_g_ref, ln2_b_ref,
                 pool_w_ref, pool_b_ref, cls_w_ref, cls_b_ref,
                 o_ref, *, B, S, H, nH, dH, L):
    scale = 1.0 / math.sqrt(dH)
    inv_sqrt2 = 1.0 / math.sqrt(2.0)

    # Block-diagonal (over batch) additive key mask, built in the wrapper.
    mask = mask_ref[...]                                        # (B*S, B*S) fp32

    # Embedding LayerNorm (no residual).
    x = _layernorm(emb_ref[...], emb_g_ref[...], emb_b_ref[...])   # (B*S, H) fp32

    for l in range(L):
        # ---- fused QKV projection: one matmul, N = 3H ----
        qkv = _mm(x, wqkv_ref[l]) + bqkv_ref[l]                 # (B*S, 3H) fp32
        wo = wo_ref[l]                                          # (H, H)

        # ---- attention: single loop over heads, batch handled by the block mask,
        #      output projection folded per head ----
        attn = jnp.zeros((B * S, H), jnp.float32)
        for h in range(nH):
            lo, hi = h * dH, (h + 1) * dH
            qh = qkv[:, 0 * H + lo:0 * H + hi].astype(jnp.bfloat16)   # (B*S, dH)
            kh = qkv[:, 1 * H + lo:1 * H + hi].astype(jnp.bfloat16)
            vh = qkv[:, 2 * H + lo:2 * H + hi].astype(jnp.bfloat16)
            s = jax.lax.dot_general(                            # q @ k^T, fp32 acc
                qh, kh, (((1,), (1,)), ((), ())),
                preferred_element_type=jnp.float32)             # (B*S, B*S)
            s = s * scale + mask                                # batch-block + key mask
            s = s - jnp.max(s, axis=-1, keepdims=True)
            p = jnp.exp(s)
            p = p * pl.reciprocal(jnp.sum(p, axis=-1, keepdims=True),
                                  approx=True)
            ctx = _mm(p, vh)                                    # (B*S, dH)
            attn = attn + _mm(ctx, wo[lo:hi, :])                # fold out-projection
        x = _layernorm(attn + bo_ref[l] + x, ln1_g_ref[l], ln1_b_ref[l])

        # ---- feed-forward (exact erf GELU, as in HF BERT "gelu") ----
        ffn = _mm(x, w1_ref[l]) + b1_ref[l]                     # (B*S, I)
        ffn = 0.5 * ffn * (1.0 + jax.lax.erf(ffn * inv_sqrt2))
        x = _layernorm(_mm(ffn, w2_ref[l]) + b2_ref[l] + x,
                       ln2_g_ref[l], ln2_b_ref[l])

    # ---- pooler (tanh) + classifier on the [CLS] token of each batch row,
    #      batched into two matmuls and one lane-dense (B, 128) store ----
    cls = jnp.concatenate([x[b * S:b * S + 1, :] for b in range(B)], axis=0)  # (B, H)
    pooled = jnp.tanh(_mm(cls, pool_w_ref[...]) + pool_b_ref[...])            # (B, H)
    o_ref[...] = _mm(pooled, cls_w_ref[...]) + cls_b_ref[...]                 # (B, 128)


# ----------------------------- model definition ------------------------------

def init_params(key):
    c = CFG
    H, I, L = c["H"], c["I"], c["layers"]
    keys = iter(jax.random.split(key, 64))

    def w(shape, scale=0.02):
        return (scale * jax.random.normal(next(keys), shape)).astype(jnp.float32)

    zeros = lambda s: jnp.zeros(s, jnp.float32)
    ones = lambda s: jnp.ones(s, jnp.float32)

    # Per-layer weights stacked along a leading layer axis; Q/K/V fused to (H, 3H).
    wqkv = jnp.stack([jnp.concatenate([w((H, H)), w((H, H)), w((H, H))], axis=1)
                      for _ in range(L)])                       # (L, H, 3H)

    params = dict(
        word_emb=w((c["vocab"], H)),
        pos_emb=w((c["max_pos"], H)),
        type_emb=w((c["type_vocab"], H)),
        emb_ln_g=ones((1, H)), emb_ln_b=zeros((1, H)),
        wqkv=wqkv, bqkv=zeros((L, 1, 3 * H)),
        wo=jnp.stack([w((H, H)) for _ in range(L)]), bo=zeros((L, 1, H)),
        ln1_g=jnp.ones((L, 1, H), jnp.float32), ln1_b=zeros((L, 1, H)),
        w1=jnp.stack([w((H, I)) for _ in range(L)]), b1=zeros((L, 1, I)),
        w2=jnp.stack([w((I, H)) for _ in range(L)]), b2=zeros((L, 1, H)),
        ln2_g=jnp.ones((L, 1, H), jnp.float32), ln2_b=zeros((L, 1, H)),
        pool_w=w((H, H)), pool_b=zeros((1, H)),
    )
    # Classifier padded to a lane-dense 128-wide output; sliced back after the call.
    cls_w = w((H, c["num_labels"]))
    params["cls_w_pad"] = jnp.zeros((H, c["cls_pad"]), jnp.float32).at[
        :, :c["num_labels"]].set(cls_w)
    params["cls_b_pad"] = zeros((1, c["cls_pad"]))
    return params


def kcbert_forward(input_ids, params):
    """Inference branch of kcBERT_custom.forward (src_label is None)."""
    c = CFG
    B, S = input_ids.shape
    H, nH, dH, L = c["H"], c["nH"], c["dH"], c["layers"]

    # attention_mask = (src_input_sentence != 0); build a (B*S, B*S) additive mask
    # that is block-diagonal over the batch and masks padded keys (key-only mask,
    # exactly as BERT's extended attention mask applied per batch row).
    key_valid = (input_ids != 0).astype(jnp.float32).reshape(B * S)        # (B*S,)
    same_batch = jnp.kron(jnp.eye(B, dtype=jnp.float32),
                          jnp.ones((S, S), jnp.float32))                   # (B*S, B*S)
    allowed = same_batch * key_valid[None, :]
    mask_add = (1.0 - allowed) * -1e9                                      # (B*S, B*S)

    # BERT embeddings (frozen, eval): word + position + token_type (glue gather).
    we = jnp.take(params["word_emb"], input_ids, axis=0)        # (B, S, H)
    pe = params["pos_emb"][:S][None, :, :]                      # (1, S, H)
    te = params["type_emb"][0][None, None, :]                   # (1, 1, H) token_type=0
    emb = (we + pe + te).astype(jnp.float32).reshape(B * S, H)

    kernel = functools.partial(_bert_kernel, B=B, S=S, H=H, nH=nH, dH=dH, L=L)
    logits_pad = pl.pallas_call(
        kernel,
        out_shape=jax.ShapeDtypeStruct((B, c["cls_pad"]), jnp.float32),
        compiler_params=pltpu.CompilerParams(vmem_limit_bytes=64 << 20),
    )(emb, mask_add,
      params["emb_ln_g"], params["emb_ln_b"],
      params["wqkv"], params["bqkv"], params["wo"], params["bo"],
      params["ln1_g"], params["ln1_b"],
      params["w1"], params["b1"], params["w2"], params["b2"],
      params["ln2_g"], params["ln2_b"],
      params["pool_w"], params["pool_b"],
      params["cls_w_pad"], params["cls_b_pad"])
    return logits_pad[:, :c["num_labels"]]


# ---------------------------------- main --------------------------------------

if __name__ == "__main__":
    key = jax.random.PRNGKey(0)
    kp, ki = jax.random.split(key)
    params = init_params(kp)

    B, S = 2, 8
    input_ids = jax.random.randint(ki, (B, S), 1, CFG["vocab"], dtype=jnp.int32)
    input_ids = input_ids.at[1, -2:].set(0)   # padding tokens exercise the mask

    logits = jax.jit(kcbert_forward)(input_ids, params)
    jax.block_until_ready(logits)

    assert logits.shape == (B, CFG["num_labels"])
    assert bool(jnp.all(jnp.isfinite(logits)))
    print("KERNEL_OK")
</pallas_src>

<mosaic_0001>
module attributes {stable_mosaic.version = 11 : i64} {
  func.func @_bert_kernel(%arg0: memref<16x32xf32, #tpu.memory_space<vmem>>, %arg1: memref<16x16xf32, #tpu.memory_space<vmem>>, %arg2: memref<1x32xf32, #tpu.memory_space<vmem>>, %arg3: memref<1x32xf32, #tpu.memory_space<vmem>>, %arg4: memref<2x32x96xf32, #tpu.memory_space<vmem>>, %arg5: memref<2x1x96xf32, #tpu.memory_space<vmem>>, %arg6: memref<2x32x32xf32, #tpu.memory_space<vmem>>, %arg7: memref<2x1x32xf32, #tpu.memory_space<vmem>>, %arg8: memref<2x1x32xf32, #tpu.memory_space<vmem>>, %arg9: memref<2x1x32xf32, #tpu.memory_space<vmem>>, %arg10: memref<2x32x64xf32, #tpu.memory_space<vmem>>, %arg11: memref<2x1x64xf32, #tpu.memory_space<vmem>>, %arg12: memref<2x64x32xf32, #tpu.memory_space<vmem>>, %arg13: memref<2x1x32xf32, #tpu.memory_space<vmem>>, %arg14: memref<2x1x32xf32, #tpu.memory_space<vmem>>, %arg15: memref<2x1x32xf32, #tpu.memory_space<vmem>>, %arg16: memref<32x32xf32, #tpu.memory_space<vmem>>, %arg17: memref<1x32xf32, #tpu.memory_space<vmem>>, %arg18: memref<32x128xf32, #tpu.memory_space<vmem>>, %arg19: memref<1x128xf32, #tpu.memory_space<vmem>>, %arg20: memref<2x128xf32, #tpu.memory_space<vmem>>) attributes {dimension_semantics = [], scalar_prefetch = 0 : i64, scratch_operands = 0 : i64, tpu.core_type = #tpu.core_type<tc>} {
    %c0 = arith.constant 0 : index
    %c0_0 = arith.constant 0 : index
    %0 = vector.load %arg1[%c0, %c0_0] : memref<16x16xf32, #tpu.memory_space<vmem>>, vector<16x16xf32>
    %c0_1 = arith.constant 0 : index
    %c0_2 = arith.constant 0 : index
    %1 = vector.load %arg0[%c0_1, %c0_2] : memref<16x32xf32, #tpu.memory_space<vmem>>, vector<16x32xf32>
    %c0_3 = arith.constant 0 : index
    %c0_4 = arith.constant 0 : index
    %2 = vector.load %arg2[%c0_3, %c0_4] : memref<1x32xf32, #tpu.memory_space<vmem>>, vector<1x32xf32>
    %c0_5 = arith.constant 0 : index
    %c0_6 = arith.constant 0 : index
    %3 = vector.load %arg3[%c0_5, %c0_6] : memref<1x32xf32, #tpu.memory_space<vmem>>, vector<1x32xf32>
    %cst = arith.constant dense<0.000000e+00> : vector<16xf32>
    %4 = vector.multi_reduction <add>, %1, %cst [1] : vector<16x32xf32> to vector<16xf32>
    %5 = vector.shape_cast %4 : vector<16xf32> to vector<16x1xf32>
    %cst_7 = arith.constant 3.200000e+01 : f32
    %6 = vector.broadcast %cst_7 : f32 to vector<16x1xf32>
    %7 = arith.divf %5, %6 : vector<16x1xf32>
    %8 = vector.broadcast %7 : vector<16x1xf32> to vector<16x32xf32>
    %9 = arith.subf %1, %8 : vector<16x32xf32>
    %10 = arith.mulf %9, %9 : vector<16x32xf32>
    %cst_8 = arith.constant dense<0.000000e+00> : vector<16xf32>
    %11 = vector.multi_reduction <add>, %10, %cst_8 [1] : vector<16x32xf32> to vector<16xf32>
    %12 = vector.shape_cast %11 : vector<16xf32> to vector<16x1xf32>
    %cst_9 = arith.constant 3.200000e+01 : f32
    %13 = vector.broadcast %cst_9 : f32 to vector<16x1xf32>
    %14 = arith.divf %12, %13 : vector<16x1xf32>
    %cst_10 = arith.constant 9.99999996E-13 : f32
    %15 = vector.broadcast %cst_10 : f32 to vector<16x1xf32>
    %16 = arith.addf %14, %15 : vector<16x1xf32>
    %17 = math.rsqrt %16 : vector<16x1xf32>
    %18 = vector.broadcast %17 : vector<16x1xf32> to vector<16x32xf32>
    %19 = arith.mulf %9, %18 : vector<16x32xf32>
    %20 = vector.broadcast %2 : vector<1x32xf32> to vector<16x32xf32>
    %21 = arith.mulf %19, %20 : vector<16x32xf32>
    %22 = vector.broadcast %3 : vector<1x32xf32> to vector<16x32xf32>
    %23 = arith.addf %21, %22 : vector<16x32xf32>
    %c0_11 = arith.constant 0 : index
    %c0_12 = arith.constant 0 : index
    %c0_13 = arith.constant 0 : index
    %24 = vector.load %arg4[%c0_11, %c0_12, %c0_13] : memref<2x32x96xf32, #tpu.memory_space<vmem>>, vector<1x32x96xf32>
    %25 = vector.shape_cast %24 : vector<1x32x96xf32> to vector<32x96xf32>
    %26 = arith.truncf %23 : vector<16x32xf32> to vector<16x32xbf16>
    %27 = arith.truncf %25 : vector<32x96xf32> to vector<32x96xbf16>
    %cst_14 = arith.constant dense<0.000000e+00> : vector<16x96xf32>
    %28 = tpu.matmul %26, %27, %cst_14 {dimension_numbers = #tpu.dot_dimension_numbers<[1], [0], [0], [1], [0, 0, 1, 1], [], []>} : vector<16x32xbf16>, vector<32x96xbf16>, vector<16x96xf32> -> vector<16x96xf32>
    %c0_15 = arith.constant 0 : index
    %c0_16 = arith.constant 0 : index
    %c0_17 = arith.constant 0 : index
    %29 = vector.load %arg5[%c0_15, %c0_16, %c0_17] : memref<2x1x96xf32, #tpu.memory_space<vmem>>, vector<1x1x96xf32>
    %30 = vector.shape_cast %29 : vector<1x1x96xf32> to vector<1x96xf32>
    %31 = vector.broadcast %30 : vector<1x96xf32> to vector<16x96xf32>
    %32 = arith.addf %28, %31 : vector<16x96xf32>
    %c0_18 = arith.constant 0 : index
    %c0_19 = arith.constant 0 : index
    %c0_20 = arith.constant 0 : index
    %33 = vector.load %arg6[%c0_18, %c0_19, %c0_20] : memref<2x32x32xf32, #tpu.memory_space<vmem>>, vector<1x32x32xf32>
    %34 = vector.shape_cast %33 : vector<1x32x32xf32> to vector<32x32xf32>
    %cst_21 = arith.constant 0.000000e+00 : f32
    %35 = vector.broadcast %cst_21 : f32 to vector<16x32xf32>
    %36 = vector.extract_strided_slice %32 {offsets = [0, 0], sizes = [16, 8], strides = [1, 1]} : vector<16x96xf32> to vector<16x8xf32>
    %37 = arith.truncf %36 : vector<16x8xf32> to vector<16x8xbf16>
    %38 = vector.extract_strided_slice %32 {offsets = [0, 32], sizes = [16, 8], strides = [1, 1]} : vector<16x96xf32> to vector<16x8xf32>
    %39 = arith.truncf %38 : vector<16x8xf32> to vector<16x8xbf16>
    %40 = vector.extract_strided_slice %32 {offsets = [0, 64], sizes = [16, 8], strides = [1, 1]} : vector<16x96xf32> to vector<16x8xf32>
    %41 = arith.truncf %40 : vector<16x8xf32> to vector<16x8xbf16>
    %cst_22 = arith.constant dense<0.000000e+00> : vector<16x16xf32>
    %42 = tpu.matmul %37, %39, %cst_22 {dimension_numbers = #tpu.dot_dimension_numbers<[1], [1], [0], [0], [0, 0, 1, 0], [], []>} : vector<16x8xbf16>, vector<16x8xbf16>, vector<16x16xf32> -> vector<16x16xf32>
    %cst_23 = arith.constant 0.353553385 : f32
    %43 = vector.broadcast %cst_23 : f32 to vector<16x16xf32>
    %44 = arith.mulf %42, %43 : vector<16x16xf32>
    %45 = arith.addf %44, %0 : vector<16x16xf32>
    %cst_24 = arith.constant dense<0xFF800000> : vector<16xf32>
    %46 = vector.multi_reduction <maximumf>, %45, %cst_24 [1] : vector<16x16xf32> to vector<16xf32>
    %47 = vector.shape_cast %46 : vector<16xf32> to vector<16x1xf32>
    %48 = vector.broadcast %47 : vector<16x1xf32> to vector<16x16xf32>
    %49 = arith.subf %45, %48 : vector<16x16xf32>
    %50 = math.exp %49 : vector<16x16xf32>
    %cst_25 = arith.constant dense<0.000000e+00> : vector<16xf32>
    %51 = vector.multi_reduction <add>, %50, %cst_25 [1] : vector<16x16xf32> to vector<16xf32>
    %52 = vector.shape_cast %51 : vector<16xf32> to vector<16x1xf32>
    %53 = tpu.reciprocal %52 {approx = true} : vector<16x1xf32> -> vector<16x1xf32>
    %54 = vector.broadcast %53 : vector<16x1xf32> to vector<16x16xf32>
    %55 = arith.mulf %50, %54 : vector<16x16xf32>
    %56 = arith.truncf %55 : vector<16x16xf32> to vector<16x16xbf16>
    %cst_26 = arith.constant dense<0.000000e+00> : vector<16x8xf32>
    %57 = tpu.matmul %56, %41, %cst_26 {dimension_numbers = #tpu.dot_dimension_numbers<[1], [0], [0], [1], [0, 0, 1, 1], [], []>} : vector<16x16xbf16>, vector<16x8xbf16>, vector<16x8xf32> -> vector<16x8xf32>
    %58 = vector.extract_strided_slice %34 {offsets = [0, 0], sizes = [8, 32], strides = [1, 1]} : vector<32x32xf32> to vector<8x32xf32>
    %59 = arith.truncf %57 : vector<16x8xf32> to vector<16x8xbf16>
    %60 = arith.truncf %58 : vector<8x32xf32> to vector<8x32xbf16>
    %cst_27 = arith.constant dense<0.000000e+00> : vector<16x32xf32>
    %61 = tpu.matmul %59, %60, %cst_27 {dimension_numbers = #tpu.dot_dimension_numbers<[1], [0], [0], [1], [0, 0, 1, 1], [], []>} : vector<16x8xbf16>, vector<8x32xbf16>, vector<16x32xf32> -> vector<16x32xf32>
    %62 = arith.addf %35, %61 : vector<16x32xf32>
    %63 = vector.extract_strided_slice %32 {offsets = [0, 8], sizes = [16, 8], strides = [1, 1]} : vector<16x96xf32> to vector<16x8xf32>
    %64 = arith.truncf %63 : vector<16x8xf32> to vector<16x8xbf16>
    %65 = vector.extract_strided_slice %32 {offsets = [0, 40], sizes = [16, 8], strides = [1, 1]} : vector<16x96xf32> to vector<16x8xf32>
    %66 = arith.truncf %65 : vector<16x8xf32> to vector<16x8xbf16>
    %67 = vector.extract_strided_slice %32 {offsets = [0, 72], sizes = [16, 8], strides = [1, 1]} : vector<16x96xf32> to vector<16x8xf32>
    %68 = arith.truncf %67 : vector<16x8xf32> to vector<16x8xbf16>
    %cst_28 = arith.constant dense<0.000000e+00> : vector<16x16xf32>
    %69 = tpu.matmul %64, %66, %cst_28 {dimension_numbers = #tpu.dot_dimension_numbers<[1], [1], [0], [0], [0, 0, 1, 0], [], []>} : vector<16x8xbf16>, vector<16x8xbf16>, vector<16x16xf32> -> vector<16x16xf32>
    %cst_29 = arith.constant 0.353553385 : f32
    %70 = vector.broadcast %cst_29 : f32 to vector<16x16xf32>
    %71 = arith.mulf %69, %70 : vector<16x16xf32>
    %72 = arith.addf %71, %0 : vector<16x16xf32>
    %cst_30 = arith.constant dense<0xFF800000> : vector<16xf32>
    %73 = vector.multi_reduction <maximumf>, %72, %cst_30 [1] : vector<16x16xf32> to vector<16xf32>
    %74 = vector.shape_cast %73 : vector<16xf32> to vector<16x1xf32>
    %75 = vector.broadcast %74 : vector<16x1xf32> to vector<16x16xf32>
    %76 = arith.subf %72, %75 : vector<16x16xf32>
    %77 = math.exp %76 : vector<16x16xf32>
    %cst_31 = arith.constant dense<0.000000e+00> : vector<16xf32>
    %78 = vector.multi_reduction <add>, %77, %cst_31 [1] : vector<16x16xf32> to vector<16xf32>
    %79 = vector.shape_cast %78 : vector<16xf32> to vector<16x1xf32>
    %80 = tpu.reciprocal %79 {approx = true} : vector<16x1xf32> -> vector<16x1xf32>
    %81 = vector.broadcast %80 : vector<16x1xf32> to vector<16x16xf32>
    %82 = arith.mulf %77, %81 : vector<16x16xf32>
    %83 = arith.truncf %82 : vector<16x16xf32> to vector<16x16xbf16>
    %cst_32 = arith.constant dense<0.000000e+00> : vector<16x8xf32>
    %84 = tpu.matmul %83, %68, %cst_32 {dimension_numbers = #tpu.dot_dimension_numbers<[1], [0], [0], [1], [0, 0, 1, 1], [], []>} : vector<16x16xbf16>, vector<16x8xbf16>, vector<16x8xf32> -> vector<16x8xf32>
    %85 = vector.extract_strided_slice %34 {offsets = [8, 0], sizes = [8, 32], strides = [1, 1]} : vector<32x32xf32> to vector<8x32xf32>
    %86 = arith.truncf %84 : vector<16x8xf32> to vector<16x8xbf16>
    %87 = arith.truncf %85 : vector<8x32xf32> to vector<8x32xbf16>
    %cst_33 = arith.constant dense<0.000000e+00> : vector<16x32xf32>
    %88 = tpu.matmul %86, %87, %cst_33 {dimension_numbers = #tpu.dot_dimension_numbers<[1], [0], [0], [1], [0, 0, 1, 1], [], []>} : vector<16x8xbf16>, vector<8x32xbf16>, vector<16x32xf32> -> vector<16x32xf32>
    %89 = arith.addf %62, %88 : vector<16x32xf32>
    %90 = vector.extract_strided_slice %32 {offsets = [0, 16], sizes = [16, 8], strides = [1, 1]} : vector<16x96xf32> to vector<16x8xf32>
    %91 = arith.truncf %90 : vector<16x8xf32> to vector<16x8xbf16>
    %92 = vector.extract_strided_slice %32 {offsets = [0, 48], sizes = [16, 8], strides = [1, 1]} : vector<16x96xf32> to vector<16x8xf32>
    %93 = arith.truncf %92 : vector<16x8xf32> to vector<16x8xbf16>
    %94 = vector.extract_strided_slice %32 {offsets = [0, 80], sizes = [16, 8], strides = [1, 1]} : vector<16x96xf32> to vector<16x8xf32>
    %95 = arith.truncf %94 : vector<16x8xf32> to vector<16x8xbf16>
    %cst_34 = arith.constant dense<0.000000e+00> : vector<16x16xf32>
    %96 = tpu.matmul %91, %93, %cst_34 {dimension_numbers = #tpu.dot_dimension_numbers<[1], [1], [0], [0], [0, 0, 1, 0], [], []>} : vector<16x8xbf16>, vector<16x8xbf16>, vector<16x16xf32> -> vector<16x16xf32>
    %cst_35 = arith.constant 0.353553385 : f32
    %97 = vector.broadcast %cst_35 : f32 to vector<16x16xf32>
    %98 = arith.mulf %96, %97 : vector<16x16xf32>
    %99 = arith.addf %98, %0 : vector<16x16xf32>
    %cst_36 = arith.constant dense<0xFF800000> : vector<16xf32>
    %100 = vector.multi_reduction <maximumf>, %99, %cst_36 [1] : vector<16x16xf32> to vector<16xf32>
    %101 = vector.shape_cast %100 : vector<16xf32> to vector<16x1xf32>
    %102 = vector.broadcast %101 : vector<16x1xf32> to vector<16x16xf32>
    %103 = arith.subf %99, %102 : vector<16x16xf32>
    %104 = math.exp %103 : vector<16x16xf32>
    %cst_37 = arith.constant dense<0.000000e+00> : vector<16xf32>
    %105 = vector.multi_reduction <add>, %104, %cst_37 [1] : vector<16x16xf32> to vector<16xf32>
    %106 = vector.shape_cast %105 : vector<16xf32> to vector<16x1xf32>
    %107 = tpu.reciprocal %106 {approx = true} : vector<16x1xf32> -> vector<16x1xf32>
    %108 = vector.broadcast %107 : vector<16x1xf32> to vector<16x16xf32>
    %109 = arith.mulf %104, %108 : vector<16x16xf32>
    %110 = arith.truncf %109 : vector<16x16xf32> to vector<16x16xbf16>
    %cst_38 = arith.constant dense<0.000000e+00> : vector<16x8xf32>
    %111 = tpu.matmul %110, %95, %cst_38 {dimension_numbers = #tpu.dot_dimension_numbers<[1], [0], [0], [1], [0, 0, 1, 1], [], []>} : vector<16x16xbf16>, vector<16x8xbf16>, vector<16x8xf32> -> vector<16x8xf32>
    %112 = vector.extract_strided_slice %34 {offsets = [16, 0], sizes = [8, 32], strides = [1, 1]} : vector<32x32xf32> to vector<8x32xf32>
    %113 = arith.truncf %111 : vector<16x8xf32> to vector<16x8xbf16>
    %114 = arith.truncf %112 : vector<8x32xf32> to vector<8x32xbf16>
    %cst_39 = arith.constant dense<0.000000e+00> : vector<16x32xf32>
    %115 = tpu.matmul %113, %114, %cst_39 {dimension_numbers = #tpu.dot_dimension_numbers<[1], [0], [0], [1], [0, 0, 1, 1], [], []>} : vector<16x8xbf16>, vector<8x32xbf16>, vector<16x32xf32> -> vector<16x32xf32>
    %116 = arith.addf %89, %115 : vector<16x32xf32>
    %117 = vector.extract_strided_slice %32 {offsets = [0, 24], sizes = [16, 8], strides = [1, 1]} : vector<16x96xf32> to vector<16x8xf32>
    %118 = arith.truncf %117 : vector<16x8xf32> to vector<16x8xbf16>
    %119 = vector.extract_strided_slice %32 {offsets = [0, 56], sizes = [16, 8], strides = [1, 1]} : vector<16x96xf32> to vector<16x8xf32>
    %120 = arith.truncf %119 : vector<16x8xf32> to vector<16x8xbf16>
    %121 = vector.extract_strided_slice %32 {offsets = [0, 88], sizes = [16, 8], strides = [1, 1]} : vector<16x96xf32> to vector<16x8xf32>
    %122 = arith.truncf %121 : vector<16x8xf32> to vector<16x8xbf16>
    %cst_40 = arith.constant dense<0.000000e+00> : vector<16x16xf32>
    %123 = tpu.matmul %118, %120, %cst_40 {dimension_numbers = #tpu.dot_dimension_numbers<[1], [1], [0], [0], [0, 0, 1, 0], [], []>} : vector<16x8xbf16>, vector<16x8xbf16>, vector<16x16xf32> -> vector<16x16xf32>
    %cst_41 = arith.constant 0.353553385 : f32
    %124 = vector.broadcast %cst_41 : f32 to vector<16x16xf32>
    %125 = arith.mulf %123, %124 : vector<16x16xf32>
    %126 = arith.addf %125, %0 : vector<16x16xf32>
    %cst_42 = arith.constant dense<0xFF800000> : vector<16xf32>
    %127 = vector.multi_reduction <maximumf>, %126, %cst_42 [1] : vector<16x16xf32> to vector<16xf32>
    %128 = vector.shape_cast %127 : vector<16xf32> to vector<16x1xf32>
    %129 = vector.broadcast %128 : vector<16x1xf32> to vector<16x16xf32>
    %130 = arith.subf %126, %129 : vector<16x16xf32>
    %131 = math.exp %130 : vector<16x16xf32>
    %cst_43 = arith.constant dense<0.000000e+00> : vector<16xf32>
    %132 = vector.multi_reduction <add>, %131, %cst_43 [1] : vector<16x16xf32> to vector<16xf32>
    %133 = vector.shape_cast %132 : vector<16xf32> to vector<16x1xf32>
    %134 = tpu.reciprocal %133 {approx = true} : vector<16x1xf32> -> vector<16x1xf32>
    %135 = vector.broadcast %134 : vector<16x1xf32> to vector<16x16xf32>
    %136 = arith.mulf %131, %135 : vector<16x16xf32>
    %137 = arith.truncf %136 : vector<16x16xf32> to vector<16x16xbf16>
    %cst_44 = arith.constant dense<0.000000e+00> : vector<16x8xf32>
    %138 = tpu.matmul %137, %122, %cst_44 {dimension_numbers = #tpu.dot_dimension_numbers<[1], [0], [0], [1], [0, 0, 1, 1], [], []>} : vector<16x16xbf16>, vector<16x8xbf16>, vector<16x8xf32> -> vector<16x8xf32>
    %139 = vector.extract_strided_slice %34 {offsets = [24, 0], sizes = [8, 32], strides = [1, 1]} : vector<32x32xf32> to vector<8x32xf32>
    %140 = arith.truncf %138 : vector<16x8xf32> to vector<16x8xbf16>
    %141 = arith.truncf %139 : vector<8x32xf32> to vector<8x32xbf16>
    %cst_45 = arith.constant dense<0.000000e+00> : vector<16x32xf32>
    %142 = tpu.matmul %140, %141, %cst_45 {dimension_numbers = #tpu.dot_dimension_numbers<[1], [0], [0], [1], [0, 0, 1, 1], [], []>} : vector<16x8xbf16>, vector<8x32xbf16>, vector<16x32xf32> -> vector<16x32xf32>
    %143 = arith.addf %116, %142 : vector<16x32xf32>
    %c0_46 = arith.constant 0 : index
    %c0_47 = arith.constant 0 : index
    %c0_48 = arith.constant 0 : index
    %144 = vector.load %arg7[%c0_46, %c0_47, %c0_48] : memref<2x1x32xf32, #tpu.memory_space<vmem>>, vector<1x1x32xf32>
    %145 = vector.shape_cast %144 : vector<1x1x32xf32> to vector<1x32xf32>
    %146 = vector.broadcast %145 : vector<1x32xf32> to vector<16x32xf32>
    %147 = arith.addf %143, %146 : vector<16x32xf32>
    %148 = arith.addf %147, %23 : vector<16x32xf32>
    %c0_49 = arith.constant 0 : index
    %c0_50 = arith.constant 0 : index
    %c0_51 = arith.constant 0 : index
    %149 = vector.load %arg8[%c0_49, %c0_50, %c0_51] : memref<2x1x32xf32, #tpu.memory_space<vmem>>, vector<1x1x32xf32>
    %150 = vector.shape_cast %149 : vector<1x1x32xf32> to vector<1x32xf32>
    %c0_52 = arith.constant 0 : index
    %c0_53 = arith.constant 0 : index
    %c0_54 = arith.constant 0 : index
    %151 = vector.load %arg9[%c0_52, %c0_53, %c0_54] : memref<2x1x32xf32, #tpu.memory_space<vmem>>, vector<1x1x32xf32>
    %152 = vector.shape_cast %151 : vector<1x1x32xf32> to vector<1x32xf32>
    %cst_55 = arith.constant dense<0.000000e+00> : vector<16xf32>
    %153 = vector.multi_reduction <add>, %148, %cst_55 [1] : vector<16x32xf32> to vector<16xf32>
    %154 = vector.shape_cast %153 : vector<16xf32> to vector<16x1xf32>
    %cst_56 = arith.constant 3.200000e+01 : f32
    %155 = vector.broadcast %cst_56 : f32 to vector<16x1xf32>
    %156 = arith.divf %154, %155 : vector<16x1xf32>
    %157 = vector.broadcast %156 : vector<16x1xf32> to vector<16x32xf32>
    %158 = arith.subf %148, %157 : vector<16x32xf32>
    %159 = arith.mulf %158, %158 : vector<16x32xf32>
    %cst_57 = arith.constant dense<0.000000e+00> : vector<16xf32>
    %160 = vector.multi_reduction <add>, %159, %cst_57 [1] : vector<16x32xf32> to vector<16xf32>
    %161 = vector.shape_cast %160 : vector<16xf32> to vector<16x1xf32>
    %cst_58 = arith.constant 3.200000e+01 : f32
    %162 = vector.broadcast %cst_58 : f32 to vector<16x1xf32>
    %163 = arith.divf %161, %162 : vector<16x1xf32>
    %cst_59 = arith.constant 9.99999996E-13 : f32
    %164 = vector.broadcast %cst_59 : f32 to vector<16x1xf32>
    %165 = arith.addf %163, %164 : vector<16x1xf32>
    %166 = math.rsqrt %165 : vector<16x1xf32>
    %167 = vector.broadcast %166 : vector<16x1xf32> to vector<16x32xf32>
    %168 = arith.mulf %158, %167 : vector<16x32xf32>
    %169 = vector.broadcast %150 : vector<1x32xf32> to vector<16x32xf32>
    %170 = arith.mulf %168, %169 : vector<16x32xf32>
    %171 = vector.broadcast %152 : vector<1x32xf32> to vector<16x32xf32>
    %172 = arith.addf %170, %171 : vector<16x32xf32>
    %c0_60 = arith.constant 0 : index
    %c0_61 = arith.constant 0 : index
    %c0_62 = arith.constant 0 : index
    %173 = vector.load %arg10[%c0_60, %c0_61, %c0_62] : memref<2x32x64xf32, #tpu.memory_space<vmem>>, vector<1x32x64xf32>
    %174 = vector.shape_cast %173 : vector<1x32x64xf32> to vector<32x64xf32>
    %175 = arith.truncf %172 : vector<16x32xf32> to vector<16x32xbf16>
    %176 = arith.truncf %174 : vector<32x64xf32> to vector<32x64xbf16>
    %cst_63 = arith.constant dense<0.000000e+00> : vector<16x64xf32>
    %177 = tpu.matmul %175, %176, %cst_63 {dimension_numbers = #tpu.dot_dimension_numbers<[1], [0], [0], [1], [0, 0, 1, 1], [], []>} : vector<16x32xbf16>, vector<32x64xbf16>, vector<16x64xf32> -> vector<16x64xf32>
    %c0_64 = arith.constant 0 : index
    %c0_65 = arith.constant 0 : index
    %c0_66 = arith.constant 0 : index
    %178 = vector.load %arg11[%c0_64, %c0_65, %c0_66] : memref<2x1x64xf32, #tpu.memory_space<vmem>>, vector<1x1x64xf32>
    %179 = vector.shape_cast %178 : vector<1x1x64xf32> to vector<1x64xf32>
    %180 = vector.broadcast %179 : vector<1x64xf32> to vector<16x64xf32>
    %181 = arith.addf %177, %180 : vector<16x64xf32>
    %cst_67 = arith.constant 5.000000e-01 : f32
    %182 = vector.broadcast %cst_67 : f32 to vector<16x64xf32>
    %183 = arith.mulf %182, %181 : vector<16x64xf32>
    %cst_68 = arith.constant 0.707106769 : f32
    %184 = vector.broadcast %cst_68 : f32 to vector<16x64xf32>
    %185 = arith.mulf %181, %184 : vector<16x64xf32>
    %186 = math.erf %185 : vector<16x64xf32>
    %cst_69 = arith.constant 1.000000e+00 : f32
    %187 = vector.broadcast %cst_69 : f32 to vector<16x64xf32>
    %188 = arith.addf %187, %186 : vector<16x64xf32>
    %189 = arith.mulf %183, %188 : vector<16x64xf32>
    %c0_70 = arith.constant 0 : index
    %c0_71 = arith.constant 0 : index
    %c0_72 = arith.constant 0 : index
    %190 = vector.load %arg12[%c0_70, %c0_71, %c0_72] : memref<2x64x32xf32, #tpu.memory_space<vmem>>, vector<1x64x32xf32>
    %191 = vector.shape_cast %190 : vector<1x64x32xf32> to vector<64x32xf32>
    %192 = arith.truncf %189 : vector<16x64xf32> to vector<16x64xbf16>
    %193 = arith.truncf %191 : vector<64x32xf32> to vector<64x32xbf16>
    %cst_73 = arith.constant dense<0.000000e+00> : vector<16x32xf32>
    %194 = tpu.matmul %192, %193, %cst_73 {dimension_numbers = #tpu.dot_dimension_numbers<[1], [0], [0], [1], [0, 0, 1, 1], [], []>} : vector<16x64xbf16>, vector<64x32xbf16>, vector<16x32xf32> -> vector<16x32xf32>
    %c0_74 = arith.constant 0 : index
    %c0_75 = arith.constant 0 : index
    %c0_76 = arith.constant 0 : index
    %195 = vector.load %arg13[%c0_74, %c0_75, %c0_76] : memref<2x1x32xf32, #tpu.memory_space<vmem>>, vector<1x1x32xf32>
    %196 = vector.shape_cast %195 : vector<1x1x32xf32> to vector<1x32xf32>
    %197 = vector.broadcast %196 : vector<1x32xf32> to vector<16x32xf32>
    %198 = arith.addf %194, %197 : vector<16x32xf32>
    %199 = arith.addf %198, %172 : vector<16x32xf32>
    %c0_77 = arith.constant 0 : index
    %c0_78 = arith.constant 0 : index
    %c0_79 = arith.constant 0 : index
    %200 = vector.load %arg14[%c0_77, %c0_78, %c0_79] : memref<2x1x32xf32, #tpu.memory_space<vmem>>, vector<1x1x32xf32>
    %201 = vector.shape_cast %200 : vector<1x1x32xf32> to vector<1x32xf32>
    %c0_80 = arith.constant 0 : index
    %c0_81 = arith.constant 0 : index
    %c0_82 = arith.constant 0 : index
    %202 = vector.load %arg15[%c0_80, %c0_81, %c0_82] : memref<2x1x32xf32, #tpu.memory_space<vmem>>, vector<1x1x32xf32>
    %203 = vector.shape_cast %202 : vector<1x1x32xf32> to vector<1x32xf32>
    %cst_83 = arith.constant dense<0.000000e+00> : vector<16xf32>
    %204 = vector.multi_reduction <add>, %199, %cst_83 [1] : vector<16x32xf32> to vector<16xf32>
    %205 = vector.shape_cast %204 : vector<16xf32> to vector<16x1xf32>
    %cst_84 = arith.constant 3.200000e+01 : f32
    %206 = vector.broadcast %cst_84 : f32 to vector<16x1xf32>
    %207 = arith.divf %205, %206 : vector<16x1xf32>
    %208 = vector.broadcast %207 : vector<16x1xf32> to vector<16x32xf32>
    %209 = arith.subf %199, %208 : vector<16x32xf32>
    %210 = arith.mulf %209, %209 : vector<16x32xf32>
    %cst_85 = arith.constant dense<0.000000e+00> : vector<16xf32>
    %211 = vector.multi_reduction <add>, %210, %cst_85 [1] : vector<16x32xf32> to vector<16xf32>
    %212 = vector.shape_cast %211 : vector<16xf32> to vector<16x1xf32>
    %cst_86 = arith.constant 3.200000e+01 : f32
    %213 = vector.broadcast %cst_86 : f32 to vector<16x1xf32>
    %214 = arith.divf %212, %213 : vector<16x1xf32>
    %cst_87 = arith.constant 9.99999996E-13 : f32
    %215 = vector.broadcast %cst_87 : f32 to vector<16x1xf32>
    %216 = arith.addf %214, %215 : vector<16x1xf32>
    %217 = math.rsqrt %216 : vector<16x1xf32>
    %218 = vector.broadcast %217 : vector<16x1xf32> to vector<16x32xf32>
    %219 = arith.mulf %209, %218 : vector<16x32xf32>
    %220 = vector.broadcast %201 : vector<1x32xf32> to vector<16x32xf32>
    %221 = arith.mulf %219, %220 : vector<16x32xf32>
    %222 = vector.broadcast %203 : vector<1x32xf32> to vector<16x32xf32>
    %223 = arith.addf %221, %222 : vector<16x32xf32>
    %c1 = arith.constant 1 : index
    %c0_88 = arith.constant 0 : index
    %c0_89 = arith.constant 0 : index
    %224 = vector.load %arg4[%c1, %c0_88, %c0_89] : memref<2x32x96xf32, #tpu.memory_space<vmem>>, vector<1x32x96xf32>
    %225 = vector.shape_cast %224 : vector<1x32x96xf32> to vector<32x96xf32>
    %226 = arith.truncf %223 : vector<16x32xf32> to vector<16x32xbf16>
    %227 = arith.truncf %225 : vector<32x96xf32> to vector<32x96xbf16>
    %cst_90 = arith.constant dense<0.000000e+00> : vector<16x96xf32>
    %228 = tpu.matmul %226, %227, %cst_90 {dimension_numbers = #tpu.dot_dimension_numbers<[1], [0], [0], [1], [0, 0, 1, 1], [], []>} : vector<16x32xbf16>, vector<32x96xbf16>, vector<16x96xf32> -> vector<16x96xf32>
    %c1_91 = arith.constant 1 : index
    %c0_92 = arith.constant 0 : index
    %c0_93 = arith.constant 0 : index
    %229 = vector.load %arg5[%c1_91, %c0_92, %c0_93] : memref<2x1x96xf32, #tpu.memory_space<vmem>>, vector<1x1x96xf32>
    %230 = vector.shape_cast %229 : vector<1x1x96xf32> to vector<1x96xf32>
    %231 = vector.broadcast %230 : vector<1x96xf32> to vector<16x96xf32>
    %232 = arith.addf %228, %231 : vector<16x96xf32>
    %c1_94 = arith.constant 1 : index
    %c0_95 = arith.constant 0 : index
    %c0_96 = arith.constant 0 : index
    %233 = vector.load %arg6[%c1_94, %c0_95, %c0_96] : memref<2x32x32xf32, #tpu.memory_space<vmem>>, vector<1x32x32xf32>
    %234 = vector.shape_cast %233 : vector<1x32x32xf32> to vector<32x32xf32>
    %cst_97 = arith.constant 0.000000e+00 : f32
    %235 = vector.broadcast %cst_97 : f32 to vector<16x32xf32>
    %236 = vector.extract_strided_slice %232 {offsets = [0, 0], sizes = [16, 8], strides = [1, 1]} : vector<16x96xf32> to vector<16x8xf32>
    %237 = arith.truncf %236 : vector<16x8xf32> to vector<16x8xbf16>
    %238 = vector.extract_strided_slice %232 {offsets = [0, 32], sizes = [16, 8], strides = [1, 1]} : vector<16x96xf32> to vector<16x8xf32>
    %239 = arith.truncf %238 : vector<16x8xf32> to vector<16x8xbf16>
    %240 = vector.extract_strided_slice %232 {offsets = [0, 64], sizes = [16, 8], strides = [1, 1]} : vector<16x96xf32> to vector<16x8xf32>
    %241 = arith.truncf %240 : vector<16x8xf32> to vector<16x8xbf16>
    %cst_98 = arith.constant dense<0.000000e+00> : vector<16x16xf32>
    %242 = tpu.matmul %237, %239, %cst_98 {dimension_numbers = #tpu.dot_dimension_numbers<[1], [1], [0], [0], [0, 0, 1, 0], [], []>} : vector<16x8xbf16>, vector<16x8xbf16>, vector<16x16xf32> -> vector<16x16xf32>
    %cst_99 = arith.constant 0.353553385 : f32
    %243 = vector.broadcast %cst_99 : f32 to vector<16x16xf32>
    %244 = arith.mulf %242, %243 : vector<16x16xf32>
    %245 = arith.addf %244, %0 : vector<16x16xf32>
    %cst_100 = arith.constant dense<0xFF800000> : vector<16xf32>
    %246 = vector.multi_reduction <maximumf>, %245, %cst_100 [1] : vector<16x16xf32> to vector<16xf32>
    %247 = vector.shape_cast %246 : vector<16xf32> to vector<16x1xf32>
    %248 = vector.broadcast %247 : vector<16x1xf32> to vector<16x16xf32>
    %249 = arith.subf %245, %248 : vector<16x16xf32>
    %250 = math.exp %249 : vector<16x16xf32>
    %cst_101 = arith.constant dense<0.000000e+00> : vector<16xf32>
    %251 = vector.multi_reduction <add>, %250, %cst_101 [1] : vector<16x16xf32> to vector<16xf32>
    %252 = vector.shape_cast %251 : vector<16xf32> to vector<16x1xf32>
    %253 = tpu.reciprocal %252 {approx = true} : vector<16x1xf32> -> vector<16x1xf32>
    %254 = vector.broadcast %253 : vector<16x1xf32> to vector<16x16xf32>
    %255 = arith.mulf %250, %254 : vector<16x16xf32>
    %256 = arith.truncf %255 : vector<16x16xf32> to vector<16x16xbf16>
    %cst_102 = arith.constant dense<0.000000e+00> : vector<16x8xf32>
    %257 = tpu.matmul %256, %241, %cst_102 {dimension_numbers = #tpu.dot_dimension_numbers<[1], [0], [0], [1], [0, 0, 1, 1], [], []>} : vector<16x16xbf16>, vector<16x8xbf16>, vector<16x8xf32> -> vector<16x8xf32>
    %258 = vector.extract_strided_slice %234 {offsets = [0, 0], sizes = [8, 32], strides = [1, 1]} : vector<32x32xf32> to vector<8x32xf32>
    %259 = arith.truncf %257 : vector<16x8xf32> to vector<16x8xbf16>
    %260 = arith.truncf %258 : vector<8x32xf32> to vector<8x32xbf16>
    %cst_103 = arith.constant dense<0.000000e+00> : vector<16x32xf32>
    %261 = tpu.matmul %259, %260, %cst_103 {dimension_numbers = #tpu.dot_dimension_numbers<[1], [0], [0], [1], [0, 0, 1, 1], [], []>} : vector<16x8xbf16>, vector<8x32xbf16>, vector<16x32xf32> -> vector<16x32xf32>
    %262 = arith.addf %235, %261 : vector<16x32xf32>
    %263 = vector.extract_strided_slice %232 {offsets = [0, 8], sizes = [16, 8], strides = [1, 1]} : vector<16x96xf32> to vector<16x8xf32>
    %264 = arith.truncf %263 : vector<16x8xf32> to vector<16x8xbf16>
    %265 = vector.extract_strided_slice %232 {offsets = [0, 40], sizes = [16, 8], strides = [1, 1]} : vector<16x96xf32> to vector<16x8xf32>
    %266 = arith.truncf %265 : vector<16x8xf32> to vector<16x8xbf16>
    %267 = vector.extract_strided_slice %232 {offsets = [0, 72], sizes = [16, 8], strides = [1, 1]} : vector<16x96xf32> to vector<16x8xf32>
    %268 = arith.truncf %267 : vector<16x8xf32> to vector<16x8xbf16>
    %cst_104 = arith.constant dense<0.000000e+00> : vector<16x16xf32>
    %269 = tpu.matmul %264, %266, %cst_104 {dimension_numbers = #tpu.dot_dimension_numbers<[1], [1], [0], [0], [0, 0, 1, 0], [], []>} : vector<16x8xbf16>, vector<16x8xbf16>, vector<16x16xf32> -> vector<16x16xf32>
    %cst_105 = arith.constant 0.353553385 : f32
    %270 = vector.broadcast %cst_105 : f32 to vector<16x16xf32>
    %271 = arith.mulf %269, %270 : vector<16x16xf32>
    %272 = arith.addf %271, %0 : vector<16x16xf32>
    %cst_106 = arith.constant dense<0xFF800000> : vector<16xf32>
    %273 = vector.multi_reduction <maximumf>, %272, %cst_106 [1] : vector<16x16xf32> to vector<16xf32>
    %274 = vector.shape_cast %273 : vector<16xf32> to vector<16x1xf32>
    %275 = vector.broadcast %274 : vector<16x1xf32> to vector<16x16xf32>
    %276 = arith.subf %272, %275 : vector<16x16xf32>
    %277 = math.exp %276 : vector<16x16xf32>
    %cst_107 = arith.constant dense<0.000000e+00> : vector<16xf32>
    %278 = vector.multi_reduction <add>, %277, %cst_107 [1] : vector<16x16xf32> to vector<16xf32>
    %279 = vector.shape_cast %278 : vector<16xf32> to vector<16x1xf32>
    %280 = tpu.reciprocal %279 {approx = true} : vector<16x1xf32> -> vector<16x1xf32>
    %281 = vector.broadcast %280 : vector<16x1xf32> to vector<16x16xf32>
    %282 = arith.mulf %277, %281 : vector<16x16xf32>
    %283 = arith.truncf %282 : vector<16x16xf32> to vector<16x16xbf16>
    %cst_108 = arith.constant dense<0.000000e+00> : vector<16x8xf32>
    %284 = tpu.matmul %283, %268, %cst_108 {dimension_numbers = #tpu.dot_dimension_numbers<[1], [0], [0], [1], [0, 0, 1, 1], [], []>} : vector<16x16xbf16>, vector<16x8xbf16>, vector<16x8xf32> -> vector<16x8xf32>
    %285 = vector.extract_strided_slice %234 {offsets = [8, 0], sizes = [8, 32], strides = [1, 1]} : vector<32x32xf32> to vector<8x32xf32>
    %286 = arith.truncf %284 : vector<16x8xf32> to vector<16x8xbf16>
    %287 = arith.truncf %285 : vector<8x32xf32> to vector<8x32xbf16>
    %cst_109 = arith.constant dense<0.000000e+00> : vector<16x32xf32>
    %288 = tpu.matmul %286, %287, %cst_109 {dimension_numbers = #tpu.dot_dimension_numbers<[1], [0], [0], [1], [0, 0, 1, 1], [], []>} : vector<16x8xbf16>, vector<8x32xbf16>, vector<16x32xf32> -> vector<16x32xf32>
    %289 = arith.addf %262, %288 : vector<16x32xf32>
    %290 = vector.extract_strided_slice %232 {offsets = [0, 16], sizes = [16, 8], strides = [1, 1]} : vector<16x96xf32> to vector<16x8xf32>
    %291 = arith.truncf %290 : vector<16x8xf32> to vector<16x8xbf16>
    %292 = vector.extract_strided_slice %232 {offsets = [0, 48], sizes = [16, 8], strides = [1, 1]} : vector<16x96xf32> to vector<16x8xf32>
    %293 = arith.truncf %292 : vector<16x8xf32> to vector<16x8xbf16>
    %294 = vector.extract_strided_slice %232 {offsets = [0, 80], sizes = [16, 8], strides = [1, 1]} : vector<16x96xf32> to vector<16x8xf32>
    %295 = arith.truncf %294 : vector<16x8xf32> to vector<16x8xbf16>
    %cst_110 = arith.constant dense<0.000000e+00> : vector<16x16xf32>
    %296 = tpu.matmul %291, %293, %cst_110 {dimension_numbers = #tpu.dot_dimension_numbers<[1], [1], [0], [0], [0, 0, 1, 0], [], []>} : vector<16x8xbf16>, vector<16x8xbf16>, vector<16x16xf32> -> vector<16x16xf32>
    %cst_111 = arith.constant 0.353553385 : f32
    %297 = vector.broadcast %cst_111 : f32 to vector<16x16xf32>
    %298 = arith.mulf %296, %297 : vector<16x16xf32>
    %299 = arith.addf %298, %0 : vector<16x16xf32>
    %cst_112 = arith.constant dense<0xFF800000> : vector<16xf32>
    %300 = vector.multi_reduction <maximumf>, %299, %cst_112 [1] : vector<16x16xf32> to vector<16xf32>
    %301 = vector.shape_cast %300 : vector<16xf32> to vector<16x1xf32>
    %302 = vector.broadcast %301 : vector<16x1xf32> to vector<16x16xf32>
    %303 = arith.subf %299, %302 : vector<16x16xf32>
    %304 = math.exp %303 : vector<16x16xf32>
    %cst_113 = arith.constant dense<0.000000e+00> : vector<16xf32>
    %305 = vector.multi_reduction <add>, %304, %cst_113 [1] : vector<16x16xf32> to vector<16xf32>
    %306 = vector.shape_cast %305 : vector<16xf32> to vector<16x1xf32>
    %307 = tpu.reciprocal %306 {approx = true} : vector<16x1xf32> -> vector<16x1xf32>
    %308 = vector.broadcast %307 : vector<16x1xf32> to vector<16x16xf32>
    %309 = arith.mulf %304, %308 : vector<16x16xf32>
    %310 = arith.truncf %309 : vector<16x16xf32> to vector<16x16xbf16>
    %cst_114 = arith.constant dense<0.000000e+00> : vector<16x8xf32>
    %311 = tpu.matmul %310, %295, %cst_114 {dimension_numbers = #tpu.dot_dimension_numbers<[1], [0], [0], [1], [0, 0, 1, 1], [], []>} : vector<16x16xbf16>, vector<16x8xbf16>, vector<16x8xf32> -> vector<16x8xf32>
    %312 = vector.extract_strided_slice %234 {offsets = [16, 0], sizes = [8, 32], strides = [1, 1]} : vector<32x32xf32> to vector<8x32xf32>
    %313 = arith.truncf %311 : vector<16x8xf32> to vector<16x8xbf16>
    %314 = arith.truncf %312 : vector<8x32xf32> to vector<8x32xbf16>
    %cst_115 = arith.constant dense<0.000000e+00> : vector<16x32xf32>
    %315 = tpu.matmul %313, %314, %cst_115 {dimension_numbers = #tpu.dot_dimension_numbers<[1], [0], [0], [1], [0, 0, 1, 1], [], []>} : vector<16x8xbf16>, vector<8x32xbf16>, vector<16x32xf32> -> vector<16x32xf32>
    %316 = arith.addf %289, %315 : vector<16x32xf32>
    %317 = vector.extract_strided_slice %232 {offsets = [0, 24], sizes = [16, 8], strides = [1, 1]} : vector<16x96xf32> to vector<16x8xf32>
    %318 = arith.truncf %317 : vector<16x8xf32> to vector<16x8xbf16>
    %319 = vector.extract_strided_slice %232 {offsets = [0, 56], sizes = [16, 8], strides = [1, 1]} : vector<16x96xf32> to vector<16x8xf32>
    %320 = arith.truncf %319 : vector<16x8xf32> to vector<16x8xbf16>
    %321 = vector.extract_strided_slice %232 {offsets = [0, 88], sizes = [16, 8], strides = [1, 1]} : vector<16x96xf32> to vector<16x8xf32>
    %322 = arith.truncf %321 : vector<16x8xf32> to vector<16x8xbf16>
    %cst_116 = arith.constant dense<0.000000e+00> : vector<16x16xf32>
    %323 = tpu.matmul %318, %320, %cst_116 {dimension_numbers = #tpu.dot_dimension_numbers<[1], [1], [0], [0], [0, 0, 1, 0], [], []>} : vector<16x8xbf16>, vector<16x8xbf16>, vector<16x16xf32> -> vector<16x16xf32>
    %cst_117 = arith.constant 0.353553385 : f32
    %324 = vector.broadcast %cst_117 : f32 to vector<16x16xf32>
    %325 = arith.mulf %323, %324 : vector<16x16xf32>
    %326 = arith.addf %325, %0 : vector<16x16xf32>
    %cst_118 = arith.constant dense<0xFF800000> : vector<16xf32>
    %327 = vector.multi_reduction <maximumf>, %326, %cst_118 [1] : vector<16x16xf32> to vector<16xf32>
    %328 = vector.shape_cast %327 : vector<16xf32> to vector<16x1xf32>
    %329 = vector.broadcast %328 : vector<16x1xf32> to vector<16x16xf32>
    %330 = arith.subf %326, %329 : vector<16x16xf32>
    %331 = math.exp %330 : vector<16x16xf32>
    %cst_119 = arith.constant dense<0.000000e+00> : vector<16xf32>
    %332 = vector.multi_reduction <add>, %331, %cst_119 [1] : vector<16x16xf32> to vector<16xf32>
    %333 = vector.shape_cast %332 : vector<16xf32> to vector<16x1xf32>
    %334 = tpu.reciprocal %333 {approx = true} : vector<16x1xf32> -> vector<16x1xf32>
    %335 = vector.broadcast %334 : vector<16x1xf32> to vector<16x16xf32>
    %336 = arith.mulf %331, %335 : vector<16x16xf32>
    %337 = arith.truncf %336 : vector<16x16xf32> to vector<16x16xbf16>
    %cst_120 = arith.constant dense<0.000000e+00> : vector<16x8xf32>
    %338 = tpu.matmul %337, %322, %cst_120 {dimension_numbers = #tpu.dot_dimension_numbers<[1], [0], [0], [1], [0, 0, 1, 1], [], []>} : vector<16x16xbf16>, vector<16x8xbf16>, vector<16x8xf32> -> vector<16x8xf32>
    %339 = vector.extract_strided_slice %234 {offsets = [24, 0], sizes = [8, 32], strides = [1, 1]} : vector<32x32xf32> to vector<8x32xf32>
    %340 = arith.truncf %338 : vector<16x8xf32> to vector<16x8xbf16>
    %341 = arith.truncf %339 : vector<8x32xf32> to vector<8x32xbf16>
    %cst_121 = arith.constant dense<0.000000e+00> : vector<16x32xf32>
    %342 = tpu.matmul %340, %341, %cst_121 {dimension_numbers = #tpu.dot_dimension_numbers<[1], [0], [0], [1], [0, 0, 1, 1], [], []>} : vector<16x8xbf16>, vector<8x32xbf16>, vector<16x32xf32> -> vector<16x32xf32>
    %343 = arith.addf %316, %342 : vector<16x32xf32>
    %c1_122 = arith.constant 1 : index
    %c0_123 = arith.constant 0 : index
    %c0_124 = arith.constant 0 : index
    %344 = vector.load %arg7[%c1_122, %c0_123, %c0_124] : memref<2x1x32xf32, #tpu.memory_space<vmem>>, vector<1x1x32xf32>
    %345 = vector.shape_cast %344 : vector<1x1x32xf32> to vector<1x32xf32>
    %346 = vector.broadcast %345 : vector<1x32xf32> to vector<16x32xf32>
    %347 = arith.addf %343, %346 : vector<16x32xf32>
    %348 = arith.addf %347, %223 : vector<16x32xf32>
    %c1_125 = arith.constant 1 : index
    %c0_126 = arith.constant 0 : index
    %c0_127 = arith.constant 0 : index
    %349 = vector.load %arg8[%c1_125, %c0_126, %c0_127] : memref<2x1x32xf32, #tpu.memory_space<vmem>>, vector<1x1x32xf32>
    %350 = vector.shape_cast %349 : vector<1x1x32xf32> to vector<1x32xf32>
    %c1_128 = arith.constant 1 : index
    %c0_129 = arith.constant 0 : index
    %c0_130 = arith.constant 0 : index
    %351 = vector.load %arg9[%c1_128, %c0_129, %c0_130] : memref<2x1x32xf32, #tpu.memory_space<vmem>>, vector<1x1x32xf32>
    %352 = vector.shape_cast %351 : vector<1x1x32xf32> to vector<1x32xf32>
    %cst_131 = arith.constant dense<0.000000e+00> : vector<16xf32>
    %353 = vector.multi_reduction <add>, %348, %cst_131 [1] : vector<16x32xf32> to vector<16xf32>
    %354 = vector.shape_cast %353 : vector<16xf32> to vector<16x1xf32>
    %cst_132 = arith.constant 3.200000e+01 : f32
    %355 = vector.broadcast %cst_132 : f32 to vector<16x1xf32>
    %356 = arith.divf %354, %355 : vector<16x1xf32>
    %357 = vector.broadcast %356 : vector<16x1xf32> to vector<16x32xf32>
    %358 = arith.subf %348, %357 : vector<16x32xf32>
    %359 = arith.mulf %358, %358 : vector<16x32xf32>
    %cst_133 = arith.constant dense<0.000000e+00> : vector<16xf32>
    %360 = vector.multi_reduction <add>, %359, %cst_133 [1] : vector<16x32xf32> to vector<16xf32>
    %361 = vector.shape_cast %360 : vector<16xf32> to vector<16x1xf32>
    %cst_134 = arith.constant 3.200000e+01 : f32
    %362 = vector.broadcast %cst_134 : f32 to vector<16x1xf32>
    %363 = arith.divf %361, %362 : vector<16x1xf32>
    %cst_135 = arith.constant 9.99999996E-13 : f32
    %364 = vector.broadcast %cst_135 : f32 to vector<16x1xf32>
    %365 = arith.addf %363, %364 : vector<16x1xf32>
    %366 = math.rsqrt %365 : vector<16x1xf32>
    %367 = vector.broadcast %366 : vector<16x1xf32> to vector<16x32xf32>
    %368 = arith.mulf %358, %367 : vector<16x32xf32>
    %369 = vector.broadcast %350 : vector<1x32xf32> to vector<16x32xf32>
    %370 = arith.mulf %368, %369 : vector<16x32xf32>
    %371 = vector.broadcast %352 : vector<1x32xf32> to vector<16x32xf32>
    %372 = arith.addf %370, %371 : vector<16x32xf32>
    %c1_136 = arith.constant 1 : index
    %c0_137 = arith.constant 0 : index
    %c0_138 = arith.constant 0 : index
    %373 = vector.load %arg10[%c1_136, %c0_137, %c0_138] : memref<2x32x64xf32, #tpu.memory_space<vmem>>, vector<1x32x64xf32>
    %374 = vector.shape_cast %373 : vector<1x32x64xf32> to vector<32x64xf32>
    %375 = arith.truncf %372 : vector<16x32xf32> to vector<16x32xbf16>
    %376 = arith.truncf %374 : vector<32x64xf32> to vector<32x64xbf16>
    %cst_139 = arith.constant dense<0.000000e+00> : vector<16x64xf32>
    %377 = tpu.matmul %375, %376, %cst_139 {dimension_numbers = #tpu.dot_dimension_numbers<[1], [0], [0], [1], [0, 0, 1, 1], [], []>} : vector<16x32xbf16>, vector<32x64xbf16>, vector<16x64xf32> -> vector<16x64xf32>
    %c1_140 = arith.constant 1 : index
    %c0_141 = arith.constant 0 : index
    %c0_142 = arith.constant 0 : index
    %378 = vector.load %arg11[%c1_140, %c0_141, %c0_142] : memref<2x1x64xf32, #tpu.memory_space<vmem>>, vector<1x1x64xf32>
    %379 = vector.shape_cast %378 : vector<1x1x64xf32> to vector<1x64xf32>
    %380 = vector.broadcast %379 : vector<1x64xf32> to vector<16x64xf32>
    %381 = arith.addf %377, %380 : vector<16x64xf32>
    %cst_143 = arith.constant 5.000000e-01 : f32
    %382 = vector.broadcast %cst_143 : f32 to vector<16x64xf32>
    %383 = arith.mulf %382, %381 : vector<16x64xf32>
    %cst_144 = arith.constant 0.707106769 : f32
    %384 = vector.broadcast %cst_144 : f32 to vector<16x64xf32>
    %385 = arith.mulf %381, %384 : vector<16x64xf32>
    %386 = math.erf %385 : vector<16x64xf32>
    %cst_145 = arith.constant 1.000000e+00 : f32
    %387 = vector.broadcast %cst_145 : f32 to vector<16x64xf32>
    %388 = arith.addf %387, %386 : vector<16x64xf32>
    %389 = arith.mulf %383, %388 : vector<16x64xf32>
    %c1_146 = arith.constant 1 : index
    %c0_147 = arith.constant 0 : index
    %c0_148 = arith.constant 0 : index
    %390 = vector.load %arg12[%c1_146, %c0_147, %c0_148] : memref<2x64x32xf32, #tpu.memory_space<vmem>>, vector<1x64x32xf32>
    %391 = vector.shape_cast %390 : vector<1x64x32xf32> to vector<64x32xf32>
    %392 = arith.truncf %389 : vector<16x64xf32> to vector<16x64xbf16>
    %393 = arith.truncf %391 : vector<64x32xf32> to vector<64x32xbf16>
    %cst_149 = arith.constant dense<0.000000e+00> : vector<16x32xf32>
    %394 = tpu.matmul %392, %393, %cst_149 {dimension_numbers = #tpu.dot_dimension_numbers<[1], [0], [0], [1], [0, 0, 1, 1], [], []>} : vector<16x64xbf16>, vector<64x32xbf16>, vector<16x32xf32> -> vector<16x32xf32>
    %c1_150 = arith.constant 1 : index
    %c0_151 = arith.constant 0 : index
    %c0_152 = arith.constant 0 : index
    %395 = vector.load %arg13[%c1_150, %c0_151, %c0_152] : memref<2x1x32xf32, #tpu.memory_space<vmem>>, vector<1x1x32xf32>
    %396 = vector.shape_cast %395 : vector<1x1x32xf32> to vector<1x32xf32>
    %397 = vector.broadcast %396 : vector<1x32xf32> to vector<16x32xf32>
    %398 = arith.addf %394, %397 : vector<16x32xf32>
    %399 = arith.addf %398, %372 : vector<16x32xf32>
    %c1_153 = arith.constant 1 : index
    %c0_154 = arith.constant 0 : index
    %c0_155 = arith.constant 0 : index
    %400 = vector.load %arg14[%c1_153, %c0_154, %c0_155] : memref<2x1x32xf32, #tpu.memory_space<vmem>>, vector<1x1x32xf32>
    %401 = vector.shape_cast %400 : vector<1x1x32xf32> to vector<1x32xf32>
    %c1_156 = arith.constant 1 : index
    %c0_157 = arith.constant 0 : index
    %c0_158 = arith.constant 0 : index
    %402 = vector.load %arg15[%c1_156, %c0_157, %c0_158] : memref<2x1x32xf32, #tpu.memory_space<vmem>>, vector<1x1x32xf32>
    %403 = vector.shape_cast %402 : vector<1x1x32xf32> to vector<1x32xf32>
    %cst_159 = arith.constant dense<0.000000e+00> : vector<16xf32>
    %404 = vector.multi_reduction <add>, %399, %cst_159 [1] : vector<16x32xf32> to vector<16xf32>
    %405 = vector.shape_cast %404 : vector<16xf32> to vector<16x1xf32>
    %cst_160 = arith.constant 3.200000e+01 : f32
    %406 = vector.broadcast %cst_160 : f32 to vector<16x1xf32>
    %407 = arith.divf %405, %406 : vector<16x1xf32>
    %408 = vector.broadcast %407 : vector<16x1xf32> to vector<16x32xf32>
    %409 = arith.subf %399, %408 : vector<16x32xf32>
    %410 = arith.mulf %409, %409 : vector<16x32xf32>
    %cst_161 = arith.constant dense<0.000000e+00> : vector<16xf32>
    %411 = vector.multi_reduction <add>, %410, %cst_161 [1] : vector<16x32xf32> to vector<16xf32>
    %412 = vector.shape_cast %411 : vector<16xf32> to vector<16x1xf32>
    %cst_162 = arith.constant 3.200000e+01 : f32
    %413 = vector.broadcast %cst_162 : f32 to vector<16x1xf32>
    %414 = arith.divf %412, %413 : vector<16x1xf32>
    %cst_163 = arith.constant 9.99999996E-13 : f32
    %415 = vector.broadcast %cst_163 : f32 to vector<16x1xf32>
    %416 = arith.addf %414, %415 : vector<16x1xf32>
    %417 = math.rsqrt %416 : vector<16x1xf32>
    %418 = vector.broadcast %417 : vector<16x1xf32> to vector<16x32xf32>
    %419 = arith.mulf %409, %418 : vector<16x32xf32>
    %420 = vector.broadcast %401 : vector<1x32xf32> to vector<16x32xf32>
    %421 = arith.mulf %419, %420 : vector<16x32xf32>
    %422 = vector.broadcast %403 : vector<1x32xf32> to vector<16x32xf32>
    %423 = arith.addf %421, %422 : vector<16x32xf32>
    %424 = vector.extract_strided_slice %423 {offsets = [0, 0], sizes = [1, 32], strides = [1, 1]} : vector<16x32xf32> to vector<1x32xf32>
    %425 = vector.extract_strided_slice %423 {offsets = [8, 0], sizes = [1, 32], strides = [1, 1]} : vector<16x32xf32> to vector<1x32xf32>
    %426 = tpu.concatenate %424, %425 in 0 : vector<1x32xf32>, vector<1x32xf32> -> vector<2x32xf32>
    %c0_164 = arith.constant 0 : index
    %c0_165 = arith.constant 0 : index
    %427 = vector.load %arg16[%c0_164, %c0_165] : memref<32x32xf32, #tpu.memory_space<vmem>>, vector<32x32xf32>
    %428 = arith.truncf %426 : vector<2x32xf32> to vector<2x32xbf16>
    %429 = arith.truncf %427 : vector<32x32xf32> to vector<32x32xbf16>
    %cst_166 = arith.constant dense<0.000000e+00> : vector<2x32xf32>
    %430 = tpu.matmul %428, %429, %cst_166 {dimension_numbers = #tpu.dot_dimension_numbers<[1], [0], [0], [1], [0, 0, 1, 1], [], []>} : vector<2x32xbf16>, vector<32x32xbf16>, vector<2x32xf32> -> vector<2x32xf32>
    %c0_167 = arith.constant 0 : index
    %c0_168 = arith.constant 0 : index
    %431 = vector.load %arg17[%c0_167, %c0_168] : memref<1x32xf32, #tpu.memory_space<vmem>>, vector<1x32xf32>
    %432 = vector.broadcast %431 : vector<1x32xf32> to vector<2x32xf32>
    %433 = arith.addf %430, %432 : vector<2x32xf32>
    %434 = math.tanh %433 : vector<2x32xf32>
    %c0_169 = arith.constant 0 : index
    %c0_170 = arith.constant 0 : index
    %435 = vector.load %arg18[%c0_169, %c0_170] : memref<32x128xf32, #tpu.memory_space<vmem>>, vector<32x128xf32>
    %436 = arith.truncf %434 : vector<2x32xf32> to vector<2x32xbf16>
    %437 = arith.truncf %435 : vector<32x128xf32> to vector<32x128xbf16>
    %cst_171 = arith.constant dense<0.000000e+00> : vector<2x128xf32>
    %438 = tpu.matmul %436, %437, %cst_171 {dimension_numbers = #tpu.dot_dimension_numbers<[1], [0], [0], [1], [0, 0, 1, 1], [], []>} : vector<2x32xbf16>, vector<32x128xbf16>, vector<2x128xf32> -> vector<2x128xf32>
    %c0_172 = arith.constant 0 : index
    %c0_173 = arith.constant 0 : index
    %439 = vector.load %arg19[%c0_172, %c0_173] : memref<1x128xf32, #tpu.memory_space<vmem>>, vector<1x128xf32>
    %440 = vector.broadcast %439 : vector<1x128xf32> to vector<2x128xf32>
    %441 = arith.addf %438, %440 : vector<2x128xf32>
    %c0_174 = arith.constant 0 : index
    %c0_175 = arith.constant 0 : index
    %442 = vector.load %arg20[%c0_174, %c0_175] : memref<2x128xf32, #tpu.memory_space<vmem>>, vector<2x128xf32>
    tpu.vector_store %arg20[%c0_174, %c0_175], %441 {strides = array<i32>} : memref<2x128xf32, #tpu.memory_space<vmem>>, vector<2x128xf32>,
    return
  }
}

</mosaic_0001>

<llo_original>
// kernel: kcbert_forward.1
$region0: #{kcbert_forward.1}
  #allocation0 [shape = 'u32[]', space=smem, size = 0x4, offset = 0x4, fixed_abs, tag = 'smem constant byte address 0x4 - core index']
  #allocation1 [shape = 'u32[144,128]{1,0:T(1,128)}', space=vmem, size = 0x12000, scoped, tag = 'internal scratch']
  %s0 = inlined_call_operand.hbm [shape: f32[16,32], index: 0, kind: input, shape index: {}]
  %s1 = inlined_call_operand.hbm [shape: f32[16,16], index: 1, kind: input, shape index: {}]
  %s2 = inlined_call_operand.hbm [shape: f32[1,32], index: 2, kind: input, shape index: {}]
  %s3 = inlined_call_operand.hbm [shape: f32[1,32], index: 3, kind: input, shape index: {}]
  %s4 = inlined_call_operand.hbm [shape: f32[2,32,96], index: 4, kind: input, shape index: {}]
  %s5 = inlined_call_operand.hbm [shape: f32[2,1,96], index: 5, kind: input, shape index: {}]
  %s6 = inlined_call_operand.hbm [shape: f32[2,32,32], index: 6, kind: input, shape index: {}]
  %s7 = inlined_call_operand.hbm [shape: f32[2,1,32], index: 7, kind: input, shape index: {}]
  %s8 = inlined_call_operand.hbm [shape: f32[2,1,32], index: 8, kind: input, shape index: {}]
  %s9 = inlined_call_operand.hbm [shape: f32[2,1,32], index: 9, kind: input, shape index: {}]
  %s10 = inlined_call_operand.hbm [shape: f32[2,32,64], index: 10, kind: input, shape index: {}]
  %s11 = inlined_call_operand.hbm [shape: f32[2,1,64], index: 11, kind: input, shape index: {}]
  %s12 = inlined_call_operand.hbm [shape: f32[2,64,32], index: 12, kind: input, shape index: {}]
  %s13 = inlined_call_operand.hbm [shape: f32[2,1,32], index: 13, kind: input, shape index: {}]
  %s14 = inlined_call_operand.hbm [shape: f32[2,1,32], index: 14, kind: input, shape index: {}]
  %s15 = inlined_call_operand.hbm [shape: f32[2,1,32], index: 15, kind: input, shape index: {}]
  %s16 = inlined_call_operand.hbm [shape: f32[32,32], index: 16, kind: input, shape index: {}]
  %s17 = inlined_call_operand.hbm [shape: f32[1,32], index: 17, kind: input, shape index: {}]
  %s18 = inlined_call_operand.hbm [shape: f32[32,128], index: 18, kind: input, shape index: {}]
  %s19 = inlined_call_operand.hbm [shape: f32[1,128], index: 19, kind: input, shape index: {}]
  %s20 = inlined_call_operand.hbm [shape: f32[2,128], index: 20, kind: output, shape index: {}]
  %s21 = sld [smem:[#allocation0]]
  $region170: #{kcbert_forward.1} parent=0
    _
  %s23 = ssub.s32 1, %s21
  %s24 = scalar_select 0, %s23, %s21
  $region1: #{kcbert_forward.1} parent=0
    #allocation2 [shape = 'u8[8192]{0}', space=vmem, size = 0x2000, scoped, tag = 'input window, operand 0, single buffered']
    #allocation3 [shape = 's32[1]{0}', space=sflag, size = 0x4, scoped, tag = 'scoped memory for kcbert_forward.1']
    #allocation4 [shape = 's32[1]{0}', space=sflag, size = 0x4, scoped, tag = 'scoped memory for kcbert_forward.1']
    #allocation5 [shape = 'u8[8192]{0}', space=vmem, size = 0x2000, scoped, tag = 'input window, operand 1, single buffered']
    #allocation6 [shape = 's32[1]{0}', space=sflag, size = 0x4, scoped, tag = 'scoped memory for kcbert_forward.1']
    #allocation7 [shape = 'u8[512]{0}', space=vmem, size = 0x400, scoped, tag = 'input window, operand 2, single buffered']
    #allocation8 [shape = 'u8[512]{0}', space=vmem, size = 0x400, scoped, tag = 'input window, operand 3, single buffered']
    #allocation9 [shape = 's32[1]{0}', space=sflag, size = 0x4, scoped, tag = 'scoped memory for kcbert_forward.1']
    #allocation10 [shape = 'u8[32768]{0}', space=vmem, size = 0x8000, scoped, tag = 'input window, operand 4, single buffered']
    #allocation11 [shape = 'u8[1024]{0}', space=vmem, size = 0x400, scoped, tag = 'input window, operand 5, single buffered']
    #allocation12 [shape = 's32[1]{0}', space=sflag, size = 0x4, scoped, tag = 'scoped memory for kcbert_forward.1']
    #allocation13 [shape = 'u8[32768]{0}', space=vmem, size = 0x8000, scoped, tag = 'input window, operand 6, single buffered']
    #allocation14 [shape = 'u8[1024]{0}', space=vmem, size = 0x400, scoped, tag = 'input window, operand 7, single buffered']
    #allocation15 [shape = 's32[1]{0}', space=sflag, size = 0x4, scoped, tag = 'scoped memory for kcbert_forward.1']
    #allocation16 [shape = 'u8[1024]{0}', space=vmem, size = 0x400, scoped, tag = 'input window, operand 8, single buffered']
    #allocation17 [shape = 'u8[1024]{0}', space=vmem, size = 0x400, scoped, tag = 'input window, operand 9, single buffered']
    #allocation18 [shape = 's32[1]{0}', space=sflag, size = 0x4, scoped, tag = 'scoped memory for kcbert_forward.1']
    #allocation19 [shape = 'u8[32768]{0}', space=vmem, size = 0x8000, scoped, tag = 'input window, operand 10, single buffered']
    #allocation20 [shape = 'u8[1024]{0}', space=vmem, size = 0x400, scoped, tag = 'input window, operand 11, single buffered']
    #allocation21 [shape = 's32[1]{0}', space=sflag, size = 0x4, scoped, tag = 'scoped memory for kcbert_forward.1']
    #allocation22 [shape = 'u8[65536]{0}', space=vmem, size = 0x10000, scoped, tag = 'input window, operand 12, single buffered']
    #allocation23 [shape = 'u8[1024]{0}', space=vmem, size = 0x400, scoped, tag = 'input window, operand 13, single buffered']
    #allocation24 [shape = 's32[1]{0}', space=sflag, size = 0x4, scoped, tag = 'scoped memory for kcbert_forward.1']
    #allocation25 [shape = 'u8[1024]{0}', space=vmem, size = 0x400, scoped, tag = 'input window, operand 14, single buffered']
    #allocation26 [shape = 'u8[1024]{0}', space=vmem, size = 0x400, scoped, tag = 'input window, operand 15, single buffered']
    #allocation27 [shape = 's32[1]{0}', space=sflag, size = 0x4, scoped, tag = 'scoped memory for kcbert_forward.1']
    #allocation28 [shape = 'u8[16384]{0}', space=vmem, size = 0x4000, scoped, tag = 'input window, operand 16, single buffered']
    #allocation29 [shape = 'u8[512]{0}', space=vmem, size = 0x400, scoped, tag = 'input window, operand 17, single buffered']
    #allocation30 [shape = 's32[1]{0}', space=sflag, size = 0x4, scoped, tag = 'scoped memory for kcbert_forward.1']
    #allocation31 [shape = 'u8[16384]{0}', space=vmem, size = 0x4000, scoped, tag = 'input window, operand 18, single buffered']
    #allocation32 [shape = 'u8[512]{0}', space=vmem, size = 0x400, scoped, tag = 'input window, operand 19, single buffered']
    #allocation33 [shape = 's32[1]{0}', space=sflag, size = 0x4, scoped, tag = 'scoped memory for kcbert_forward.1']
    #allocation34 [shape = 'u8[1024]{0}', space=vmem, size = 0x400, scoped, tag = 'output window, operand 0, single buffered']
    %25 = vsyncpa [#allocation3], 0
    %26 = vsyncpa [#allocation6], 0
    %27 = vsyncpa [#allocation9], 0
    %28 = vsyncpa [#allocation12], 0
    %29 = vsyncpa [#allocation15], 0
    %30 = vsyncpa [#allocation18], 0
    %31 = vsyncpa [#allocation21], 0
    %32 = vsyncpa [#allocation24], 0
    %33 = vsyncpa [#allocation27], 0
    %34 = vsyncpa [#allocation30], 0
    %35 = vsyncpa [#allocation33], 0
    %36 = vsyncpa [#allocation4], 0
    // Predicated region
    $region2: #{kcbert_forward.1} parent=1 // pred_check
      _
    $region3: #{kcbert_forward.1} parent=1 // pred_check_branch
      %38 = sbr.rel (0) target = $region5
    $region4: #{kcbert_forward.1} parent=1 // pred_region
      %s40 = ssub.s32 256, 256
      %41 = vsyncadd [#allocation3], %s40
      %s42 = sshll.u32 [#allocation2], 4
      %s43 = int_to_ptr.vmem [resolvable:$true] %s42
      %48 = dma.hbm_to_vmem [thread:$0]  %s0, 256, %s43, [#allocation3], 128, 128, 8
    $region5: #{kcbert_forward.1} parent=1 // pred_fallthru
      _
    // Predicated region
    $region6: #{kcbert_forward.1} parent=1 // pred_check
      _
    $region7: #{kcbert_forward.1} parent=1 // pred_check_branch
      %50 = sbr.rel (0) target = $region9
    $region8: #{kcbert_forward.1} parent=1 // pred_region
      %s52 = ssub.s32 256, 256
      %53 = vsyncadd [#allocation6], %s52
      %s54 = sshll.u32 [#allocation5], 4
      %s55 = int_to_ptr.vmem [resolvable:$true] %s54
      %60 = dma.hbm_to_vmem [thread:$0]  %s1, 256, %s55, [#allocation6], 128, 128, 8
    $region9: #{kcbert_forward.1} parent=1 // pred_fallthru
      _
    // Predicated region
    $region10: #{kcbert_forward.1} parent=1 // pred_check
      _
    $region11: #{kcbert_forward.1} parent=1 // pred_check_branch
      %62 = sbr.rel (0) target = $region13
    $region12: #{kcbert_forward.1} parent=1 // pred_region
      %s64 = ssub.s32 16, 16
      %65 = vsyncadd [#allocation6], %s64
      %s67 = sshll.u32 [#allocation7], 4
      %s68 = int_to_ptr.vmem [resolvable:$true] %s67
      %70 = dma.hbm_to_vmem [thread:$0]  %s2, 16, %s68, [#allocation6]
    $region13: #{kcbert_forward.1} parent=1 // pred_fallthru
      _
    // Predicated region
    $region14: #{kcbert_forward.1} parent=1 // pred_check
      _
    $region15: #{kcbert_forward.1} parent=1 // pred_check_branch
      %72 = sbr.rel (0) target = $region17
    $region16: #{kcbert_forward.1} parent=1 // pred_region
      %s74 = ssub.s32 16, 16
      %75 = vsyncadd [#allocation9], %s74
      %s77 = sshll.u32 [#allocation8], 4
      %s78 = int_to_ptr.vmem [resolvable:$true] %s77
      %80 = dma.hbm_to_vmem [thread:$0]  %s3, 16, %s78, [#allocation9]
    $region17: #{kcbert_forward.1} parent=1 // pred_fallthru
      _
    // Predicated region
    $region18: #{kcbert_forward.1} parent=1 // pred_check
      _
    $region19: #{kcbert_forward.1} parent=1 // pred_check_branch
      %82 = sbr.rel (0) target = $region21
    $region20: #{kcbert_forward.1} parent=1 // pred_region
      %s84 = ssub.s32 1024, 1024
      %85 = vsyncadd [#allocation9], %s84
      %s86 = sshll.u32 [#allocation10], 4
      %s87 = int_to_ptr.vmem [resolvable:$true] %s86
      %92 = dma.hbm_to_vmem [thread:$0]  %s4, 1024, %s87, [#allocation9], 128, 128, 8
    $region21: #{kcbert_forward.1} parent=1 // pred_fallthru
      _
    // Predicated region
    $region22: #{kcbert_forward.1} parent=1 // pred_check
      _
    $region23: #{kcbert_forward.1} parent=1 // pred_check_branch
      %94 = sbr.rel (0) target = $region25
    $region24: #{kcbert_forward.1} parent=1 // pred_region
      %s96 = ssub.s32 32, 32
      %97 = vsyncadd [#allocation12], %s96
      %s98 = sshll.u32 [#allocation11], 4
      %s99 = int_to_ptr.vmem [resolvable:$true] %s98
      %104 = dma.hbm_to_vmem [thread:$0]  %s5, 32, %s99, [#allocation12], 16, 16, 1
    $region25: #{kcbert_forward.1} parent=1 // pred_fallthru
      _
    // Predicated region
    $region26: #{kcbert_forward.1} parent=1 // pred_check
      _
    $region27: #{kcbert_forward.1} parent=1 // pred_check_branch
      %106 = sbr.rel (0) target = $region29
    $region28: #{kcbert_forward.1} parent=1 // pred_region
      %s108 = ssub.s32 1024, 1024
      %109 = vsyncadd [#allocation12], %s108
      %s110 = sshll.u32 [#allocation13], 4
      %s111 = int_to_ptr.vmem [resolvable:$true] %s110
      %116 = dma.hbm_to_vmem [thread:$0]  %s6, 1024, %s111, [#allocation12], 128, 128, 8
    $region29: #{kcbert_forward.1} parent=1 // pred_fallthru
      _
    // Predicated region
    $region30: #{kcbert_forward.1} parent=1 // pred_check
      _
    $region31: #{kcbert_forward.1} parent=1 // pred_check_branch
      %118 = sbr.rel (0) target = $region33
    $region32: #{kcbert_forward.1} parent=1 // pred_region
      %s120 = ssub.s32 32, 32
      %121 = vsyncadd [#allocation15], %s120
      %s122 = sshll.u32 [#allocation14], 4
      %s123 = int_to_ptr.vmem [resolvable:$true] %s122
      %128 = dma.hbm_to_vmem [thread:$0]  %s7, 32, %s123, [#allocation15], 16, 16, 1
    $region33: #{kcbert_forward.1} parent=1 // pred_fallthru
      _
    // Predicated region
    $region34: #{kcbert_forward.1} parent=1 // pred_check
      _
    $region35: #{kcbert_forward.1} parent=1 // pred_check_branch
      %130 = sbr.rel (0) target = $region37
    $region36: #{kcbert_forward.1} parent=1 // pred_region
      %s132 = ssub.s32 32, 32
      %133 = vsyncadd [#allocation15], %s132
      %s134 = sshll.u32 [#allocation16], 4
      %s135 = int_to_ptr.vmem [resolvable:$true] %s134
      %140 = dma.hbm_to_vmem [thread:$0]  %s8, 32, %s135, [#allocation15], 16, 16, 1
    $region37: #{kcbert_forward.1} parent=1 // pred_fallthru
      _
    // Predicated region
    $region38: #{kcbert_forward.1} parent=1 // pred_check
      _
    $region39: #{kcbert_forward.1} parent=1 // pred_check_branch
      %142 = sbr.rel (0) target = $region41
    $region40: #{kcbert_forward.1} parent=1 // pred_region
      %s144 = ssub.s32 32, 32
      %145 = vsyncadd [#allocation18], %s144
      %s146 = sshll.u32 [#allocation17], 4
      %s147 = int_to_ptr.vmem [resolvable:$true] %s146
      %152 = dma.hbm_to_vmem [thread:$0]  %s9, 32, %s147, [#allocation18], 16, 16, 1
    $region41: #{kcbert_forward.1} parent=1 // pred_fallthru
      _
    // Predicated region
    $region42: #{kcbert_forward.1} parent=1 // pred_check
      _
    $region43: #{kcbert_forward.1} parent=1 // pred_check_branch
      %154 = sbr.rel (0) target = $region45
    $region44: #{kcbert_forward.1} parent=1 // pred_region
      %s156 = ssub.s32 1024, 1024
      %157 = vsyncadd [#allocation18], %s156
      %s158 = sshll.u32 [#allocation19], 4
      %s159 = int_to_ptr.vmem [resolvable:$true] %s158
      %164 = dma.hbm_to_vmem [thread:$0]  %s10, 1024, %s159, [#allocation18], 128, 128, 8
    $region45: #{kcbert_forward.1} parent=1 // pred_fallthru
      _
    // Predicated region
    $region46: #{kcbert_forward.1} parent=1 // pred_check
      _
    $region47: #{kcbert_forward.1} parent=1 // pred_check_branch
      %166 = sbr.rel (0) target = $region49
    $region48: #{kcbert_forward.1} parent=1 // pred_region
      %s168 = ssub.s32 32, 32
      %169 = vsyncadd [#allocation21], %s168
      %s170 = sshll.u32 [#allocation20], 4
      %s171 = int_to_ptr.vmem [resolvable:$true] %s170
      %176 = dma.hbm_to_vmem [thread:$0]  %s11, 32, %s171, [#allocation21], 16, 16, 1
    $region49: #{kcbert_forward.1} parent=1 // pred_fallthru
      _
    // Predicated region
    $region50: #{kcbert_forward.1} parent=1 // pred_check
      _
    $region51: #{kcbert_forward.1} parent=1 // pred_check_branch
      %178 = sbr.rel (0) target = $region53
    $region52: #{kcbert_forward.1} parent=1 // pred_region
      %s180 = ssub.s32 2048, 2048
      %181 = vsyncadd [#allocation21], %s180
      %s182 = sshll.u32 [#allocation22], 4
      %s183 = int_to_ptr.vmem [resolvable:$true] %s182
      %188 = dma.hbm_to_vmem [thread:$0]  %s12, 2048, %s183, [#allocation21], 128, 128, 8
    $region53: #{kcbert_forward.1} parent=1 // pred_fallthru
      _
    // Predicated region
    $region54: #{kcbert_forward.1} parent=1 // pred_check
      _
    $region55: #{kcbert_forward.1} parent=1 // pred_check_branch
      %190 = sbr.rel (0) target = $region57
    $region56: #{kcbert_forward.1} parent=1 // pred_region
      %s192 = ssub.s32 32, 32
      %193 = vsyncadd [#allocation24], %s192
      %s194 = sshll.u32 [#allocation23], 4
      %s195 = int_to_ptr.vmem [resolvable:$true] %s194
      %200 = dma.hbm_to_vmem [thread:$0]  %s13, 32, %s195, [#allocation24], 16, 16, 1
    $region57: #{kcbert_forward.1} parent=1 // pred_fallthru
      _
    // Predicated region
    $region58: #{kcbert_forward.1} parent=1 // pred_check
      _
    $region59: #{kcbert_forward.1} parent=1 // pred_check_branch
      %202 = sbr.rel (0) target = $region61
    $region60: #{kcbert_forward.1} parent=1 // pred_region
      %s204 = ssub.s32 32, 32
      %205 = vsyncadd [#allocation24], %s204
      %s206 = sshll.u32 [#allocation25], 4
      %s207 = int_to_ptr.vmem [resolvable:$true] %s206
      %212 = dma.hbm_to_vmem [thread:$0]  %s14, 32, %s207, [#allocation24], 16, 16, 1
    $region61: #{kcbert_forward.1} parent=1 // pred_fallthru
      _
    // Predicated region
    $region62: #{kcbert_forward.1} parent=1 // pred_check
      _
    $region63: #{kcbert_forward.1} parent=1 // pred_check_branch
      %214 = sbr.rel (0) target = $region65
    $region64: #{kcbert_forward.1} parent=1 // pred_region
      %s216 = ssub.s32 32, 32
      %217 = vsyncadd [#allocation27], %s216
      %s218 = sshll.u32 [#allocation26], 4
      %s219 = int_to_ptr.vmem [resolvable:$true] %s218
      %224 = dma.hbm_to_vmem [thread:$0]  %s15, 32, %s219, [#allocation27], 16, 16, 1
    $region65: #{kcbert_forward.1} parent=1 // pred_fallthru
      _
    // Predicated region
    $region66: #{kcbert_forward.1} parent=1 // pred_check
      _
    $region67: #{kcbert_forward.1} parent=1 // pred_check_branch
      %226 = sbr.rel (0) target = $region69
    $region68: #{kcbert_forward.1} parent=1 // pred_region
      %s228 = ssub.s32 512, 512
      %229 = vsyncadd [#allocation27], %s228
      %s230 = sshll.u32 [#allocation28], 4
      %s231 = int_to_ptr.vmem [resolvable:$true] %s230
      %236 = dma.hbm_to_vmem [thread:$0]  %s16, 512, %s231, [#allocation27], 128, 128, 8
    $region69: #{kcbert_forward.1} parent=1 // pred_fallthru
      _
    // Predicated region
    $region70: #{kcbert_forward.1} parent=1 // pred_check
      _
    $region71: #{kcbert_forward.1} parent=1 // pred_check_branch
      %238 = sbr.rel (0) target = $region73
    $region72: #{kcbert_forward.1} parent=1 // pred_region
      %s240 = ssub.s32 16, 16
      %241 = vsyncadd [#allocation30], %s240
      %s243 = sshll.u32 [#allocation29], 4
      %s244 = int_to_ptr.vmem [resolvable:$true] %s243
      %246 = dma.hbm_to_vmem [thread:$0]  %s17, 16, %s244, [#allocation30]
    $region73: #{kcbert_forward.1} parent=1 // pred_fallthru
      _
    // Predicated region
    $region74: #{kcbert_forward.1} parent=1 // pred_check
      _
    $region75: #{kcbert_forward.1} parent=1 // pred_check_branch
      %248 = sbr.rel (0) target = $region77
    $region76: #{kcbert_forward.1} parent=1 // pred_region
      %s250 = ssub.s32 512, 512
      %251 = vsyncadd [#allocation30], %s250
      %s252 = sshll.u32 [#allocation31], 4
      %s253 = int_to_ptr.vmem [resolvable:$true] %s252
      %258 = dma.hbm_to_vmem [thread:$0]  %s18, 512, %s253, [#allocation30], 128, 128, 8
    $region77: #{kcbert_forward.1} parent=1 // pred_fallthru
      _
    // Predicated region
    $region78: #{kcbert_forward.1} parent=1 // pred_check
      _
    $region79: #{kcbert_forward.1} parent=1 // pred_check_branch
      %260 = sbr.rel (0) target = $region81
    $region80: #{kcbert_forward.1} parent=1 // pred_region
      %s262 = ssub.s32 16, 16
      %263 = vsyncadd [#allocation33], %s262
      %s265 = sshll.u32 [#allocation32], 4
      %s266 = int_to_ptr.vmem [resolvable:$true] %s265
      %268 = dma.hbm_to_vmem [thread:$0]  %s19, 16, %s266, [#allocation33]
    $region81: #{kcbert_forward.1} parent=1 // pred_fallthru
      _
    // Predicated region
    $region82: #{kcbert_forward.1} parent=1 // pred_check
      _
    $region83: #{kcbert_forward.1} parent=1 // pred_check_branch
      %270 = sbr.rel (0) target = $region85
    $region84: #{kcbert_forward.1} parent=1 // pred_region
      %271 = dma.done [#allocation3], 256
    $region85: #{kcbert_forward.1} parent=1 // pred_fallthru
      _
    // Predicated region
    $region86: #{kcbert_forward.1} parent=1 // pred_check
      _
    $region87: #{kcbert_forward.1} parent=1 // pred_check_branch
      %273 = sbr.rel (0) target = $region89
    $region88: #{kcbert_forward.1} parent=1 // pred_region
      %274 = dma.done [#allocation6], 256
    $region89: #{kcbert_forward.1} parent=1 // pred_fallthru
      _
    // Predicated region
    $region90: #{kcbert_forward.1} parent=1 // pred_check
      _
    $region91: #{kcbert_forward.1} parent=1 // pred_check_branch
      %276 = sbr.rel (0) target = $region93
    $region92: #{kcbert_forward.1} parent=1 // pred_region
      %277 = dma.done [#allocation6], 16
    $region93: #{kcbert_forward.1} parent=1 // pred_fallthru
      _
    // Predicated region
    $region94: #{kcbert_forward.1} parent=1 // pred_check
      _
    $region95: #{kcbert_forward.1} parent=1 // pred_check_branch
      %279 = sbr.rel (0) target = $region97
    $region96: #{kcbert_forward.1} parent=1 // pred_region
      %280 = dma.done [#allocation9], 16
    $region97: #{kcbert_forward.1} parent=1 // pred_fallthru
      _
    // Predicated region
    $region98: #{kcbert_forward.1} parent=1 // pred_check
      _
    $region99: #{kcbert_forward.1} parent=1 // pred_check_branch
      %282 = sbr.rel (0) target = $region101
    $region100: #{kcbert_forward.1} parent=1 // pred_region
      %283 = dma.done [#allocation9], 1024
    $region101: #{kcbert_forward.1} parent=1 // pred_fallthru
      _
    // Predicated region
    $region102: #{kcbert_forward.1} parent=1 // pred_check
      _
    $region103: #{kcbert_forward.1} parent=1 // pred_check_branch
      %285 = sbr.rel (0) target = $region105
    $region104: #{kcbert_forward.1} parent=1 // pred_region
      %286 = dma.done [#allocation12], 32
    $region105: #{kcbert_forward.1} parent=1 // pred_fallthru
      _
    // Predicated region
    $region106: #{kcbert_forward.1} parent=1 // pred_check
      _
    $region107: #{kcbert_forward.1} parent=1 // pred_check_branch
      %288 = sbr.rel (0) target = $region109
    $region108: #{kcbert_forward.1} parent=1 // pred_region
      %289 = dma.done [#allocation12], 1024
    $region109: #{kcbert_forward.1} parent=1 // pred_fallthru
      _
    // Predicated region
    $region110: #{kcbert_forward.1} parent=1 // pred_check
      _
    $region111: #{kcbert_forward.1} parent=1 // pred_check_branch
      %291 = sbr.rel (0) target = $region113
    $region112: #{kcbert_forward.1} parent=1 // pred_region
      %292 = dma.done [#allocation15], 32
    $region113: #{kcbert_forward.1} parent=1 // pred_fallthru
      _
    // Predicated region
    $region114: #{kcbert_forward.1} parent=1 // pred_check
      _
    $region115: #{kcbert_forward.1} parent=1 // pred_check_branch
      %294 = sbr.rel (0) target = $region117
    $region116: #{kcbert_forward.1} parent=1 // pred_region
      %295 = dma.done [#allocation15], 32
    $region117: #{kcbert_forward.1} parent=1 // pred_fallthru
      _
    // Predicated region
    $region118: #{kcbert_forward.1} parent=1 // pred_check
      _
    $region119: #{kcbert_forward.1} parent=1 // pred_check_branch
      %297 = sbr.rel (0) target = $region121
    $region120: #{kcbert_forward.1} parent=1 // pred_region
      %298 = dma.done [#allocation18], 32
    $region121: #{kcbert_forward.1} parent=1 // pred_fallthru
      _
    // Predicated region
    $region122: #{kcbert_forward.1} parent=1 // pred_check
      _
    $region123: #{kcbert_forward.1} parent=1 // pred_check_branch
      %300 = sbr.rel (0) target = $region125
    $region124: #{kcbert_forward.1} parent=1 // pred_region
      %301 = dma.done [#allocation18], 1024
    $region125: #{kcbert_forward.1} parent=1 // pred_fallthru
      _
    // Predicated region
    $region126: #{kcbert_forward.1} parent=1 // pred_check
      _
    $region127: #{kcbert_forward.1} parent=1 // pred_check_branch
      %303 = sbr.rel (0) target = $region129
    $region128: #{kcbert_forward.1} parent=1 // pred_region
      %304 = dma.done [#allocation21], 32
    $region129: #{kcbert_forward.1} parent=1 // pred_fallthru
      _
    // Predicated region
    $region130: #{kcbert_forward.1} parent=1 // pred_check
      _
    $region131: #{kcbert_forward.1} parent=1 // pred_check_branch
      %306 = sbr.rel (0) target = $region133
    $region132: #{kcbert_forward.1} parent=1 // pred_region
      %307 = dma.done [#allocation21], 2048
    $region133: #{kcbert_forward.1} parent=1 // pred_fallthru
      _
    // Predicated region
    $region134: #{kcbert_forward.1} parent=1 // pred_check
      _
    $region135: #{kcbert_forward.1} parent=1 // pred_check_branch
      %309 = sbr.rel (0) target = $region137
    $region136: #{kcbert_forward.1} parent=1 // pred_region
      %310 = dma.done [#allocation24], 32
    $region137: #{kcbert_forward.1} parent=1 // pred_fallthru
      _
    // Predicated region
    $region138: #{kcbert_forward.1} parent=1 // pred_check
      _
    $region139: #{kcbert_forward.1} parent=1 // pred_check_branch
      %312 = sbr.rel (0) target = $region141
    $region140: #{kcbert_forward.1} parent=1 // pred_region
      %313 = dma.done [#allocation24], 32
    $region141: #{kcbert_forward.1} parent=1 // pred_fallthru
      _
    // Predicated region
    $region142: #{kcbert_forward.1} parent=1 // pred_check
      _
    $region143: #{kcbert_forward.1} parent=1 // pred_check_branch
      %315 = sbr.rel (0) target = $region145
    $region144: #{kcbert_forward.1} parent=1 // pred_region
      %316 = dma.done [#allocation27], 32
    $region145: #{kcbert_forward.1} parent=1 // pred_fallthru
      _
    // Predicated region
    $region146: #{kcbert_forward.1} parent=1 // pred_check
      _
    $region147: #{kcbert_forward.1} parent=1 // pred_check_branch
      %318 = sbr.rel (0) target = $region149
    $region148: #{kcbert_forward.1} parent=1 // pred_region
      %319 = dma.done [#allocation27], 512
    $region149: #{kcbert_forward.1} parent=1 // pred_fallthru
      _
    // Predicated region
    $region150: #{kcbert_forward.1} parent=1 // pred_check
      _
    $region151: #{kcbert_forward.1} parent=1 // pred_check_branch
      %321 = sbr.rel (0) target = $region153
    $region152: #{kcbert_forward.1} parent=1 // pred_region
      %322 = dma.done [#allocation30], 16
    $region153: #{kcbert_forward.1} parent=1 // pred_fallthru
      _
    // Predicated region
    $region154: #{kcbert_forward.1} parent=1 // pred_check
      _
    $region155: #{kcbert_forward.1} parent=1 // pred_check_branch
      %324 = sbr.rel (0) target = $region157
    $region156: #{kcbert_forward.1} parent=1 // pred_region
      %325 = dma.done [#allocation30], 512
    $region157: #{kcbert_forward.1} parent=1 // pred_fallthru
      _
    // Predicated region
    $region158: #{kcbert_forward.1} parent=1 // pred_check
      _
    $region159: #{kcbert_forward.1} parent=1 // pred_check_branch
      %327 = sbr.rel (0) target = $region161
    $region160: #{kcbert_forward.1} parent=1 // pred_region
      %328 = dma.done [#allocation33], 16
    $region161: #{kcbert_forward.1} parent=1 // pred_fallthru
      _
    %v330 = vld [vmem:[#allocation5] sm:$0xff]
    %v331 = vld [vmem:[#allocation5 + $0x8] sm:$0xff]
    %v332 = vld [vmem:[#allocation2] sm:$0xff]
    %v333 = vld [vmem:[#allocation2 + $0x8] sm:$0xff]
    %v334 = vld [vmem:[#allocation7] sm:$0x1]
    %v335 = vld [vmem:[#allocation8] sm:$0x1]
    %vm336 = vcmask 261120
    %v337 = vsel %vm336, %v332, 0.0
    %338 = vadd.xlane.f32.xlu0 %v337
    %v339 = vpop.xlane.xlu0 %338
    %v340 = vsel %vm336, %v333, 0.0
    %341 = vadd.xlane.f32.xlu0 %v340
    %v342 = vpop.xlane.xlu0 %341
    %v343 = vrcp.pop 32.0
    %v344 = vmul.f32 %v339, %v343
    %v345 = vmul.f32 %v342, %v343
    %v346 = vsub.f32 %v332, %v344
    %v347 = vsub.f32 %v333, %v345
    %v348 = vmul.f32 %v346, %v346
    %v349 = vmul.f32 %v347, %v347
    %v350 = vsel %vm336, %v348, 0.0
    %351 = vadd.xlane.f32.xlu0 %v350
    %v352 = vpop.xlane.xlu0 %351
    %v353 = vsel %vm336, %v349, 0.0
    %354 = vadd.xlane.f32.xlu0 %v353
    %v355 = vpop.xlane.xlu0 %354
    %v356 = vmul.f32 %v352, %v343
    %v357 = vmul.f32 %v355, %v343
    %v358 = vadd.f32 %v356, 1e-12
    %v359 = vadd.f32 %v357, 1e-12
    %v360 = vrsqrt.pop %v358
    %v361 = vrsqrt.pop %v359
    %v362 = vmul.f32 %v346, %v360
    %v363 = vmul.f32 %v347, %v361
    %v365 = vlaneseq
    %v366 = vshrl.u32 %v365, 7
    %v367 = vsub.s32 0, %v366
    %v368 = vrot.slane %v334, %v367
    %v370 = vmul.f32 %v362, %v368
    %v371 = vmul.f32 %v363, %v368
    %v373 = vlaneseq
    %v374 = vshrl.u32 %v373, 7
    %v375 = vsub.s32 0, %v374
    %v376 = vrot.slane %v335, %v375
    %v378 = vadd.f32 %v370, %v376
    %v379 = vadd.f32 %v371, %v376
    %v380 = vld [vmem:[#allocation10] sm:$0xff]
    %v381 = vld [vmem:[#allocation10 + $0x8] sm:$0xff]
    %v382 = vld [vmem:[#allocation10 + $0x10] sm:$0xff]
    %v383 = vld [vmem:[#allocation10 + $0x18] sm:$0xff]
    %v384 = vpack.c.bf16 %v379, %v378
    %v385 = vpack.c.bf16 %v381, %v380
    %v386 = vpack.c.bf16 %v383, %v382
    %v387 = vld [vmem:[#allocation11] sm:$0x1]
    %v389 = vlaneseq
    %v390 = vshrl.u32 %v389, 7
    %v391 = vsub.s32 0, %v390
    %v392 = vrot.slane %v387, %v391
    %v395 = vsel %vm336, %v384, 0
    %397 = vmatprep.subr.bf16.mxu0 0
    %398 = vmatpush1.bf16.msra.mxu0 %v385
    %399 = vmatprep.subr.bf16.mxu0 0
    %400 = vmatpush1.bf16.msra.mxu0 %v386
    %401 = vmatprep.subr.bf16.mxu0 0
    %402 = vmatpush1.bf16.msra.mxu0 0
    %403 = vmatprep.subr.bf16.mxu0 0
    %404 = vmatpush1.bf16.msra.mxu0 0
    %405 = vmatprep.subr.bf16.mxu0 0
    %406 = vmatpush1.bf16.msra.mxu0 0
    %407 = vmatprep.subr.bf16.mxu0 0
    %408 = vmatpush1.bf16.msra.mxu0 0
    %409 = vmatprep.subr.bf16.mxu0 0
    %410 = vmatpush1.bf16.msra.mxu0 0
    %411 = vmatprep.subr.bf16.mxu0 0
    %412 = vmatpush1.bf16.msra.mxu0 0
    %413 = vmatprep.subr.bf16.mxu0 0
    %414 = vmatpush1.bf16.msra.mxu0 0
    %415 = vmatprep.subr.bf16.mxu0 0
    %416 = vmatpush1.bf16.msra.mxu0 0
    %417 = vmatprep.subr.bf16.mxu0 0
    %418 = vmatpush1.bf16.msra.mxu0 0
    %419 = vmatprep.subr.bf16.mxu0 0
    %420 = vmatpush1.bf16.msra.mxu0 0
    %421 = vmatprep.subr.bf16.mxu0 0
    %422 = vmatpush1.bf16.msra.mxu0 0
    %423 = vmatprep.subr.bf16.mxu0 0
    %424 = vmatpush1.bf16.msra.mxu0 0
    %425 = vmatprep.subr.bf16.mxu0 0
    %426 = vmatpush1.bf16.msra.mxu0 0
    %427 = vmatprep.subr.bf16.mxu0 0
    %428 = vmatpush1.bf16.msra.mxu0 0
    %429 = vmatprep.mubr.bf16.mxu0 0
    %430 = vmatmul.mubr.bf16.gmra.mrb[0].mxu0 %v395
    %v431 = vpop.f32.mrb[0].mxu0
    %v432 = vadd.f32 %v392, %v431
    %v433 = vpop.f32.mrb[0].mxu0
    %v434 = vpop.f32.mrb[0].mxu0
    %v435 = vadd.f32 %v392, %v434
    %v436 = vpop.f32.mrb[0].mxu0
    %437 = vdwg.mxu0
    %v438 = vld [vmem:[#allocation13] sm:$0xff]
    %v439 = vld [vmem:[#allocation13 + $0x8] sm:$0xff]
    %v440 = vld [vmem:[#allocation13 + $0x10] sm:$0xff]
    %v441 = vld [vmem:[#allocation13 + $0x18] sm:$0xff]
    %v442 = vpack.c.bf16 %v435, %v432
    %444 = vrot.lane.b32.xlu0 %v442, 96
    %v445 = vpop.permute.xlu0 %444
    %vm446 = vcmask 64512
    %v448 = vsel %vm446, %v442, 0
    %v451 = vsel %vm446, %v445, 0
    %453 = vmatprep.subr.bf16.mxu0 0
    %454 = vmatpush1.bf16.xpose.msra.mxu0 %v451
    %455 = vmatprep.subr.bf16.mxu0 0
    %456 = vmatpush1.bf16.xpose.msra.mxu0 0
    %457 = vmatprep.subr.bf16.mxu0 0
    %458 = vmatpush1.bf16.xpose.msra.mxu0 0
    %459 = vmatprep.subr.bf16.mxu0 0
    %460 = vmatpush1.bf16.xpose.msra.mxu0 0
    %461 = vmatprep.subr.bf16.mxu0 0
    %462 = vmatpush1.bf16.xpose.msra.mxu0 0
    %463 = vmatprep.subr.bf16.mxu0 0
    %464 = vmatpush1.bf16.xpose.msra.mxu0 0
    %465 = vmatprep.subr.bf16.mxu0 0
    %466 = vmatpush1.bf16.xpose.msra.mxu0 0
    %467 = vmatprep.subr.bf16.mxu0 0
    %468 = vmatpush1.bf16.xpose.msra.mxu0 0
    %469 = vmatprep.subr.bf16.mxu0 0
    %470 = vmatpush1.bf16.xpose.msra.mxu0 0
    %471 = vmatprep.subr.bf16.mxu0 0
    %472 = vmatpush1.bf16.xpose.msra.mxu0 0
    %473 = vmatprep.subr.bf16.mxu0 0
    %474 = vmatpush1.bf16.xpose.msra.mxu0 0
    %475 = vmatprep.subr.bf16.mxu0 0
    %476 = vmatpush1.bf16.xpose.msra.mxu0 0
    %477 = vmatprep.subr.bf16.mxu0 0
    %478 = vmatpush1.bf16.xpose.msra.mxu0 0
    %479 = vmatprep.subr.bf16.mxu0 0
    %480 = vmatpush1.bf16.xpose.msra.mxu0 0
    %481 = vmatprep.subr.bf16.mxu0 0
    %482 = vmatpush1.bf16.xpose.msra.mxu0 0
    %483 = vmatprep.subr.bf16.mxu0 0
    %484 = vmatpush1.bf16.xpose.msra.mxu0 0
    %485 = vmatprep.mubr.bf16.mxu0 0
    %486 = vmatmul.mubr.bf16.gmra.mrb[0].mxu0 %v448
    %v487 = vpop.f32.mrb[0].mxu0
    %v488 = vadd.f32 0.0, %v487
    %v489 = vpop.f32.mrb[0].mxu0
    %v490 = vpop.f32.mrb[0].mxu0
    %v491 = vadd.f32 0.0, %v490
    %v492 = vpop.f32.mrb[0].mxu0
    %493 = vdwg.mxu0
    %v494 = vmul.f32 %v488, 0.35355338
    %v495 = vmul.f32 %v491, 0.35355338
    %v496 = vadd.f32 %v494, %v330
    %v497 = vadd.f32 %v495, %v331
    %vm498 = vcmask 130048
    %v499 = vsel %vm498, %v496, -inf
    %500 = vmax.xlane.f32.xlu0 %v499
    %v501 = vpop.xlane.xlu0 %500
    %v502 = vsel %vm498, %v497, -inf
    %503 = vmax.xlane.f32.xlu0 %v502
    %v504 = vpop.xlane.xlu0 %503
    %v505 = vsub.f32 %v496, %v501
    %v506 = vsub.f32 %v497, %v504
    %v507 = vmul.f32 %v505, 1.442695
    %v508 = vpow.pop %v507
    %v509 = vmul.f32 %v506, 1.442695
    %v510 = vpow.pop %v509
    %v511 = vsel %vm498, %v508, 0.0
    %512 = vadd.xlane.f32.xlu0 %v511
    %v513 = vpop.xlane.xlu0 %512
    %v514 = vsel %vm498, %v510, 0.0
    %515 = vadd.xlane.f32.xlu0 %v514
    %v516 = vpop.xlane.xlu0 %515
    %v517 = vrcp.pop %v513
    %v518 = vrcp.pop %v516
    %v519 = vmul.f32 %v508, %v517
    %v520 = vmul.f32 %v510, %v518
    %v521 = vpack.c.bf16 %v520, %v519
    %522 = vrot.lane.b32.xlu0 %v442, 64
    %v523 = vpop.permute.xlu0 %522
    %v526 = vsel %vm498, %v521, 0
    %528 = vmatprep.subr.bf16.mxu0 0
    %529 = vmatpush1.bf16.msra.mxu0 %v523
    %530 = vmatprep.subr.bf16.mxu0 0
    %531 = vmatpush1.bf16.msra.mxu0 0
    %532 = vmatprep.subr.bf16.mxu0 0
    %533 = vmatpush1.bf16.msra.mxu0 0
    %534 = vmatprep.subr.bf16.mxu0 0
    %535 = vmatpush1.bf16.msra.mxu0 0
    %536 = vmatprep.subr.bf16.mxu0 0
    %537 = vmatpush1.bf16.msra.mxu0 0
    %538 = vmatprep.subr.bf16.mxu0 0
    %539 = vmatpush1.bf16.msra.mxu0 0
    %540 = vmatprep.subr.bf16.mxu0 0
    %541 = vmatpush1.bf16.msra.mxu0 0
    %542 = vmatprep.subr.bf16.mxu0 0
    %543 = vmatpush1.bf16.msra.mxu0 0
    %544 = vmatprep.subr.bf16.mxu0 0
    %545 = vmatpush1.bf16.msra.mxu0 0
    %546 = vmatprep.subr.bf16.mxu0 0
    %547 = vmatpush1.bf16.msra.mxu0 0
    %548 = vmatprep.subr.bf16.mxu0 0
    %549 = vmatpush1.bf16.msra.mxu0 0
    %550 = vmatprep.subr.bf16.mxu0 0
    %551 = vmatpush1.bf16.msra.mxu0 0
    %552 = vmatprep.subr.bf16.mxu0 0
    %553 = vmatpush1.bf16.msra.mxu0 0
    %554 = vmatprep.subr.bf16.mxu0 0
    %555 = vmatpush1.bf16.msra.mxu0 0
    %556 = vmatprep.subr.bf16.mxu0 0
    %557 = vmatpush1.bf16.msra.mxu0 0
    %558 = vmatprep.subr.bf16.mxu0 0
    %559 = vmatpush1.bf16.msra.mxu0 0
    %560 = vmatprep.mubr.bf16.mxu0 0
    %561 = vmatmul.mubr.bf16.gmra.mrb[0].mxu0 %v526
    %v562 = vpop.f32.mrb[0].mxu0
    %v563 = vadd.f32 0.0, %v562
    %v564 = vpop.f32.mrb[0].mxu0
    %v565 = vpop.f32.mrb[0].mxu0
    %v566 = vadd.f32 0.0, %v565
    %v567 = vpop.f32.mrb[0].mxu0
    %568 = vdwg.mxu0
    %v569 = vpack.c.bf16 %v566, %v563
    %v570 = vpack.c.bf16 %v438, %v438
    %571 = vrot.lane.b32.xlu0 %v442, 120
    %v572 = vpop.permute.xlu0 %571
    %573 = vrot.lane.b32.xlu0 %v442, 88
    %v574 = vpop.permute.xlu0 %573
    %v576 = vsel %vm446, %v572, 0
    %v579 = vsel %vm446, %v574, 0
    %581 = vmatprep.subr.bf16.mxu0 0
    %582 = vmatpush1.bf16.xpose.msra.mxu0 %v579
    %583 = vmatprep.subr.bf16.mxu0 0
    %584 = vmatpush1.bf16.xpose.msra.mxu0 0
    %585 = vmatprep.subr.bf16.mxu0 0
    %586 = vmatpush1.bf16.xpose.msra.mxu0 0
    %587 = vmatprep.subr.bf16.mxu0 0
    %588 = vmatpush1.bf16.xpose.msra.mxu0 0
    %589 = vmatprep.subr.bf16.mxu0 0
    %590 = vmatpush1.bf16.xpose.msra.mxu0 0
    %591 = vmatprep.subr.bf16.mxu0 0
    %592 = vmatpush1.bf16.xpose.msra.mxu0 0
    %593 = vmatprep.subr.bf16.mxu0 0
    %594 = vmatpush1.bf16.xpose.msra.mxu0 0
    %595 = vmatprep.subr.bf16.mxu0 0
    %596 = vmatpush1.bf16.xpose.msra.mxu0 0
    %597 = vmatprep.subr.bf16.mxu0 0
    %598 = vmatpush1.bf16.xpose.msra.mxu0 0
    %599 = vmatprep.subr.bf16.mxu0 0
    %600 = vmatpush1.bf16.xpose.msra.mxu0 0
    %601 = vmatprep.subr.bf16.mxu0 0
    %602 = vmatpush1.bf16.xpose.msra.mxu0 0
    %603 = vmatprep.subr.bf16.mxu0 0
    %604 = vmatpush1.bf16.xpose.msra.mxu0 0
    %605 = vmatprep.subr.bf16.mxu0 0
    %606 = vmatpush1.bf16.xpose.msra.mxu0 0
    %607 = vmatprep.subr.bf16.mxu0 0
    %608 = vmatpush1.bf16.xpose.msra.mxu0 0
    %609 = vmatprep.subr.bf16.mxu0 0
    %610 = vmatpush1.bf16.xpose.msra.mxu0 0
    %611 = vmatprep.subr.bf16.mxu0 0
    %612 = vmatpush1.bf16.xpose.msra.mxu0 0
    %613 = vmatprep.mubr.bf16.mxu0 0
    %614 = vmatmul.mubr.bf16.gmra.mrb[0].mxu0 %v576
    %v615 = vpop.f32.mrb[0].mxu0
    %v616 = vadd.f32 0.0, %v615
    %v617 = vpop.f32.mrb[0].mxu0
    %v618 = vpop.f32.mrb[0].mxu0
    %v619 = vadd.f32 0.0, %v618
    %v620 = vpop.f32.mrb[0].mxu0
    %621 = vdwg.mxu0
    %v622 = vmul.f32 %v616, 0.35355338
    %v623 = vmul.f32 %v619, 0.35355338
    %v624 = vadd.f32 %v622, %v330
    %v625 = vadd.f32 %v623, %v331
    %v626 = vsel %vm498, %v624, -inf
    %627 = vmax.xlane.f32.xlu0 %v626
    %v628 = vpop.xlane.xlu0 %627
    %v629 = vsel %vm498, %v625, -inf
    %630 = vmax.xlane.f32.xlu0 %v629
    %v631 = vpop.xlane.xlu0 %630
    %v632 = vsub.f32 %v624, %v628
    %v633 = vsub.f32 %v625, %v631
    %v634 = vmul.f32 %v632, 1.442695
    %v635 = vpow.pop %v634
    %v636 = vmul.f32 %v633, 1.442695
    %v637 = vpow.pop %v636
    %v638 = vsel %vm498, %v635, 0.0
    %639 = vadd.xlane.f32.xlu0 %v638
    %v640 = vpop.xlane.xlu0 %639
    %v641 = vsel %vm498, %v637, 0.0
    %642 = vadd.xlane.f32.xlu0 %v641
    %v643 = vpop.xlane.xlu0 %642
    %v644 = vrcp.pop %v640
    %v645 = vrcp.pop %v643
    %v646 = vmul.f32 %v635, %v644
    %v647 = vmul.f32 %v637, %v645
    %v648 = vpack.c.bf16 %v647, %v646
    %649 = vrot.lane.b32.xlu0 %v442, 56
    %v650 = vpop.permute.xlu0 %649
    %v653 = vsel %vm498, %v648, 0
    %655 = vmatprep.subr.bf16.mxu0 0
    %656 = vmatpush1.bf16.msra.mxu0 %v650
    %657 = vmatprep.subr.bf16.mxu0 0
    %658 = vmatpush1.bf16.msra.mxu0 0
    %659 = vmatprep.subr.bf16.mxu0 0
    %660 = vmatpush1.bf16.msra.mxu0 0
    %661 = vmatprep.subr.bf16.mxu0 0
    %662 = vmatpush1.bf16.msra.mxu0 0
    %663 = vmatprep.subr.bf16.mxu0 0
    %664 = vmatpush1.bf16.msra.mxu0 0
    %665 = vmatprep.subr.bf16.mxu0 0
    %666 = vmatpush1.bf16.msra.mxu0 0
    %667 = vmatprep.subr.bf16.mxu0 0
    %668 = vmatpush1.bf16.msra.mxu0 0
    %669 = vmatprep.subr.bf16.mxu0 0
    %670 = vmatpush1.bf16.msra.mxu0 0
    %671 = vmatprep.subr.bf16.mxu0 0
    %672 = vmatpush1.bf16.msra.mxu0 0
    %673 = vmatprep.subr.bf16.mxu0 0
    %674 = vmatpush1.bf16.msra.mxu0 0
    %675 = vmatprep.subr.bf16.mxu0 0
    %676 = vmatpush1.bf16.msra.mxu0 0
    %677 = vmatprep.subr.bf16.mxu0 0
    %678 = vmatpush1.bf16.msra.mxu0 0
    %679 = vmatprep.subr.bf16.mxu0 0
    %680 = vmatpush1.bf16.msra.mxu0 0
    %681 = vmatprep.subr.bf16.mxu0 0
    %682 = vmatpush1.bf16.msra.mxu0 0
    %683 = vmatprep.subr.bf16.mxu0 0
    %684 = vmatpush1.bf16.msra.mxu0 0
    %685 = vmatprep.subr.bf16.mxu0 0
    %686 = vmatpush1.bf16.msra.mxu0 0
    %687 = vmatprep.mubr.bf16.mxu0 0
    %688 = vmatmul.mubr.bf16.gmra.mrb[0].mxu0 %v653
    %v689 = vpop.f32.mrb[0].mxu0
    %v690 = vadd.f32 0.0, %v689
    %v691 = vpop.f32.mrb[0].mxu0
    %v692 = vpop.f32.mrb[0].mxu0
    %v693 = vadd.f32 0.0, %v692
    %v694 = vpop.f32.mrb[0].mxu0
    %695 = vdwg.mxu0
    %v696 = vpack.c.bf16 %v693, %v690
    %v697 = vpack.c.bf16 %v439, %v439
    %v699 = vsel %vm446, %v696, 0
    %vm701 = vcmask 1043456
    %v703 = vsel %vm701, %v697, 0
    %705 = vmatprep.subr.bf16.mxu0 0
    %706 = vmatpush1.bf16.msra.mxu0 %v703
    %707 = vmatprep.subr.bf16.mxu0 0
    %708 = vmatpush1.bf16.msra.mxu0 0
    %709 = vmatprep.subr.bf16.mxu0 0
    %710 = vmatpush1.bf16.msra.mxu0 0
    %711 = vmatprep.subr.bf16.mxu0 0
    %712 = vmatpush1.bf16.msra.mxu0 0
    %713 = vmatprep.subr.bf16.mxu0 0
    %714 = vmatpush1.bf16.msra.mxu0 0
    %715 = vmatprep.subr.bf16.mxu0 0
    %716 = vmatpush1.bf16.msra.mxu0 0
    %717 = vmatprep.subr.bf16.mxu0 0
    %718 = vmatpush1.bf16.msra.mxu0 0
    %719 = vmatprep.subr.bf16.mxu0 0
    %720 = vmatpush1.bf16.msra.mxu0 0
    %721 = vmatprep.subr.bf16.mxu0 0
    %722 = vmatpush1.bf16.msra.mxu0 0
    %723 = vmatprep.subr.bf16.mxu0 0
    %724 = vmatpush1.bf16.msra.mxu0 0
    %725 = vmatprep.subr.bf16.mxu0 0
    %726 = vmatpush1.bf16.msra.mxu0 0
    %727 = vmatprep.subr.bf16.mxu0 0
    %728 = vmatpush1.bf16.msra.mxu0 0
    %729 = vmatprep.subr.bf16.mxu0 0
    %730 = vmatpush1.bf16.msra.mxu0 0
    %731 = vmatprep.subr.bf16.mxu0 0
    %732 = vmatpush1.bf16.msra.mxu0 0
    %733 = vmatprep.subr.bf16.mxu0 0
    %734 = vmatpush1.bf16.msra.mxu0 0
    %735 = vmatprep.subr.bf16.mxu0 0
    %736 = vmatpush1.bf16.msra.mxu0 0
    %737 = vmatprep.mubr.bf16.mxu0 0
    %738 = vmatmul.mubr.bf16.gmra.mrb[0].mxu0 %v699
    %v739 = vpop.f32.mrb[0].mxu0
    %v740 = vadd.f32 0.0, %v739
    %v741 = vpop.f32.mrb[0].mxu0
    %v742 = vpop.f32.mrb[0].mxu0
    %v743 = vadd.f32 0.0, %v742
    %v744 = vpop.f32.mrb[0].mxu0
    %745 = vdwg.mxu0
    %v747 = vsel %vm446, %v569, 0
    %v750 = vsel %vm701, %v570, 0
    %752 = vmatprep.subr.bf16.mxu0 0
    %753 = vmatpush1.bf16.msra.mxu0 %v750
    %754 = vmatprep.subr.bf16.mxu0 0
    %755 = vmatpush1.bf16.msra.mxu0 0
    %756 = vmatprep.subr.bf16.mxu0 0
    %757 = vmatpush1.bf16.msra.mxu0 0
    %758 = vmatprep.subr.bf16.mxu0 0
    %759 = vmatpush1.bf16.msra.mxu0 0
    %760 = vmatprep.subr.bf16.mxu0 0
    %761 = vmatpush1.bf16.msra.mxu0 0
    %762 = vmatprep.subr.bf16.mxu0 0
    %763 = vmatpush1.bf16.msra.mxu0 0
    %764 = vmatprep.subr.bf16.mxu0 0
    %765 = vmatpush1.bf16.msra.mxu0 0
    %766 = vmatprep.subr.bf16.mxu0 0
    %767 = vmatpush1.bf16.msra.mxu0 0
    %768 = vmatprep.subr.bf16.mxu0 0
    %769 = vmatpush1.bf16.msra.mxu0 0
    %770 = vmatprep.subr.bf16.mxu0 0
    %771 = vmatpush1.bf16.msra.mxu0 0
    %772 = vmatprep.subr.bf16.mxu0 0
    %773 = vmatpush1.bf16.msra.mxu0 0
    %774 = vmatprep.subr.bf16.mxu0 0
    %775 = vmatpush1.bf16.msra.mxu0 0
    %776 = vmatprep.subr.bf16.mxu0 0
    %777 = vmatpush1.bf16.msra.mxu0 0
    %778 = vmatprep.subr.bf16.mxu0 0
    %779 = vmatpush1.bf16.msra.mxu0 0
    %780 = vmatprep.subr.bf16.mxu0 0
    %781 = vmatpush1.bf16.msra.mxu0 0
    %782 = vmatprep.subr.bf16.mxu0 0
    %783 = vmatpush1.bf16.msra.mxu0 0
    %784 = vmatprep.mubr.bf16.mxu0 0
    %785 = vmatmul.mubr.bf16.gmra.mrb[0].mxu0 %v747
    %v786 = vpop.f32.mrb[0].mxu0
    %v787 = vadd.f32 %v740, %v786
    %v788 = vpop.f32.mrb[0].mxu0
    %v789 = vpop.f32.mrb[0].mxu0
    %v790 = vadd.f32 %v743, %v789
    %v791 = vpop.f32.mrb[0].mxu0
    %792 = vdwg.mxu0
    %793 = vrot.lane.b32.xlu0 %v442, 112
    %v794 = vpop.permute.xlu0 %793
    %795 = vrot.lane.b32.xlu0 %v442, 80
    %v796 = vpop.permute.xlu0 %795
    %v798 = vsel %vm446, %v794, 0
    %v801 = vsel %vm446, %v796, 0
    %803 = vmatprep.subr.bf16.mxu0 0
    %804 = vmatpush1.bf16.xpose.msra.mxu0 %v801
    %805 = vmatprep.subr.bf16.mxu0 0
    %806 = vmatpush1.bf16.xpose.msra.mxu0 0
    %807 = vmatprep.subr.bf16.mxu0 0
    %808 = vmatpush1.bf16.xpose.msra.mxu0 0
    %809 = vmatprep.subr.bf16.mxu0 0
    %810 = vmatpush1.bf16.xpose.msra.mxu0 0
    %811 = vmatprep.subr.bf16.mxu0 0
    %812 = vmatpush1.bf16.xpose.msra.mxu0 0
    %813 = vmatprep.subr.bf16.mxu0 0
    %814 = vmatpush1.bf16.xpose.msra.mxu0 0
    %815 = vmatprep.subr.bf16.mxu0 0
    %816 = vmatpush1.bf16.xpose.msra.mxu0 0
    %817 = vmatprep.subr.bf16.mxu0 0
    %818 = vmatpush1.bf16.xpose.msra.mxu0 0
    %819 = vmatprep.subr.bf16.mxu0 0
    %820 = vmatpush1.bf16.xpose.msra.mxu0 0
    %821 = vmatprep.subr.bf16.mxu0 0
    %822 = vmatpush1.bf16.xpose.msra.mxu0 0
    %823 = vmatprep.subr.bf16.mxu0 0
    %824 = vmatpush1.bf16.xpose.msra.mxu0 0
    %825 = vmatprep.subr.bf16.mxu0 0
    %826 = vmatpush1.bf16.xpose.msra.mxu0 0
    %827 = vmatprep.subr.bf16.mxu0 0
    %828 = vmatpush1.bf16.xpose.msra.mxu0 0
    %829 = vmatprep.subr.bf16.mxu0 0
    %830 = vmatpush1.bf16.xpose.msra.mxu0 0
    %831 = vmatprep.subr.bf16.mxu0 0
    %832 = vmatpush1.bf16.xpose.msra.mxu0 0
    %833 = vmatprep.subr.bf16.mxu0 0
    %834 = vmatpush1.bf16.xpose.msra.mxu0 0
    %835 = vmatprep.mubr.bf16.mxu0 0
    %836 = vmatmul.mubr.bf16.gmra.mrb[0].mxu0 %v798
    %v837 = vpop.f32.mrb[0].mxu0
    %v838 = vadd.f32 0.0, %v837
    %v839 = vpop.f32.mrb[0].mxu0
    %v840 = vpop.f32.mrb[0].mxu0
    %v841 = vadd.f32 0.0, %v840
    %v842 = vpop.f32.mrb[0].mxu0
    %843 = vdwg.mxu0
    %v844 = vmul.f32 %v838, 0.35355338
    %v845 = vmul.f32 %v841, 0.35355338
    %v846 = vadd.f32 %v844, %v330
    %v847 = vadd.f32 %v845, %v331
    %v848 = vsel %vm498, %v846, -inf
    %849 = vmax.xlane.f32.xlu0 %v848
    %v850 = vpop.xlane.xlu0 %849
    %v851 = vsel %vm498, %v847, -inf
    %852 = vmax.xlane.f32.xlu0 %v851
    %v853 = vpop.xlane.xlu0 %852
    %v854 = vsub.f32 %v846, %v850
    %v855 = vsub.f32 %v847, %v853
    %v856 = vmul.f32 %v854, 1.442695
    %v857 = vpow.pop %v856
    %v858 = vmul.f32 %v855, 1.442695
    %v859 = vpow.pop %v858
    %v860 = vsel %vm498, %v857, 0.0
    %861 = vadd.xlane.f32.xlu0 %v860
    %v862 = vpop.xlane.xlu0 %861
    %v863 = vsel %vm498, %v859, 0.0
    %864 = vadd.xlane.f32.xlu0 %v863
    %v865 = vpop.xlane.xlu0 %864
    %v866 = vrcp.pop %v862
    %v867 = vrcp.pop %v865
    %v868 = vmul.f32 %v857, %v866
    %v869 = vmul.f32 %v859, %v867
    %v870 = vpack.c.bf16 %v869, %v868
    %871 = vrot.lane.b32.xlu0 %v442, 48
    %v872 = vpop.permute.xlu0 %871
    %v875 = vsel %vm498, %v870, 0
    %877 = vmatprep.subr.bf16.mxu0 0
    %878 = vmatpush1.bf16.msra.mxu0 %v872
    %879 = vmatprep.subr.bf16.mxu0 0
    %880 = vmatpush1.bf16.msra.mxu0 0
    %881 = vmatprep.subr.bf16.mxu0 0
    %882 = vmatpush1.bf16.msra.mxu0 0
    %883 = vmatprep.subr.bf16.mxu0 0
    %884 = vmatpush1.bf16.msra.mxu0 0
    %885 = vmatprep.subr.bf16.mxu0 0
    %886 = vmatpush1.bf16.msra.mxu0 0
    %887 = vmatprep.subr.bf16.mxu0 0
    %888 = vmatpush1.bf16.msra.mxu0 0
    %889 = vmatprep.subr.bf16.mxu0 0
    %890 = vmatpush1.bf16.msra.mxu0 0
    %891 = vmatprep.subr.bf16.mxu0 0
    %892 = vmatpush1.bf16.msra.mxu0 0
    %893 = vmatprep.subr.bf16.mxu0 0
    %894 = vmatpush1.bf16.msra.mxu0 0
    %895 = vmatprep.subr.bf16.mxu0 0
    %896 = vmatpush1.bf16.msra.mxu0 0
    %897 = vmatprep.subr.bf16.mxu0 0
    %898 = vmatpush1.bf16.msra.mxu0 0
    %899 = vmatprep.subr.bf16.mxu0 0
    %900 = vmatpush1.bf16.msra.mxu0 0
    %901 = vmatprep.subr.bf16.mxu0 0
    %902 = vmatpush1.bf16.msra.mxu0 0
    %903 = vmatprep.subr.bf16.mxu0 0
    %904 = vmatpush1.bf16.msra.mxu0 0
    %905 = vmatprep.subr.bf16.mxu0 0
    %906 = vmatpush1.bf16.msra.mxu0 0
    %907 = vmatprep.subr.bf16.mxu0 0
    %908 = vmatpush1.bf16.msra.mxu0 0
    %909 = vmatprep.mubr.bf16.mxu0 0
    %910 = vmatmul.mubr.bf16.gmra.mrb[0].mxu0 %v875
    %v911 = vpop.f32.mrb[0].mxu0
    %v912 = vadd.f32 0.0, %v911
    %v913 = vpop.f32.mrb[0].mxu0
    %v914 = vpop.f32.mrb[0].mxu0
    %v915 = vadd.f32 0.0, %v914
    %v916 = vpop.f32.mrb[0].mxu0
    %917 = vdwg.mxu0
    %v918 = vpack.c.bf16 %v915, %v912
    %v919 = vpack.c.bf16 %v440, %v440
    %v921 = vsel %vm446, %v918, 0
    %v924 = vsel %vm701, %v919, 0
    %926 = vmatprep.subr.bf16.mxu0 0
    %927 = vmatpush1.bf16.msra.mxu0 %v924
    %928 = vmatprep.subr.bf16.mxu0 0
    %929 = vmatpush1.bf16.msra.mxu0 0
    %930 = vmatprep.subr.bf16.mxu0 0
    %931 = vmatpush1.bf16.msra.mxu0 0
    %932 = vmatprep.subr.bf16.mxu0 0
    %933 = vmatpush1.bf16.msra.mxu0 0
    %934 = vmatprep.subr.bf16.mxu0 0
    %935 = vmatpush1.bf16.msra.mxu0 0
    %936 = vmatprep.subr.bf16.mxu0 0
    %937 = vmatpush1.bf16.msra.mxu0 0
    %938 = vmatprep.subr.bf16.mxu0 0
    %939 = vmatpush1.bf16.msra.mxu0 0
    %940 = vmatprep.subr.bf16.mxu0 0
    %941 = vmatpush1.bf16.msra.mxu0 0
    %942 = vmatprep.subr.bf16.mxu0 0
    %943 = vmatpush1.bf16.msra.mxu0 0
    %944 = vmatprep.subr.bf16.mxu0 0
    %945 = vmatpush1.bf16.msra.mxu0 0
    %946 = vmatprep.subr.bf16.mxu0 0
    %947 = vmatpush1.bf16.msra.mxu0 0
    %948 = vmatprep.subr.bf16.mxu0 0
    %949 = vmatpush1.bf16.msra.mxu0 0
    %950 = vmatprep.subr.bf16.mxu0 0
    %951 = vmatpush1.bf16.msra.mxu0 0
    %952 = vmatprep.subr.bf16.mxu0 0
    %953 = vmatpush1.bf16.msra.mxu0 0
    %954 = vmatprep.subr.bf16.mxu0 0
    %955 = vmatpush1.bf16.msra.mxu0 0
    %956 = vmatprep.subr.bf16.mxu0 0
    %957 = vmatpush1.bf16.msra.mxu0 0
    %958 = vmatprep.mubr.bf16.mxu0 0
    %959 = vmatmul.mubr.bf16.gmra.mrb[0].mxu0 %v921
    %v960 = vpop.f32.mrb[0].mxu0
    %v961 = vadd.f32 0.0, %v960
    %v962 = vpop.f32.mrb[0].mxu0
    %v963 = vpop.f32.mrb[0].mxu0
    %v964 = vadd.f32 0.0, %v963
    %v965 = vpop.f32.mrb[0].mxu0
    %966 = vdwg.mxu0
    %v967 = vadd.f32 %v787, %v961
    %v968 = vadd.f32 %v790, %v964
    %969 = vrot.lane.b32.xlu0 %v442, 104
    %v970 = vpop.permute.xlu0 %969
    %971 = vrot.lane.b32.xlu0 %v442, 72
    %v972 = vpop.permute.xlu0 %971
    %v974 = vsel %vm446, %v970, 0
    %v977 = vsel %vm446, %v972, 0
    %979 = vmatprep.subr.bf16.mxu0 0
    %980 = vmatpush1.bf16.xpose.msra.mxu0 %v977
    %981 = vmatprep.subr.bf16.mxu0 0
    %982 = vmatpush1.bf16.xpose.msra.mxu0 0
    %983 = vmatprep.subr.bf16.mxu0 0
    %984 = vmatpush1.bf16.xpose.msra.mxu0 0
    %985 = vmatprep.subr.bf16.mxu0 0
    %986 = vmatpush1.bf16.xpose.msra.mxu0 0
    %987 = vmatprep.subr.bf16.mxu0 0
    %988 = vmatpush1.bf16.xpose.msra.mxu0 0
    %989 = vmatprep.subr.bf16.mxu0 0
    %990 = vmatpush1.bf16.xpose.msra.mxu0 0
    %991 = vmatprep.subr.bf16.mxu0 0
    %992 = vmatpush1.bf16.xpose.msra.mxu0 0
    %993 = vmatprep.subr.bf16.mxu0 0
    %994 = vmatpush1.bf16.xpose.msra.mxu0 0
    %995 = vmatprep.subr.bf16.mxu0 0
    %996 = vmatpush1.bf16.xpose.msra.mxu0 0
    %997 = vmatprep.subr.bf16.mxu0 0
    %998 = vmatpush1.bf16.xpose.msra.mxu0 0
    %999 = vmatprep.subr.bf16.mxu0 0
    %1000 = vmatpush1.bf16.xpose.msra.mxu0 0
    %1001 = vmatprep.subr.bf16.mxu0 0
    %1002 = vmatpush1.bf16.xpose.msra.mxu0 0
    %1003 = vmatprep.subr.bf16.mxu0 0
    %1004 = vmatpush1.bf16.xpose.msra.mxu0 0
    %1005 = vmatprep.subr.bf16.mxu0 0
    %1006 = vmatpush1.bf16.xpose.msra.mxu0 0
    %1007 = vmatprep.subr.bf16.mxu0 0
    %1008 = vmatpush1.bf16.xpose.msra.mxu0 0
    %1009 = vmatprep.subr.bf16.mxu0 0
    %1010 = vmatpush1.bf16.xpose.msra.mxu0 0
    %1011 = vmatprep.mubr.bf16.mxu0 0
    %1012 = vmatmul.mubr.bf16.gmra.mrb[0].mxu0 %v974
    %v1013 = vpop.f32.mrb[0].mxu0
    %v1014 = vadd.f32 0.0, %v1013
    %v1015 = vpop.f32.mrb[0].mxu0
    %v1016 = vpop.f32.mrb[0].mxu0
    %v1017 = vadd.f32 0.0, %v1016
    %v1018 = vpop.f32.mrb[0].mxu0
    %1019 = vdwg.mxu0
    %v1020 = vmul.f32 %v1014, 0.35355338
    %v1021 = vmul.f32 %v1017, 0.35355338
    %v1022 = vadd.f32 %v1020, %v330
    %v1023 = vadd.f32 %v1021, %v331
    %v1024 = vsel %vm498, %v1022, -inf
    %1025 = vmax.xlane.f32.xlu0 %v1024
    %v1026 = vpop.xlane.xlu0 %1025
    %v1027 = vsel %vm498, %v1023, -inf
    %1028 = vmax.xlane.f32.xlu0 %v1027
    %v1029 = vpop.xlane.xlu0 %1028
    %v1030 = vsub.f32 %v1022, %v1026
    %v1031 = vsub.f32 %v1023, %v1029
    %v1032 = vmul.f32 %v1030, 1.442695
    %v1033 = vpow.pop %v1032
    %v1034 = vmul.f32 %v1031, 1.442695
    %v1035 = vpow.pop %v1034
    %v1036 = vsel %vm498, %v1033, 0.0
    %1037 = vadd.xlane.f32.xlu0 %v1036
    %v1038 = vpop.xlane.xlu0 %1037
    %v1039 = vsel %vm498, %v1035, 0.0
    %1040 = vadd.xlane.f32.xlu0 %v1039
    %v1041 = vpop.xlane.xlu0 %1040
    %v1042 = vrcp.pop %v1038
    %v1043 = vrcp.pop %v1041
    %v1044 = vmul.f32 %v1033, %v1042
    %v1045 = vmul.f32 %v1035, %v1043
    %v1046 = vpack.c.bf16 %v1045, %v1044
    %1047 = vrot.lane.b32.xlu0 %v442, 40
    %v1048 = vpop.permute.xlu0 %1047
    %v1051 = vsel %vm498, %v1046, 0
    %1053 = vmatprep.subr.bf16.mxu0 0
    %1054 = vmatpush1.bf16.msra.mxu0 %v1048
    %1055 = vmatprep.subr.bf16.mxu0 0
    %1056 = vmatpush1.bf16.msra.mxu0 0
    %1057 = vmatprep.subr.bf16.mxu0 0
    %1058 = vmatpush1.bf16.msra.mxu0 0
    %1059 = vmatprep.subr.bf16.mxu0 0
    %1060 = vmatpush1.bf16.msra.mxu0 0
    %1061 = vmatprep.subr.bf16.mxu0 0
    %1062 = vmatpush1.bf16.msra.mxu0 0
    %1063 = vmatprep.subr.bf16.mxu0 0
    %1064 = vmatpush1.bf16.msra.mxu0 0
    %1065 = vmatprep.subr.bf16.mxu0 0
    %1066 = vmatpush1.bf16.msra.mxu0 0
    %1067 = vmatprep.subr.bf16.mxu0 0
    %1068 = vmatpush1.bf16.msra.mxu0 0
    %1069 = vmatprep.subr.bf16.mxu0 0
    %1070 = vmatpush1.bf16.msra.mxu0 0
    %1071 = vmatprep.subr.bf16.mxu0 0
    %1072 = vmatpush1.bf16.msra.mxu0 0
    %1073 = vmatprep.subr.bf16.mxu0 0
    %1074 = vmatpush1.bf16.msra.mxu0 0
    %1075 = vmatprep.subr.bf16.mxu0 0
    %1076 = vmatpush1.bf16.msra.mxu0 0
    %1077 = vmatprep.subr.bf16.mxu0 0
    %1078 = vmatpush1.bf16.msra.mxu0 0
    %1079 = vmatprep.subr.bf16.mxu0 0
    %1080 = vmatpush1.bf16.msra.mxu0 0
    %1081 = vmatprep.subr.bf16.mxu0 0
    %1082 = vmatpush1.bf16.msra.mxu0 0
    %1083 = vmatprep.subr.bf16.mxu0 0
    %1084 = vmatpush1.bf16.msra.mxu0 0
    %1085 = vmatprep.mubr.bf16.mxu0 0
    %1086 = vmatmul.mubr.bf16.gmra.mrb[0].mxu0 %v1051
    %v1087 = vpop.f32.mrb[0].mxu0
    %v1088 = vadd.f32 0.0, %v1087
    %v1089 = vpop.f32.mrb[0].mxu0
    %v1090 = vpop.f32.mrb[0].mxu0
    %v1091 = vadd.f32 0.0, %v1090
    %v1092 = vpop.f32.mrb[0].mxu0
    %1093 = vdwg.mxu0
    %v1094 = vpack.c.bf16 %v1091, %v1088
    %v1095 = vpack.c.bf16 %v441, %v441
    %v1097 = vsel %vm446, %v1094, 0
    %v1100 = vsel %vm701, %v1095, 0
    %1102 = vmatprep.subr.bf16.mxu0 0
    %1103 = vmatpush1.bf16.msra.mxu0 %v1100
    %1104 = vmatprep.subr.bf16.mxu0 0
    %1105 = vmatpush1.bf16.msra.mxu0 0
    %1106 = vmatprep.subr.bf16.mxu0 0
    %1107 = vmatpush1.bf16.msra.mxu0 0
    %1108 = vmatprep.subr.bf16.mxu0 0
    %1109 = vmatpush1.bf16.msra.mxu0 0
    %1110 = vmatprep.subr.bf16.mxu0 0
    %1111 = vmatpush1.bf16.msra.mxu0 0
    %1112 = vmatprep.subr.bf16.mxu0 0
    %1113 = vmatpush1.bf16.msra.mxu0 0
    %1114 = vmatprep.subr.bf16.mxu0 0
    %1115 = vmatpush1.bf16.msra.mxu0 0
    %1116 = vmatprep.subr.bf16.mxu0 0
    %1117 = vmatpush1.bf16.msra.mxu0 0
    %1118 = vmatprep.subr.bf16.mxu0 0
    %1119 = vmatpush1.bf16.msra.mxu0 0
    %1120 = vmatprep.subr.bf16.mxu0 0
    %1121 = vmatpush1.bf16.msra.mxu0 0
    %1122 = vmatprep.subr.bf16.mxu0 0
    %1123 = vmatpush1.bf16.msra.mxu0 0
    %1124 = vmatprep.subr.bf16.mxu0 0
    %1125 = vmatpush1.bf16.msra.mxu0 0
    %1126 = vmatprep.subr.bf16.mxu0 0
    %1127 = vmatpush1.bf16.msra.mxu0 0
    %1128 = vmatprep.subr.bf16.mxu0 0
    %1129 = vmatpush1.bf16.msra.mxu0 0
    %1130 = vmatprep.subr.bf16.mxu0 0
    %1131 = vmatpush1.bf16.msra.mxu0 0
    %1132 = vmatprep.subr.bf16.mxu0 0
    %1133 = vmatpush1.bf16.msra.mxu0 0
    %1134 = vmatprep.mubr.bf16.mxu0 0
    %1135 = vmatmul.mubr.bf16.gmra.mrb[0].mxu0 %v1097
    %v1136 = vpop.f32.mrb[0].mxu0
    %v1137 = vadd.f32 0.0, %v1136
    %v1138 = vpop.f32.mrb[0].mxu0
    %v1139 = vpop.f32.mrb[0].mxu0
    %v1140 = vadd.f32 0.0, %v1139
    %v1141 = vpop.f32.mrb[0].mxu0
    %1142 = vdwg.mxu0
    %v1143 = vadd.f32 %v967, %v1137
    %v1144 = vadd.f32 %v968, %v1140
    %v1145 = vld [vmem:[#allocation14] sm:$0x1]
    %v1147 = vlaneseq
    %v1148 = vshrl.u32 %v1147, 7
    %v1149 = vsub.s32 0, %v1148
    %v1150 = vrot.slane %v1145, %v1149
    %v1152 = vadd.f32 %v1143, %v1150
    %v1153 = vadd.f32 %v1144, %v1150
    %v1154 = vadd.f32 %v1152, %v378
    %v1155 = vadd.f32 %v1153, %v379
    %v1156 = vld [vmem:[#allocation16] sm:$0x1]
    %v1157 = vld [vmem:[#allocation17] sm:$0x1]
    %v1158 = vsel %vm336, %v1154, 0.0
    %1159 = vadd.xlane.f32.xlu0 %v1158
    %v1160 = vpop.xlane.xlu0 %1159
    %v1161 = vsel %vm336, %v1155, 0.0
    %1162 = vadd.xlane.f32.xlu0 %v1161
    %v1163 = vpop.xlane.xlu0 %1162
    %v1164 = vmul.f32 %v1160, %v343
    %v1165 = vmul.f32 %v1163, %v343
    %v1166 = vsub.f32 %v1154, %v1164
    %v1167 = vsub.f32 %v1155, %v1165
    %v1168 = vmul.f32 %v1166, %v1166
    %v1169 = vmul.f32 %v1167, %v1167
    %v1170 = vsel %vm336, %v1168, 0.0
    %1171 = vadd.xlane.f32.xlu0 %v1170
    %v1172 = vpop.xlane.xlu0 %1171
    %v1173 = vsel %vm336, %v1169, 0.0
    %1174 = vadd.xlane.f32.xlu0 %v1173
    %v1175 = vpop.xlane.xlu0 %1174
    %v1176 = vmul.f32 %v1172, %v343
    %v1177 = vmul.f32 %v1175, %v343
    %v1178 = vadd.f32 %v1176, 1e-12
    %v1179 = vadd.f32 %v1177, 1e-12
    %v1180 = vrsqrt.pop %v1178
    %v1181 = vrsqrt.pop %v1179
    %v1182 = vmul.f32 %v1166, %v1180
    %v1183 = vmul.f32 %v1167, %v1181
    %v1185 = vlaneseq
    %v1186 = vshrl.u32 %v1185, 7
    %v1187 = vsub.s32 0, %v1186
    %v1188 = vrot.slane %v1156, %v1187
    %v1190 = vmul.f32 %v1182, %v1188
    %v1191 = vmul.f32 %v1183, %v1188
    %v1193 = vlaneseq
    %v1194 = vshrl.u32 %v1193, 7
    %v1195 = vsub.s32 0, %v1194
    %v1196 = vrot.slane %v1157, %v1195
    %v1198 = vadd.f32 %v1190, %v1196
    %v1199 = vadd.f32 %v1191, %v1196
    %v1200 = vld [vmem:[#allocation19] sm:$0xff]
    %v1201 = vld [vmem:[#allocation19 + $0x8] sm:$0xff]
    %v1202 = vld [vmem:[#allocation19 + $0x10] sm:$0xff]
    %v1203 = vld [vmem:[#allocation19 + $0x18] sm:$0xff]
    %v1204 = vpack.c.bf16 %v1199, %v1198
    %v1205 = vpack.c.bf16 %v1201, %v1200
    %v1206 = vpack.c.bf16 %v1203, %v1202
    %v1207 = vld [vmem:[#allocation20] sm:$0x1]
    %v1209 = vlaneseq
    %v1210 = vshrl.u32 %v1209, 7
    %v1211 = vsub.s32 0, %v1210
    %v1212 = vrot.slane %v1207, %v1211
    %v1215 = vsel %vm336, %v1204, 0
    %1217 = vmatprep.subr.bf16.mxu0 0
    %1218 = vmatpush1.bf16.msra.mxu0 %v1205
    %1219 = vmatprep.subr.bf16.mxu0 0
    %1220 = vmatpush1.bf16.msra.mxu0 %v1206
    %1221 = vmatprep.subr.bf16.mxu0 0
    %1222 = vmatpush1.bf16.msra.mxu0 0
    %1223 = vmatprep.subr.bf16.mxu0 0
    %1224 = vmatpush1.bf16.msra.mxu0 0
    %1225 = vmatprep.subr.bf16.mxu0 0
    %1226 = vmatpush1.bf16.msra.mxu0 0
    %1227 = vmatprep.subr.bf16.mxu0 0
    %1228 = vmatpush1.bf16.msra.mxu0 0
    %1229 = vmatprep.subr.bf16.mxu0 0
    %1230 = vmatpush1.bf16.msra.mxu0 0
    %1231 = vmatprep.subr.bf16.mxu0 0
    %1232 = vmatpush1.bf16.msra.mxu0 0
    %1233 = vmatprep.subr.bf16.mxu0 0
    %1234 = vmatpush1.bf16.msra.mxu0 0
    %1235 = vmatprep.subr.bf16.mxu0 0
    %1236 = vmatpush1.bf16.msra.mxu0 0
    %1237 = vmatprep.subr.bf16.mxu0 0
    %1238 = vmatpush1.bf16.msra.mxu0 0
    %1239 = vmatprep.subr.bf16.mxu0 0
    %1240 = vmatpush1.bf16.msra.mxu0 0
    %1241 = vmatprep.subr.bf16.mxu0 0
    %1242 = vmatpush1.bf16.msra.mxu0 0
    %1243 = vmatprep.subr.bf16.mxu0 0
    %1244 = vmatpush1.bf16.msra.mxu0 0
    %1245 = vmatprep.subr.bf16.mxu0 0
    %1246 = vmatpush1.bf16.msra.mxu0 0
    %1247 = vmatprep.subr.bf16.mxu0 0
    %1248 = vmatpush1.bf16.msra.mxu0 0
    %1249 = vmatprep.mubr.bf16.mxu0 0
    %1250 = vmatmul.mubr.bf16.gmra.mrb[0].mxu0 %v1215
    %v1251 = vpop.f32.mrb[0].mxu0
    %v1252 = vadd.f32 %v1212, %v1251
    %v1253 = vpop.f32.mrb[0].mxu0
    %v1254 = vpop.f32.mrb[0].mxu0
    %v1255 = vadd.f32 %v1212, %v1254
    %v1256 = vpop.f32.mrb[0].mxu0
    %1257 = vdwg.mxu0
    %v1258 = vmul.f32 %v1252, 0.5
    %v1259 = vmul.f32 %v1255, 0.5
    %v1260 = vmul.f32 %v1252, 0.70710677
    %v1261 = vmul.f32 %v1255, 0.70710677
    %v1262 = verf.f32.pop %v1260
    %v1263 = verf.f32.pop %v1261
    %v1264 = vadd.f32 %v1262, 1.0
    %v1265 = vadd.f32 %v1263, 1.0
    %v1266 = vmul.f32 %v1258, %v1264
    %v1267 = vmul.f32 %v1259, %v1265
    %v1268 = vld [vmem:[#allocation22] sm:$0xff]
    %v1269 = vld [vmem:[#allocation22 + $0x8] sm:$0xff]
    %v1270 = vld [vmem:[#allocation22 + $0x10] sm:$0xff]
    %v1271 = vld [vmem:[#allocation22 + $0x18] sm:$0xff]
    %v1272 = vld [vmem:[#allocation22 + $0x20] sm:$0xff]
    %v1273 = vld [vmem:[#allocation22 + $0x28] sm:$0xff]
    %v1274 = vld [vmem:[#allocation22 + $0x30] sm:$0xff]
    %v1275 = vld [vmem:[#allocation22 + $0x38] sm:$0xff]
    %v1276 = vpack.c.bf16 %v1267, %v1266
    %v1277 = vpack.c.bf16 %v1269, %v1268
    %v1278 = vpack.c.bf16 %v1271, %v1270
    %v1279 = vpack.c.bf16 %v1273, %v1272
    %v1280 = vpack.c.bf16 %v1275, %v1274
    %v1281 = vld [vmem:[#allocation23] sm:$0x1]
    %v1283 = vlaneseq
    %v1284 = vshrl.u32 %v1283, 7
    %v1285 = vsub.s32 0, %v1284
    %v1286 = vrot.slane %v1281, %v1285
    %vm1288 = vcmask 523264
    %v1290 = vsel %vm1288, %v1276, 0
    %1292 = vmatprep.subr.bf16.mxu0 0
    %1293 = vmatpush1.bf16.msra.mxu0 %v1277
    %1294 = vmatprep.subr.bf16.mxu0 0
    %1295 = vmatpush1.bf16.msra.mxu0 %v1278
    %1296 = vmatprep.subr.bf16.mxu0 0
    %1297 = vmatpush1.bf16.msra.mxu0 %v1279
    %1298 = vmatprep.subr.bf16.mxu0 0
    %1299 = vmatpush1.bf16.msra.mxu0 %v1280
    %1300 = vmatprep.subr.bf16.mxu0 0
    %1301 = vmatpush1.bf16.msra.mxu0 0
    %1302 = vmatprep.subr.bf16.mxu0 0
    %1303 = vmatpush1.bf16.msra.mxu0 0
    %1304 = vmatprep.subr.bf16.mxu0 0
    %1305 = vmatpush1.bf16.msra.mxu0 0
    %1306 = vmatprep.subr.bf16.mxu0 0
    %1307 = vmatpush1.bf16.msra.mxu0 0
    %1308 = vmatprep.subr.bf16.mxu0 0
    %1309 = vmatpush1.bf16.msra.mxu0 0
    %1310 = vmatprep.subr.bf16.mxu0 0
    %1311 = vmatpush1.bf16.msra.mxu0 0
    %1312 = vmatprep.subr.bf16.mxu0 0
    %1313 = vmatpush1.bf16.msra.mxu0 0
    %1314 = vmatprep.subr.bf16.mxu0 0
    %1315 = vmatpush1.bf16.msra.mxu0 0
    %1316 = vmatprep.subr.bf16.mxu0 0
    %1317 = vmatpush1.bf16.msra.mxu0 0
    %1318 = vmatprep.subr.bf16.mxu0 0
    %1319 = vmatpush1.bf16.msra.mxu0 0
    %1320 = vmatprep.subr.bf16.mxu0 0
    %1321 = vmatpush1.bf16.msra.mxu0 0
    %1322 = vmatprep.subr.bf16.mxu0 0
    %1323 = vmatpush1.bf16.msra.mxu0 0
    %1324 = vmatprep.mubr.bf16.mxu0 0
    %1325 = vmatmul.mubr.bf16.gmra.mrb[0].mxu0 %v1290
    %v1326 = vpop.f32.mrb[0].mxu0
    %v1327 = vadd.f32 %v1286, %v1326
    %v1328 = vpop.f32.mrb[0].mxu0
    %v1329 = vpop.f32.mrb[0].mxu0
    %v1330 = vadd.f32 %v1286, %v1329
    %v1331 = vpop.f32.mrb[0].mxu0
    %1332 = vdwg.mxu0
    %v1333 = vadd.f32 %v1327, %v1198
    %v1334 = vadd.f32 %v1330, %v1199
    %v1335 = vld [vmem:[#allocation25] sm:$0x1]
    %v1336 = vld [vmem:[#allocation26] sm:$0x1]
    %v1337 = vsel %vm336, %v1333, 0.0
    %1338 = vadd.xlane.f32.xlu0 %v1337
    %v1339 = vpop.xlane.xlu0 %1338
    %v1340 = vsel %vm336, %v1334, 0.0
    %1341 = vadd.xlane.f32.xlu0 %v1340
    %v1342 = vpop.xlane.xlu0 %1341
    %v1343 = vmul.f32 %v1339, %v343
    %v1344 = vmul.f32 %v1342, %v343
    %v1345 = vsub.f32 %v1333, %v1343
    %v1346 = vsub.f32 %v1334, %v1344
    %v1347 = vmul.f32 %v1345, %v1345
    %v1348 = vmul.f32 %v1346, %v1346
    %v1349 = vsel %vm336, %v1347, 0.0
    %1350 = vadd.xlane.f32.xlu0 %v1349
    %v1351 = vpop.xlane.xlu0 %1350
    %v1352 = vsel %vm336, %v1348, 0.0
    %1353 = vadd.xlane.f32.xlu0 %v1352
    %v1354 = vpop.xlane.xlu0 %1353
    %v1355 = vmul.f32 %v1351, %v343
    %v1356 = vmul.f32 %v1354, %v343
    %v1357 = vadd.f32 %v1355, 1e-12
    %v1358 = vadd.f32 %v1356, 1e-12
    %v1359 = vrsqrt.pop %v1357
    %v1360 = vrsqrt.pop %v1358
    %v1361 = vmul.f32 %v1345, %v1359
    %v1362 = vmul.f32 %v1346, %v1360
    %v1364 = vlaneseq
    %v1365 = vshrl.u32 %v1364, 7
    %v1366 = vsub.s32 0, %v1365
    %v1367 = vrot.slane %v1335, %v1366
    %v1369 = vmul.f32 %v1361, %v1367
    %v1370 = vmul.f32 %v1362, %v1367
    %v1372 = vlaneseq
    %v1373 = vshrl.u32 %v1372, 7
    %v1374 = vsub.s32 0, %v1373
    %v1375 = vrot.slane %v1336, %v1374
    %v1377 = vadd.f32 %v1369, %v1375
    %v1378 = vadd.f32 %v1370, %v1375
    %s1379 = scalar_lea.vmem [#allocation10], 32
    %v1380 = vld [vmem:[%s1379] sm:$0xff]
    %v1381 = vld [vmem:[%s1379 + $0x8] sm:$0xff]
    %v1382 = vld [vmem:[%s1379 + $0x10] sm:$0xff]
    %v1383 = vld [vmem:[%s1379 + $0x18] sm:$0xff]
    %v1384 = vpack.c.bf16 %v1378, %v1377
    %v1385 = vpack.c.bf16 %v1381, %v1380
    %v1386 = vpack.c.bf16 %v1383, %v1382
    %s1387 = scalar_lea.vmem [#allocation11], 1
    %v1388 = vld [vmem:[%s1387] sm:$0x1]
    %v1390 = vlaneseq
    %v1391 = vshrl.u32 %v1390, 7
    %v1392 = vsub.s32 0, %v1391
    %v1393 = vrot.slane %v1388, %v1392
    %v1396 = vsel %vm336, %v1384, 0
    %1398 = vmatprep.subr.bf16.mxu0 0
    %1399 = vmatpush1.bf16.msra.mxu0 %v1385
    %1400 = vmatprep.subr.bf16.mxu0 0
    %1401 = vmatpush1.bf16.msra.mxu0 %v1386
    %1402 = vmatprep.subr.bf16.mxu0 0
    %1403 = vmatpush1.bf16.msra.mxu0 0
    %1404 = vmatprep.subr.bf16.mxu0 0
    %1405 = vmatpush1.bf16.msra.mxu0 0
    %1406 = vmatprep.subr.bf16.mxu0 0
    %1407 = vmatpush1.bf16.msra.mxu0 0
    %1408 = vmatprep.subr.bf16.mxu0 0
    %1409 = vmatpush1.bf16.msra.mxu0 0
    %1410 = vmatprep.subr.bf16.mxu0 0
    %1411 = vmatpush1.bf16.msra.mxu0 0
    %1412 = vmatprep.subr.bf16.mxu0 0
    %1413 = vmatpush1.bf16.msra.mxu0 0
    %1414 = vmatprep.subr.bf16.mxu0 0
    %1415 = vmatpush1.bf16.msra.mxu0 0
    %1416 = vmatprep.subr.bf16.mxu0 0
    %1417 = vmatpush1.bf16.msra.mxu0 0
    %1418 = vmatprep.subr.bf16.mxu0 0
    %1419 = vmatpush1.bf16.msra.mxu0 0
    %1420 = vmatprep.subr.bf16.mxu0 0
    %1421 = vmatpush1.bf16.msra.mxu0 0
    %1422 = vmatprep.subr.bf16.mxu0 0
    %1423 = vmatpush1.bf16.msra.mxu0 0
    %1424 = vmatprep.subr.bf16.mxu0 0
    %1425 = vmatpush1.bf16.msra.mxu0 0
    %1426 = vmatprep.subr.bf16.mxu0 0
    %1427 = vmatpush1.bf16.msra.mxu0 0
    %1428 = vmatprep.subr.bf16.mxu0 0
    %1429 = vmatpush1.bf16.msra.mxu0 0
    %1430 = vmatprep.mubr.bf16.mxu0 0
    %1431 = vmatmul.mubr.bf16.gmra.mrb[0].mxu0 %v1396
    %v1432 = vpop.f32.mrb[0].mxu0
    %v1433 = vadd.f32 %v1393, %v1432
    %v1434 = vpop.f32.mrb[0].mxu0
    %v1435 = vpop.f32.mrb[0].mxu0
    %v1436 = vadd.f32 %v1393, %v1435
    %v1437 = vpop.f32.mrb[0].mxu0
    %1438 = vdwg.mxu0
    %s1439 = scalar_lea.vmem [#allocation13], 32
    %v1440 = vld [vmem:[%s1439] sm:$0xff]
    %v1441 = vld [vmem:[%s1439 + $0x8] sm:$0xff]
    %v1442 = vld [vmem:[%s1439 + $0x10] sm:$0xff]
    %v1443 = vld [vmem:[%s1439 + $0x18] sm:$0xff]
    %v1444 = vpack.c.bf16 %v1436, %v1433
    %1446 = vrot.lane.b32.xlu0 %v1444, 96
    %v1447 = vpop.permute.xlu0 %1446
    %v1449 = vsel %vm446, %v1444, 0
    %v1452 = vsel %vm446, %v1447, 0
    %1454 = vmatprep.subr.bf16.mxu0 0
    %1455 = vmatpush1.bf16.xpose.msra.mxu0 %v1452
    %1456 = vmatprep.subr.bf16.mxu0 0
    %1457 = vmatpush1.bf16.xpose.msra.mxu0 0
    %1458 = vmatprep.subr.bf16.mxu0 0
    %1459 = vmatpush1.bf16.xpose.msra.mxu0 0
    %1460 = vmatprep.subr.bf16.mxu0 0
    %1461 = vmatpush1.bf16.xpose.msra.mxu0 0
    %1462 = vmatprep.subr.bf16.mxu0 0
    %1463 = vmatpush1.bf16.xpose.msra.mxu0 0
    %1464 = vmatprep.subr.bf16.mxu0 0
    %1465 = vmatpush1.bf16.xpose.msra.mxu0 0
    %1466 = vmatprep.subr.bf16.mxu0 0
    %1467 = vmatpush1.bf16.xpose.msra.mxu0 0
    %1468 = vmatprep.subr.bf16.mxu0 0
    %1469 = vmatpush1.bf16.xpose.msra.mxu0 0
    %1470 = vmatprep.subr.bf16.mxu0 0
    %1471 = vmatpush1.bf16.xpose.msra.mxu0 0
    %1472 = vmatprep.subr.bf16.mxu0 0
    %1473 = vmatpush1.bf16.xpose.msra.mxu0 0
    %1474 = vmatprep.subr.bf16.mxu0 0
    %1475 = vmatpush1.bf16.xpose.msra.mxu0 0
    %1476 = vmatprep.subr.bf16.mxu0 0
    %1477 = vmatpush1.bf16.xpose.msra.mxu0 0
    %1478 = vmatprep.subr.bf16.mxu0 0
    %1479 = vmatpush1.bf16.xpose.msra.mxu0 0
    %1480 = vmatprep.subr.bf16.mxu0 0
    %1481 = vmatpush1.bf16.xpose.msra.mxu0 0
    %1482 = vmatprep.subr.bf16.mxu0 0
    %1483 = vmatpush1.bf16.xpose.msra.mxu0 0
    %1484 = vmatprep.subr.bf16.mxu0 0
    %1485 = vmatpush1.bf16.xpose.msra.mxu0 0
    %1486 = vmatprep.mubr.bf16.mxu0 0
    %1487 = vmatmul.mubr.bf16.gmra.mrb[0].mxu0 %v1449
    %v1488 = vpop.f32.mrb[0].mxu0
    %v1489 = vadd.f32 0.0, %v1488
    %v1490 = vpop.f32.mrb[0].mxu0
    %v1491 = vpop.f32.mrb[0].mxu0
    %v1492 = vadd.f32 0.0, %v1491
    %v1493 = vpop.f32.mrb[0].mxu0
    %1494 = vdwg.mxu0
    %v1495 = vmul.f32 %v1489, 0.35355338
    %v1496 = vmul.f32 %v1492, 0.35355338
    %v1497 = vadd.f32 %v1495, %v330
    %v1498 = vadd.f32 %v1496, %v331
    %v1499 = vsel %vm498, %v1497, -inf
    %1500 = vmax.xlane.f32.xlu0 %v1499
    %v1501 = vpop.xlane.xlu0 %1500
    %v1502 = vsel %vm498, %v1498, -inf
    %1503 = vmax.xlane.f32.xlu0 %v1502
    %v1504 = vpop.xlane.xlu0 %1503
    %v1505 = vsub.f32 %v1497, %v1501
    %v1506 = vsub.f32 %v1498, %v1504
    %v1507 = vmul.f32 %v1505, 1.442695
    %v1508 = vpow.pop %v1507
    %v1509 = vmul.f32 %v1506, 1.442695
    %v1510 = vpow.pop %v1509
    %v1511 = vsel %vm498, %v1508, 0.0
    %1512 = vadd.xlane.f32.xlu0 %v1511
    %v1513 = vpop.xlane.xlu0 %1512
    %v1514 = vsel %vm498, %v1510, 0.0
    %1515 = vadd.xlane.f32.xlu0 %v1514
    %v1516 = vpop.xlane.xlu0 %1515
    %v1517 = vrcp.pop %v1513
    %v1518 = vrcp.pop %v1516
    %v1519 = vmul.f32 %v1508, %v1517
    %v1520 = vmul.f32 %v1510, %v1518
    %v1521 = vpack.c.bf16 %v1520, %v1519
    %1522 = vrot.lane.b32.xlu0 %v1444, 64
    %v1523 = vpop.permute.xlu0 %1522
    %v1526 = vsel %vm498, %v1521, 0
    %1528 = vmatprep.subr.bf16.mxu0 0
    %1529 = vmatpush1.bf16.msra.mxu0 %v1523
    %1530 = vmatprep.subr.bf16.mxu0 0
    %1531 = vmatpush1.bf16.msra.mxu0 0
    %1532 = vmatprep.subr.bf16.mxu0 0
    %1533 = vmatpush1.bf16.msra.mxu0 0
    %1534 = vmatprep.subr.bf16.mxu0 0
    %1535 = vmatpush1.bf16.msra.mxu0 0
    %1536 = vmatprep.subr.bf16.mxu0 0
    %1537 = vmatpush1.bf16.msra.mxu0 0
    %1538 = vmatprep.subr.bf16.mxu0 0
    %1539 = vmatpush1.bf16.msra.mxu0 0
    %1540 = vmatprep.subr.bf16.mxu0 0
    %1541 = vmatpush1.bf16.msra.mxu0 0
    %1542 = vmatprep.subr.bf16.mxu0 0
    %1543 = vmatpush1.bf16.msra.mxu0 0
    %1544 = vmatprep.subr.bf16.mxu0 0
    %1545 = vmatpush1.bf16.msra.mxu0 0
    %1546 = vmatprep.subr.bf16.mxu0 0
    %1547 = vmatpush1.bf16.msra.mxu0 0
    %1548 = vmatprep.subr.bf16.mxu0 0
    %1549 = vmatpush1.bf16.msra.mxu0 0
    %1550 = vmatprep.subr.bf16.mxu0 0
    %1551 = vmatpush1.bf16.msra.mxu0 0
    %1552 = vmatprep.subr.bf16.mxu0 0
    %1553 = vmatpush1.bf16.msra.mxu0 0
    %1554 = vmatprep.subr.bf16.mxu0 0
    %1555 = vmatpush1.bf16.msra.mxu0 0
    %1556 = vmatprep.subr.bf16.mxu0 0
    %1557 = vmatpush1.bf16.msra.mxu0 0
    %1558 = vmatprep.subr.bf16.mxu0 0
    %1559 = vmatpush1.bf16.msra.mxu0 0
    %1560 = vmatprep.mubr.bf16.mxu0 0
    %1561 = vmatmul.mubr.bf16.gmra.mrb[0].mxu0 %v1526
    %v1562 = vpop.f32.mrb[0].mxu0
    %v1563 = vadd.f32 0.0, %v1562
    %v1564 = vpop.f32.mrb[0].mxu0
    %v1565 = vpop.f32.mrb[0].mxu0
    %v1566 = vadd.f32 0.0, %v1565
    %v1567 = vpop.f32.mrb[0].mxu0
    %1568 = vdwg.mxu0
    %v1569 = vpack.c.bf16 %v1566, %v1563
    %v1570 = vpack.c.bf16 %v1440, %v1440
    %1571 = vrot.lane.b32.xlu0 %v1444, 120
    %v1572 = vpop.permute.xlu0 %1571
    %1573 = vrot.lane.b32.xlu0 %v1444, 88
    %v1574 = vpop.permute.xlu0 %1573
    %v1576 = vsel %vm446, %v1572, 0
    %v1579 = vsel %vm446, %v1574, 0
    %1581 = vmatprep.subr.bf16.mxu0 0
    %1582 = vmatpush1.bf16.xpose.msra.mxu0 %v1579
    %1583 = vmatprep.subr.bf16.mxu0 0
    %1584 = vmatpush1.bf16.xpose.msra.mxu0 0
    %1585 = vmatprep.subr.bf16.mxu0 0
    %1586 = vmatpush1.bf16.xpose.msra.mxu0 0
    %1587 = vmatprep.subr.bf16.mxu0 0
    %1588 = vmatpush1.bf16.xpose.msra.mxu0 0
    %1589 = vmatprep.subr.bf16.mxu0 0
    %1590 = vmatpush1.bf16.xpose.msra.mxu0 0
    %1591 = vmatprep.subr.bf16.mxu0 0
    %1592 = vmatpush1.bf16.xpose.msra.mxu0 0
    %1593 = vmatprep.subr.bf16.mxu0 0
    %1594 = vmatpush1.bf16.xpose.msra.mxu0 0
    %1595 = vmatprep.subr.bf16.mxu0 0
    %1596 = vmatpush1.bf16.xpose.msra.mxu0 0
    %1597 = vmatprep.subr.bf16.mxu0 0
    %1598 = vmatpush1.bf16.xpose.msra.mxu0 0
    %1599 = vmatprep.subr.bf16.mxu0 0
    %1600 = vmatpush1.bf16.xpose.msra.mxu0 0
    %1601 = vmatprep.subr.bf16.mxu0 0
    %1602 = vmatpush1.bf16.xpose.msra.mxu0 0
    %1603 = vmatprep.subr.bf16.mxu0 0
    %1604 = vmatpush1.bf16.xpose.msra.mxu0 0
    %1605 = vmatprep.subr.bf16.mxu0 0
    %1606 = vmatpush1.bf16.xpose.msra.mxu0 0
    %1607 = vmatprep.subr.bf16.mxu0 0
    %1608 = vmatpush1.bf16.xpose.msra.mxu0 0
    %1609 = vmatprep.subr.bf16.mxu0 0
    %1610 = vmatpush1.bf16.xpose.msra.mxu0 0
    %1611 = vmatprep.subr.bf16.mxu0 0
    %1612 = vmatpush1.bf16.xpose.msra.mxu0 0
    %1613 = vmatprep.mubr.bf16.mxu0 0
    %1614 = vmatmul.mubr.bf16.gmra.mrb[0].mxu0 %v1576
    %v1615 = vpop.f32.mrb[0].mxu0
    %v1616 = vadd.f32 0.0, %v1615
    %v1617 = vpop.f32.mrb[0].mxu0
    %v1618 = vpop.f32.mrb[0].mxu0
    %v1619 = vadd.f32 0.0, %v1618
    %v1620 = vpop.f32.mrb[0].mxu0
    %1621 = vdwg.mxu0
    %v1622 = vmul.f32 %v1616, 0.35355338
    %v1623 = vmul.f32 %v1619, 0.35355338
    %v1624 = vadd.f32 %v1622, %v330
    %v1625 = vadd.f32 %v1623, %v331
    %v1626 = vsel %vm498, %v1624, -inf
    %1627 = vmax.xlane.f32.xlu0 %v1626
    %v1628 = vpop.xlane.xlu0 %1627
    %v1629 = vsel %vm498, %v1625, -inf
    %1630 = vmax.xlane.f32.xlu0 %v1629
    %v1631 = vpop.xlane.xlu0 %1630
    %v1632 = vsub.f32 %v1624, %v1628
    %v1633 = vsub.f32 %v1625, %v1631
    %v1634 = vmul.f32 %v1632, 1.442695
    %v1635 = vpow.pop %v1634
    %v1636 = vmul.f32 %v1633, 1.442695
    %v1637 = vpow.pop %v1636
    %v1638 = vsel %vm498, %v1635, 0.0
    %1639 = vadd.xlane.f32.xlu0 %v1638
    %v1640 = vpop.xlane.xlu0 %1639
    %v1641 = vsel %vm498, %v1637, 0.0
    %1642 = vadd.xlane.f32.xlu0 %v1641
    %v1643 = vpop.xlane.xlu0 %1642
    %v1644 = vrcp.pop %v1640
    %v1645 = vrcp.pop %v1643
    %v1646 = vmul.f32 %v1635, %v1644
    %v1647 = vmul.f32 %v1637, %v1645
    %v1648 = vpack.c.bf16 %v1647, %v1646
    %1649 = vrot.lane.b32.xlu0 %v1444, 56
    %v1650 = vpop.permute.xlu0 %1649
    %v1653 = vsel %vm498, %v1648, 0
    %1655 = vmatprep.subr.bf16.mxu0 0
    %1656 = vmatpush1.bf16.msra.mxu0 %v1650
    %1657 = vmatprep.subr.bf16.mxu0 0
    %1658 = vmatpush1.bf16.msra.mxu0 0
    %1659 = vmatprep.subr.bf16.mxu0 0
    %1660 = vmatpush1.bf16.msra.mxu0 0
    %1661 = vmatprep.subr.bf16.mxu0 0
    %1662 = vmatpush1.bf16.msra.mxu0 0
    %1663 = vmatprep.subr.bf16.mxu0 0
    %1664 = vmatpush1.bf16.msra.mxu0 0
    %1665 = vmatprep.subr.bf16.mxu0 0
    %1666 = vmatpush1.bf16.msra.mxu0 0
    %1667 = vmatprep.subr.bf16.mxu0 0
    %1668 = vmatpush1.bf16.msra.mxu0 0
    %1669 = vmatprep.subr.bf16.mxu0 0
    %1670 = vmatpush1.bf16.msra.mxu0 0
    %1671 = vmatprep.subr.bf16.mxu0 0
    %1672 = vmatpush1.bf16.msra.mxu0 0
    %1673 = vmatprep.subr.bf16.mxu0 0
    %1674 = vmatpush1.bf16.msra.mxu0 0
    %1675 = vmatprep.subr.bf16.mxu0 0
    %1676 = vmatpush1.bf16.msra.mxu0 0
    %1677 = vmatprep.subr.bf16.mxu0 0
    %1678 = vmatpush1.bf16.msra.mxu0 0
    %1679 = vmatprep.subr.bf16.mxu0 0
    %1680 = vmatpush1.bf16.msra.mxu0 0
    %1681 = vmatprep.subr.bf16.mxu0 0
    %1682 = vmatpush1.bf16.msra.mxu0 0
    %1683 = vmatprep.subr.bf16.mxu0 0
    %1684 = vmatpush1.bf16.msra.mxu0 0
    %1685 = vmatprep.subr.bf16.mxu0 0
    %1686 = vmatpush1.bf16.msra.mxu0 0
    %1687 = vmatprep.mubr.bf16.mxu0 0
    %1688 = vmatmul.mubr.bf16.gmra.mrb[0].mxu0 %v1653
    %v1689 = vpop.f32.mrb[0].mxu0
    %v1690 = vadd.f32 0.0, %v1689
    %v1691 = vpop.f32.mrb[0].mxu0
    %v1692 = vpop.f32.mrb[0].mxu0
    %v1693 = vadd.f32 0.0, %v1692
    %v1694 = vpop.f32.mrb[0].mxu0
    %1695 = vdwg.mxu0
    %v1696 = vpack.c.bf16 %v1693, %v1690
    %v1697 = vpack.c.bf16 %v1441, %v1441
    %v1699 = vsel %vm446, %v1696, 0
    %v1702 = vsel %vm701, %v1697, 0
    %1704 = vmatprep.subr.bf16.mxu0 0
    %1705 = vmatpush1.bf16.msra.mxu0 %v1702
    %1706 = vmatprep.subr.bf16.mxu0 0
    %1707 = vmatpush1.bf16.msra.mxu0 0
    %1708 = vmatprep.subr.bf16.mxu0 0
    %1709 = vmatpush1.bf16.msra.mxu0 0
    %1710 = vmatprep.subr.bf16.mxu0 0
    %1711 = vmatpush1.bf16.msra.mxu0 0
    %1712 = vmatprep.subr.bf16.mxu0 0
    %1713 = vmatpush1.bf16.msra.mxu0 0
    %1714 = vmatprep.subr.bf16.mxu0 0
    %1715 = vmatpush1.bf16.msra.mxu0 0
    %1716 = vmatprep.subr.bf16.mxu0 0
    %1717 = vmatpush1.bf16.msra.mxu0 0
    %1718 = vmatprep.subr.bf16.mxu0 0
    %1719 = vmatpush1.bf16.msra.mxu0 0
    %1720 = vmatprep.subr.bf16.mxu0 0
    %1721 = vmatpush1.bf16.msra.mxu0 0
    %1722 = vmatprep.subr.bf16.mxu0 0
    %1723 = vmatpush1.bf16.msra.mxu0 0
    %1724 = vmatprep.subr.bf16.mxu0 0
    %1725 = vmatpush1.bf16.msra.mxu0 0
    %1726 = vmatprep.subr.bf16.mxu0 0
    %1727 = vmatpush1.bf16.msra.mxu0 0
    %1728 = vmatprep.subr.bf16.mxu0 0
    %1729 = vmatpush1.bf16.msra.mxu0 0
    %1730 = vmatprep.subr.bf16.mxu0 0
    %1731 = vmatpush1.bf16.msra.mxu0 0
    %1732 = vmatprep.subr.bf16.mxu0 0
    %1733 = vmatpush1.bf16.msra.mxu0 0
    %1734 = vmatprep.subr.bf16.mxu0 0
    %1735 = vmatpush1.bf16.msra.mxu0 0
    %1736 = vmatprep.mubr.bf16.mxu0 0
    %1737 = vmatmul.mubr.bf16.gmra.mrb[0].mxu0 %v1699
    %v1738 = vpop.f32.mrb[0].mxu0
    %v1739 = vadd.f32 0.0, %v1738
    %v1740 = vpop.f32.mrb[0].mxu0
    %v1741 = vpop.f32.mrb[0].mxu0
    %v1742 = vadd.f32 0.0, %v1741
    %v1743 = vpop.f32.mrb[0].mxu0
    %1744 = vdwg.mxu0
    %v1746 = vsel %vm446, %v1569, 0
    %v1749 = vsel %vm701, %v1570, 0
    %1751 = vmatprep.subr.bf16.mxu0 0
    %1752 = vmatpush1.bf16.msra.mxu0 %v1749
    %1753 = vmatprep.subr.bf16.mxu0 0
    %1754 = vmatpush1.bf16.msra.mxu0 0
    %1755 = vmatprep.subr.bf16.mxu0 0
    %1756 = vmatpush1.bf16.msra.mxu0 0
    %1757 = vmatprep.subr.bf16.mxu0 0
    %1758 = vmatpush1.bf16.msra.mxu0 0
    %1759 = vmatprep.subr.bf16.mxu0 0
    %1760 = vmatpush1.bf16.msra.mxu0 0
    %1761 = vmatprep.subr.bf16.mxu0 0
    %1762 = vmatpush1.bf16.msra.mxu0 0
    %1763 = vmatprep.subr.bf16.mxu0 0
    %1764 = vmatpush1.bf16.msra.mxu0 0
    %1765 = vmatprep.subr.bf16.mxu0 0
    %1766 = vmatpush1.bf16.msra.mxu0 0
    %1767 = vmatprep.subr.bf16.mxu0 0
    %1768 = vmatpush1.bf16.msra.mxu0 0
    %1769 = vmatprep.subr.bf16.mxu0 0
    %1770 = vmatpush1.bf16.msra.mxu0 0
    %1771 = vmatprep.subr.bf16.mxu0 0
    %1772 = vmatpush1.bf16.msra.mxu0 0
    %1773 = vmatprep.subr.bf16.mxu0 0
    %1774 = vmatpush1.bf16.msra.mxu0 0
    %1775 = vmatprep.subr.bf16.mxu0 0
    %1776 = vmatpush1.bf16.msra.mxu0 0
    %1777 = vmatprep.subr.bf16.mxu0 0
    %1778 = vmatpush1.bf16.msra.mxu0 0
    %1779 = vmatprep.subr.bf16.mxu0 0
    %1780 = vmatpush1.bf16.msra.mxu0 0
    %1781 = vmatprep.subr.bf16.mxu0 0
    %1782 = vmatpush1.bf16.msra.mxu0 0
    %1783 = vmatprep.mubr.bf16.mxu0 0
    %1784 = vmatmul.mubr.bf16.gmra.mrb[0].mxu0 %v1746
    %v1785 = vpop.f32.mrb[0].mxu0
    %v1786 = vadd.f32 %v1739, %v1785
    %v1787 = vpop.f32.mrb[0].mxu0
    %v1788 = vpop.f32.mrb[0].mxu0
    %v1789 = vadd.f32 %v1742, %v1788
    %v1790 = vpop.f32.mrb[0].mxu0
    %1791 = vdwg.mxu0
    %1792 = vrot.lane.b32.xlu0 %v1444, 112
    %v1793 = vpop.permute.xlu0 %1792
    %1794 = vrot.lane.b32.xlu0 %v1444, 80
    %v1795 = vpop.permute.xlu0 %1794
    %v1797 = vsel %vm446, %v1793, 0
    %v1800 = vsel %vm446, %v1795, 0
    %1802 = vmatprep.subr.bf16.mxu0 0
    %1803 = vmatpush1.bf16.xpose.msra.mxu0 %v1800
    %1804 = vmatprep.subr.bf16.mxu0 0
    %1805 = vmatpush1.bf16.xpose.msra.mxu0 0
    %1806 = vmatprep.subr.bf16.mxu0 0
    %1807 = vmatpush1.bf16.xpose.msra.mxu0 0
    %1808 = vmatprep.subr.bf16.mxu0 0
    %1809 = vmatpush1.bf16.xpose.msra.mxu0 0
    %1810 = vmatprep.subr.bf16.mxu0 0
    %1811 = vmatpush1.bf16.xpose.msra.mxu0 0
    %1812 = vmatprep.subr.bf16.mxu0 0
    %1813 = vmatpush1.bf16.xpose.msra.mxu0 0
    %1814 = vmatprep.subr.bf16.mxu0 0
    %1815 = vmatpush1.bf16.xpose.msra.mxu0 0
    %1816 = vmatprep.subr.bf16.mxu0 0
    %1817 = vmatpush1.bf16.xpose.msra.mxu0 0
    %1818 = vmatprep.subr.bf16.mxu0 0
    %1819 = vmatpush1.bf16.xpose.msra.mxu0 0
    %1820 = vmatprep.subr.bf16.mxu0 0
    %1821 = vmatpush1.bf16.xpose.msra.mxu0 0
    %1822 = vmatprep.subr.bf16.mxu0 0
    %1823 = vmatpush1.bf16.xpose.msra.mxu0 0
    %1824 = vmatprep.subr.bf16.mxu0 0
    %1825 = vmatpush1.bf16.xpose.msra.mxu0 0
    %1826 = vmatprep.subr.bf16.mxu0 0
    %1827 = vmatpush1.bf16.xpose.msra.mxu0 0
    %1828 = vmatprep.subr.bf16.mxu0 0
    %1829 = vmatpush1.bf16.xpose.msra.mxu0 0
    %1830 = vmatprep.subr.bf16.mxu0 0
    %1831 = vmatpush1.bf16.xpose.msra.mxu0 0
    %1832 = vmatprep.subr.bf16.mxu0 0
    %1833 = vmatpush1.bf16.xpose.msra.mxu0 0
    %1834 = vmatprep.mubr.bf16.mxu0 0
    %1835 = vmatmul.mubr.bf16.gmra.mrb[0].mxu0 %v1797
    %v1836 = vpop.f32.mrb[0].mxu0
    %v1837 = vadd.f32 0.0, %v1836
    %v1838 = vpop.f32.mrb[0].mxu0
    %v1839 = vpop.f32.mrb[0].mxu0
    %v1840 = vadd.f32 0.0, %v1839
    %v1841 = vpop.f32.mrb[0].mxu0
    %1842 = vdwg.mxu0
    %v1843 = vmul.f32 %v1837, 0.35355338
    %v1844 = vmul.f32 %v1840, 0.35355338
    %v1845 = vadd.f32 %v1843, %v330
    %v1846 = vadd.f32 %v1844, %v331
    %v1847 = vsel %vm498, %v1845, -inf
    %1848 = vmax.xlane.f32.xlu0 %v1847
    %v1849 = vpop.xlane.xlu0 %1848
    %v1850 = vsel %vm498, %v1846, -inf
    %1851 = vmax.xlane.f32.xlu0 %v1850
    %v1852 = vpop.xlane.xlu0 %1851
    %v1853 = vsub.f32 %v1845, %v1849
    %v1854 = vsub.f32 %v1846, %v1852
    %v1855 = vmul.f32 %v1853, 1.442695
    %v1856 = vpow.pop %v1855
    %v1857 = vmul.f32 %v1854, 1.442695
    %v1858 = vpow.pop %v1857
    %v1859 = vsel %vm498, %v1856, 0.0
    %1860 = vadd.xlane.f32.xlu0 %v1859
    %v1861 = vpop.xlane.xlu0 %1860
    %v1862 = vsel %vm498, %v1858, 0.0
    %1863 = vadd.xlane.f32.xlu0 %v1862
    %v1864 = vpop.xlane.xlu0 %1863
    %v1865 = vrcp.pop %v1861
    %v1866 = vrcp.pop %v1864
    %v1867 = vmul.f32 %v1856, %v1865
    %v1868 = vmul.f32 %v1858, %v1866
    %v1869 = vpack.c.bf16 %v1868, %v1867
    %1870 = vrot.lane.b32.xlu0 %v1444, 48
    %v1871 = vpop.permute.xlu0 %1870
    %v1874 = vsel %vm498, %v1869, 0
    %1876 = vmatprep.subr.bf16.mxu0 0
    %1877 = vmatpush1.bf16.msra.mxu0 %v1871
    %1878 = vmatprep.subr.bf16.mxu0 0
    %1879 = vmatpush1.bf16.msra.mxu0 0
    %1880 = vmatprep.subr.bf16.mxu0 0
    %1881 = vmatpush1.bf16.msra.mxu0 0
    %1882 = vmatprep.subr.bf16.mxu0 0
    %1883 = vmatpush1.bf16.msra.mxu0 0
    %1884 = vmatprep.subr.bf16.mxu0 0
    %1885 = vmatpush1.bf16.msra.mxu0 0
    %1886 = vmatprep.subr.bf16.mxu0 0
    %1887 = vmatpush1.bf16.msra.mxu0 0
    %1888 = vmatprep.subr.bf16.mxu0 0
    %1889 = vmatpush1.bf16.msra.mxu0 0
    %1890 = vmatprep.subr.bf16.mxu0 0
    %1891 = vmatpush1.bf16.msra.mxu0 0
    %1892 = vmatprep.subr.bf16.mxu0 0
    %1893 = vmatpush1.bf16.msra.mxu0 0
    %1894 = vmatprep.subr.bf16.mxu0 0
    %1895 = vmatpush1.bf16.msra.mxu0 0
    %1896 = vmatprep.subr.bf16.mxu0 0
    %1897 = vmatpush1.bf16.msra.mxu0 0
    %1898 = vmatprep.subr.bf16.mxu0 0
    %1899 = vmatpush1.bf16.msra.mxu0 0
    %1900 = vmatprep.subr.bf16.mxu0 0
    %1901 = vmatpush1.bf16.msra.mxu0 0
    %1902 = vmatprep.subr.bf16.mxu0 0
    %1903 = vmatpush1.bf16.msra.mxu0 0
    %1904 = vmatprep.subr.bf16.mxu0 0
    %1905 = vmatpush1.bf16.msra.mxu0 0
    %1906 = vmatprep.subr.bf16.mxu0 0
    %1907 = vmatpush1.bf16.msra.mxu0 0
    %1908 = vmatprep.mubr.bf16.mxu0 0
    %1909 = vmatmul.mubr.bf16.gmra.mrb[0].mxu0 %v1874
    %v1910 = vpop.f32.mrb[0].mxu0
    %v1911 = vadd.f32 0.0, %v1910
    %v1912 = vpop.f32.mrb[0].mxu0
    %v1913 = vpop.f32.mrb[0].mxu0
    %v1914 = vadd.f32 0.0, %v1913
    %v1915 = vpop.f32.mrb[0].mxu0
    %1916 = vdwg.mxu0
    %v1917 = vpack.c.bf16 %v1914, %v1911
    %v1918 = vpack.c.bf16 %v1442, %v1442
    %v1920 = vsel %vm446, %v1917, 0
    %v1923 = vsel %vm701, %v1918, 0
    %1925 = vmatprep.subr.bf16.mxu0 0
    %1926 = vmatpush1.bf16.msra.mxu0 %v1923
    %1927 = vmatprep.subr.bf16.mxu0 0
    %1928 = vmatpush1.bf16.msra.mxu0 0
    %1929 = vmatprep.subr.bf16.mxu0 0
    %1930 = vmatpush1.bf16.msra.mxu0 0
    %1931 = vmatprep.subr.bf16.mxu0 0
    %1932 = vmatpush1.bf16.msra.mxu0 0
    %1933 = vmatprep.subr.bf16.mxu0 0
    %1934 = vmatpush1.bf16.msra.mxu0 0
    %1935 = vmatprep.subr.bf16.mxu0 0
    %1936 = vmatpush1.bf16.msra.mxu0 0
    %1937 = vmatprep.subr.bf16.mxu0 0
    %1938 = vmatpush1.bf16.msra.mxu0 0
    %1939 = vmatprep.subr.bf16.mxu0 0
    %1940 = vmatpush1.bf16.msra.mxu0 0
    %1941 = vmatprep.subr.bf16.mxu0 0
    %1942 = vmatpush1.bf16.msra.mxu0 0
    %1943 = vmatprep.subr.bf16.mxu0 0
    %1944 = vmatpush1.bf16.msra.mxu0 0
    %1945 = vmatprep.subr.bf16.mxu0 0
    %1946 = vmatpush1.bf16.msra.mxu0 0
    %1947 = vmatprep.subr.bf16.mxu0 0
    %1948 = vmatpush1.bf16.msra.mxu0 0
    %1949 = vmatprep.subr.bf16.mxu0 0
    %1950 = vmatpush1.bf16.msra.mxu0 0
    %1951 = vmatprep.subr.bf16.mxu0 0
    %1952 = vmatpush1.bf16.msra.mxu0 0
    %1953 = vmatprep.subr.bf16.mxu0 0
    %1954 = vmatpush1.bf16.msra.mxu0 0
    %1955 = vmatprep.subr.bf16.mxu0 0
    %1956 = vmatpush1.bf16.msra.mxu0 0
    %1957 = vmatprep.mubr.bf16.mxu0 0
    %1958 = vmatmul.mubr.bf16.gmra.mrb[0].mxu0 %v1920
    %v1959 = vpop.f32.mrb[0].mxu0
    %v1960 = vadd.f32 0.0, %v1959
    %v1961 = vpop.f32.mrb[0].mxu0
    %v1962 = vpop.f32.mrb[0].mxu0
    %v1963 = vadd.f32 0.0, %v1962
    %v1964 = vpop.f32.mrb[0].mxu0
    %1965 = vdwg.mxu0
    %v1966 = vadd.f32 %v1786, %v1960
    %v1967 = vadd.f32 %v1789, %v1963
    %1968 = vrot.lane.b32.xlu0 %v1444, 104
    %v1969 = vpop.permute.xlu0 %1968
    %1970 = vrot.lane.b32.xlu0 %v1444, 72
    %v1971 = vpop.permute.xlu0 %1970
    %v1973 = vsel %vm446, %v1969, 0
    %v1976 = vsel %vm446, %v1971, 0
    %1978 = vmatprep.subr.bf16.mxu0 0
    %1979 = vmatpush1.bf16.xpose.msra.mxu0 %v1976
    %1980 = vmatprep.subr.bf16.mxu0 0
    %1981 = vmatpush1.bf16.xpose.msra.mxu0 0
    %1982 = vmatprep.subr.bf16.mxu0 0
    %1983 = vmatpush1.bf16.xpose.msra.mxu0 0
    %1984 = vmatprep.subr.bf16.mxu0 0
    %1985 = vmatpush1.bf16.xpose.msra.mxu0 0
    %1986 = vmatprep.subr.bf16.mxu0 0
    %1987 = vmatpush1.bf16.xpose.msra.mxu0 0
    %1988 = vmatprep.subr.bf16.mxu0 0
    %1989 = vmatpush1.bf16.xpose.msra.mxu0 0
    %1990 = vmatprep.subr.bf16.mxu0 0
    %1991 = vmatpush1.bf16.xpose.msra.mxu0 0
    %1992 = vmatprep.subr.bf16.mxu0 0
    %1993 = vmatpush1.bf16.xpose.msra.mxu0 0
    %1994 = vmatprep.subr.bf16.mxu0 0
    %1995 = vmatpush1.bf16.xpose.msra.mxu0 0
    %1996 = vmatprep.subr.bf16.mxu0 0
    %1997 = vmatpush1.bf16.xpose.msra.mxu0 0
    %1998 = vmatprep.subr.bf16.mxu0 0
    %1999 = vmatpush1.bf16.xpose.msra.mxu0 0
    %2000 = vmatprep.subr.bf16.mxu0 0
    %2001 = vmatpush1.bf16.xpose.msra.mxu0 0
    %2002 = vmatprep.subr.bf16.mxu0 0
    %2003 = vmatpush1.bf16.xpose.msra.mxu0 0
    %2004 = vmatprep.subr.bf16.mxu0 0
    %2005 = vmatpush1.bf16.xpose.msra.mxu0 0
    %2006 = vmatprep.subr.bf16.mxu0 0
    %2007 = vmatpush1.bf16.xpose.msra.mxu0 0
    %2008 = vmatprep.subr.bf16.mxu0 0
    %2009 = vmatpush1.bf16.xpose.msra.mxu0 0
    %2010 = vmatprep.mubr.bf16.mxu0 0
    %2011 = vmatmul.mubr.bf16.gmra.mrb[0].mxu0 %v1973
    %v2012 = vpop.f32.mrb[0].mxu0
    %v2013 = vadd.f32 0.0, %v2012
    %v2014 = vpop.f32.mrb[0].mxu0
    %v2015 = vpop.f32.mrb[0].mxu0
    %v2016 = vadd.f32 0.0, %v2015
    %v2017 = vpop.f32.mrb[0].mxu0
    %2018 = vdwg.mxu0
    %v2019 = vmul.f32 %v2013, 0.35355338
    %v2020 = vmul.f32 %v2016, 0.35355338
    %v2021 = vadd.f32 %v2019, %v330
    %v2022 = vadd.f32 %v2020, %v331
    %v2023 = vsel %vm498, %v2021, -inf
    %2024 = vmax.xlane.f32.xlu0 %v2023
    %v2025 = vpop.xlane.xlu0 %2024
    %v2026 = vsel %vm498, %v2022, -inf
    %2027 = vmax.xlane.f32.xlu0 %v2026
    %v2028 = vpop.xlane.xlu0 %2027
    %v2029 = vsub.f32 %v2021, %v2025
    %v2030 = vsub.f32 %v2022, %v2028
    %v2031 = vmul.f32 %v2029, 1.442695
    %v2032 = vpow.pop %v2031
    %v2033 = vmul.f32 %v2030, 1.442695
    %v2034 = vpow.pop %v2033
    %v2035 = vsel %vm498, %v2032, 0.0
    %2036 = vadd.xlane.f32.xlu0 %v2035
    %v2037 = vpop.xlane.xlu0 %2036
    %v2038 = vsel %vm498, %v2034, 0.0
    %2039 = vadd.xlane.f32.xlu0 %v2038
    %v2040 = vpop.xlane.xlu0 %2039
    %v2041 = vrcp.pop %v2037
    %v2042 = vrcp.pop %v2040
    %v2043 = vmul.f32 %v2032, %v2041
    %v2044 = vmul.f32 %v2034, %v2042
    %v2045 = vpack.c.bf16 %v2044, %v2043
    %2046 = vrot.lane.b32.xlu0 %v1444, 40
    %v2047 = vpop.permute.xlu0 %2046
    %v2050 = vsel %vm498, %v2045, 0
    %2052 = vmatprep.subr.bf16.mxu0 0
    %2053 = vmatpush1.bf16.msra.mxu0 %v2047
    %2054 = vmatprep.subr.bf16.mxu0 0
    %2055 = vmatpush1.bf16.msra.mxu0 0
    %2056 = vmatprep.subr.bf16.mxu0 0
    %2057 = vmatpush1.bf16.msra.mxu0 0
    %2058 = vmatprep.subr.bf16.mxu0 0
    %2059 = vmatpush1.bf16.msra.mxu0 0
    %2060 = vmatprep.subr.bf16.mxu0 0
    %2061 = vmatpush1.bf16.msra.mxu0 0
    %2062 = vmatprep.subr.bf16.mxu0 0
    %2063 = vmatpush1.bf16.msra.mxu0 0
    %2064 = vmatprep.subr.bf16.mxu0 0
    %2065 = vmatpush1.bf16.msra.mxu0 0
    %2066 = vmatprep.subr.bf16.mxu0 0
    %2067 = vmatpush1.bf16.msra.mxu0 0
    %2068 = vmatprep.subr.bf16.mxu0 0
    %2069 = vmatpush1.bf16.msra.mxu0 0
    %2070 = vmatprep.subr.bf16.mxu0 0
    %2071 = vmatpush1.bf16.msra.mxu0 0
    %2072 = vmatprep.subr.bf16.mxu0 0
    %2073 = vmatpush1.bf16.msra.mxu0 0
    %2074 = vmatprep.subr.bf16.mxu0 0
    %2075 = vmatpush1.bf16.msra.mxu0 0
    %2076 = vmatprep.subr.bf16.mxu0 0
    %2077 = vmatpush1.bf16.msra.mxu0 0
    %2078 = vmatprep.subr.bf16.mxu0 0
    %2079 = vmatpush1.bf16.msra.mxu0 0
    %2080 = vmatprep.subr.bf16.mxu0 0
    %2081 = vmatpush1.bf16.msra.mxu0 0
    %2082 = vmatprep.subr.bf16.mxu0 0
    %2083 = vmatpush1.bf16.msra.mxu0 0
    %2084 = vmatprep.mubr.bf16.mxu0 0
    %2085 = vmatmul.mubr.bf16.gmra.mrb[0].mxu0 %v2050
    %v2086 = vpop.f32.mrb[0].mxu0
    %v2087 = vadd.f32 0.0, %v2086
    %v2088 = vpop.f32.mrb[0].mxu0
    %v2089 = vpop.f32.mrb[0].mxu0
    %v2090 = vadd.f32 0.0, %v2089
    %v2091 = vpop.f32.mrb[0].mxu0
    %2092 = vdwg.mxu0
    %v2093 = vpack.c.bf16 %v2090, %v2087
    %v2094 = vpack.c.bf16 %v1443, %v1443
    %v2096 = vsel %vm446, %v2093, 0
    %v2099 = vsel %vm701, %v2094, 0
    %2101 = vmatprep.subr.bf16.mxu0 0
    %2102 = vmatpush1.bf16.msra.mxu0 %v2099
    %2103 = vmatprep.subr.bf16.mxu0 0
    %2104 = vmatpush1.bf16.msra.mxu0 0
    %2105 = vmatprep.subr.bf16.mxu0 0
    %2106 = vmatpush1.bf16.msra.mxu0 0
    %2107 = vmatprep.subr.bf16.mxu0 0
    %2108 = vmatpush1.bf16.msra.mxu0 0
    %2109 = vmatprep.subr.bf16.mxu0 0
    %2110 = vmatpush1.bf16.msra.mxu0 0
    %2111 = vmatprep.subr.bf16.mxu0 0
    %2112 = vmatpush1.bf16.msra.mxu0 0
    %2113 = vmatprep.subr.bf16.mxu0 0
    %2114 = vmatpush1.bf16.msra.mxu0 0
    %2115 = vmatprep.subr.bf16.mxu0 0
    %2116 = vmatpush1.bf16.msra.mxu0 0
    %2117 = vmatprep.subr.bf16.mxu0 0
    %2118 = vmatpush1.bf16.msra.mxu0 0
    %2119 = vmatprep.subr.bf16.mxu0 0
    %2120 = vmatpush1.bf16.msra.mxu0 0
    %2121 = vmatprep.subr.bf16.mxu0 0
    %2122 = vmatpush1.bf16.msra.mxu0 0
    %2123 = vmatprep.subr.bf16.mxu0 0
    %2124 = vmatpush1.bf16.msra.mxu0 0
    %2125 = vmatprep.subr.bf16.mxu0 0
    %2126 = vmatpush1.bf16.msra.mxu0 0
    %2127 = vmatprep.subr.bf16.mxu0 0
    %2128 = vmatpush1.bf16.msra.mxu0 0
    %2129 = vmatprep.subr.bf16.mxu0 0
    %2130 = vmatpush1.bf16.msra.mxu0 0
    %2131 = vmatprep.subr.bf16.mxu0 0
    %2132 = vmatpush1.bf16.msra.mxu0 0
    %2133 = vmatprep.mubr.bf16.mxu0 0
    %2134 = vmatmul.mubr.bf16.gmra.mrb[0].mxu0 %v2096
    %v2135 = vpop.f32.mrb[0].mxu0
    %v2136 = vadd.f32 0.0, %v2135
    %v2137 = vpop.f32.mrb[0].mxu0
    %v2138 = vpop.f32.mrb[0].mxu0
    %v2139 = vadd.f32 0.0, %v2138
    %v2140 = vpop.f32.mrb[0].mxu0
    %2141 = vdwg.mxu0
    %v2142 = vadd.f32 %v1966, %v2136
    %v2143 = vadd.f32 %v1967, %v2139
    %s2144 = scalar_lea.vmem [#allocation14], 1
    %v2145 = vld [vmem:[%s2144] sm:$0x1]
    %v2147 = vlaneseq
    %v2148 = vshrl.u32 %v2147, 7
    %v2149 = vsub.s32 0, %v2148
    %v2150 = vrot.slane %v2145, %v2149
    %v2152 = vadd.f32 %v2142, %v2150
    %v2153 = vadd.f32 %v2143, %v2150
    %v2154 = vadd.f32 %v2152, %v1377
    %v2155 = vadd.f32 %v2153, %v1378
    %s2156 = scalar_lea.vmem [#allocation16], 1
    %v2157 = vld [vmem:[%s2156] sm:$0x1]
    %s2158 = scalar_lea.vmem [#allocation17], 1
    %v2159 = vld [vmem:[%s2158] sm:$0x1]
    %v2160 = vsel %vm336, %v2154, 0.0
    %2161 = vadd.xlane.f32.xlu0 %v2160
    %v2162 = vpop.xlane.xlu0 %2161
    %v2163 = vsel %vm336, %v2155, 0.0
    %2164 = vadd.xlane.f32.xlu0 %v2163
    %v2165 = vpop.xlane.xlu0 %2164
    %v2166 = vmul.f32 %v2162, %v343
    %v2167 = vmul.f32 %v2165, %v343
    %v2168 = vsub.f32 %v2154, %v2166
    %v2169 = vsub.f32 %v2155, %v2167
    %v2170 = vmul.f32 %v2168, %v2168
    %v2171 = vmul.f32 %v2169, %v2169
    %v2172 = vsel %vm336, %v2170, 0.0
    %2173 = vadd.xlane.f32.xlu0 %v2172
    %v2174 = vpop.xlane.xlu0 %2173
    %v2175 = vsel %vm336, %v2171, 0.0
    %2176 = vadd.xlane.f32.xlu0 %v2175
    %v2177 = vpop.xlane.xlu0 %2176
    %v2178 = vmul.f32 %v2174, %v343
    %v2179 = vmul.f32 %v2177, %v343
    %v2180 = vadd.f32 %v2178, 1e-12
    %v2181 = vadd.f32 %v2179, 1e-12
    %v2182 = vrsqrt.pop %v2180
    %v2183 = vrsqrt.pop %v2181
    %v2184 = vmul.f32 %v2168, %v2182
    %v2185 = vmul.f32 %v2169, %v2183
    %v2187 = vlaneseq
    %v2188 = vshrl.u32 %v2187, 7
    %v2189 = vsub.s32 0, %v2188
    %v2190 = vrot.slane %v2157, %v2189
    %v2192 = vmul.f32 %v2184, %v2190
    %v2193 = vmul.f32 %v2185, %v2190
    %v2195 = vlaneseq
    %v2196 = vshrl.u32 %v2195, 7
    %v2197 = vsub.s32 0, %v2196
    %v2198 = vrot.slane %v2159, %v2197
    %v2200 = vadd.f32 %v2192, %v2198
    %v2201 = vadd.f32 %v2193, %v2198
    %s2202 = scalar_lea.vmem [#allocation19], 32
    %v2203 = vld [vmem:[%s2202] sm:$0xff]
    %v2204 = vld [vmem:[%s2202 + $0x8] sm:$0xff]
    %v2205 = vld [vmem:[%s2202 + $0x10] sm:$0xff]
    %v2206 = vld [vmem:[%s2202 + $0x18] sm:$0xff]
    %v2207 = vpack.c.bf16 %v2201, %v2200
    %v2208 = vpack.c.bf16 %v2204, %v2203
    %v2209 = vpack.c.bf16 %v2206, %v2205
    %s2210 = scalar_lea.vmem [#allocation20], 1
    %v2211 = vld [vmem:[%s2210] sm:$0x1]
    %v2213 = vlaneseq
    %v2214 = vshrl.u32 %v2213, 7
    %v2215 = vsub.s32 0, %v2214
    %v2216 = vrot.slane %v2211, %v2215
    %v2219 = vsel %vm336, %v2207, 0
    %2221 = vmatprep.subr.bf16.mxu0 0
    %2222 = vmatpush1.bf16.msra.mxu0 %v2208
    %2223 = vmatprep.subr.bf16.mxu0 0
    %2224 = vmatpush1.bf16.msra.mxu0 %v2209
    %2225 = vmatprep.subr.bf16.mxu0 0
    %2226 = vmatpush1.bf16.msra.mxu0 0
    %2227 = vmatprep.subr.bf16.mxu0 0
    %2228 = vmatpush1.bf16.msra.mxu0 0
    %2229 = vmatprep.subr.bf16.mxu0 0
    %2230 = vmatpush1.bf16.msra.mxu0 0
    %2231 = vmatprep.subr.bf16.mxu0 0
    %2232 = vmatpush1.bf16.msra.mxu0 0
    %2233 = vmatprep.subr.bf16.mxu0 0
    %2234 = vmatpush1.bf16.msra.mxu0 0
    %2235 = vmatprep.subr.bf16.mxu0 0
    %2236 = vmatpush1.bf16.msra.mxu0 0
    %2237 = vmatprep.subr.bf16.mxu0 0
    %2238 = vmatpush1.bf16.msra.mxu0 0
    %2239 = vmatprep.subr.bf16.mxu0 0
    %2240 = vmatpush1.bf16.msra.mxu0 0
    %2241 = vmatprep.subr.bf16.mxu0 0
    %2242 = vmatpush1.bf16.msra.mxu0 0
    %2243 = vmatprep.subr.bf16.mxu0 0
    %2244 = vmatpush1.bf16.msra.mxu0 0
    %2245 = vmatprep.subr.bf16.mxu0 0
    %2246 = vmatpush1.bf16.msra.mxu0 0
    %2247 = vmatprep.subr.bf16.mxu0 0
    %2248 = vmatpush1.bf16.msra.mxu0 0
    %2249 = vmatprep.subr.bf16.mxu0 0
    %2250 = vmatpush1.bf16.msra.mxu0 0
    %2251 = vmatprep.subr.bf16.mxu0 0
    %2252 = vmatpush1.bf16.msra.mxu0 0
    %2253 = vmatprep.mubr.bf16.mxu0 0
    %2254 = vmatmul.mubr.bf16.gmra.mrb[0].mxu0 %v2219
    %v2255 = vpop.f32.mrb[0].mxu0
    %v2256 = vadd.f32 %v2216, %v2255
    %v2257 = vpop.f32.mrb[0].mxu0
    %v2258 = vpop.f32.mrb[0].mxu0
    %v2259 = vadd.f32 %v2216, %v2258
    %v2260 = vpop.f32.mrb[0].mxu0
    %2261 = vdwg.mxu0
    %v2262 = vmul.f32 %v2256, 0.5
    %v2263 = vmul.f32 %v2259, 0.5
    %v2264 = vmul.f32 %v2256, 0.70710677
    %v2265 = vmul.f32 %v2259, 0.70710677
    %v2266 = verf.f32.pop %v2264
    %v2267 = verf.f32.pop %v2265
    %v2268 = vadd.f32 %v2266, 1.0
    %v2269 = vadd.f32 %v2267, 1.0
    %v2270 = vmul.f32 %v2262, %v2268
    %v2271 = vmul.f32 %v2263, %v2269
    %s2272 = scalar_lea.vmem [#allocation22], 64
    %v2273 = vld [vmem:[%s2272] sm:$0xff]
    %v2274 = vld [vmem:[%s2272 + $0x8] sm:$0xff]
    %v2275 = vld [vmem:[%s2272 + $0x10] sm:$0xff]
    %v2276 = vld [vmem:[%s2272 + $0x18] sm:$0xff]
    %v2277 = vld [vmem:[%s2272 + $0x20] sm:$0xff]
    %v2278 = vld [vmem:[%s2272 + $0x28] sm:$0xff]
    %v2279 = vld [vmem:[%s2272 + $0x30] sm:$0xff]
    %v2280 = vld [vmem:[%s2272 + $0x38] sm:$0xff]
    %v2281 = vpack.c.bf16 %v2271, %v2270
    %v2282 = vpack.c.bf16 %v2274, %v2273
    %v2283 = vpack.c.bf16 %v2276, %v2275
    %v2284 = vpack.c.bf16 %v2278, %v2277
    %v2285 = vpack.c.bf16 %v2280, %v2279
    %s2286 = scalar_lea.vmem [#allocation23], 1
    %v2287 = vld [vmem:[%s2286] sm:$0x1]
    %v2289 = vlaneseq
    %v2290 = vshrl.u32 %v2289, 7
    %v2291 = vsub.s32 0, %v2290
    %v2292 = vrot.slane %v2287, %v2291
    %v2295 = vsel %vm1288, %v2281, 0
    %2297 = vmatprep.subr.bf16.mxu0 0
    %2298 = vmatpush1.bf16.msra.mxu0 %v2282
    %2299 = vmatprep.subr.bf16.mxu0 0
    %2300 = vmatpush1.bf16.msra.mxu0 %v2283
    %2301 = vmatprep.subr.bf16.mxu0 0
    %2302 = vmatpush1.bf16.msra.mxu0 %v2284
    %2303 = vmatprep.subr.bf16.mxu0 0
    %2304 = vmatpush1.bf16.msra.mxu0 %v2285
    %2305 = vmatprep.subr.bf16.mxu0 0
    %2306 = vmatpush1.bf16.msra.mxu0 0
    %2307 = vmatprep.subr.bf16.mxu0 0
    %2308 = vmatpush1.bf16.msra.mxu0 0
    %2309 = vmatprep.subr.bf16.mxu0 0
    %2310 = vmatpush1.bf16.msra.mxu0 0
    %2311 = vmatprep.subr.bf16.mxu0 0
    %2312 = vmatpush1.bf16.msra.mxu0 0
    %2313 = vmatprep.subr.bf16.mxu0 0
    %2314 = vmatpush1.bf16.msra.mxu0 0
    %2315 = vmatprep.subr.bf16.mxu0 0
    %2316 = vmatpush1.bf16.msra.mxu0 0
    %2317 = vmatprep.subr.bf16.mxu0 0
    %2318 = vmatpush1.bf16.msra.mxu0 0
    %2319 = vmatprep.subr.bf16.mxu0 0
    %2320 = vmatpush1.bf16.msra.mxu0 0
    %2321 = vmatprep.subr.bf16.mxu0 0
    %2322 = vmatpush1.bf16.msra.mxu0 0
    %2323 = vmatprep.subr.bf16.mxu0 0
    %2324 = vmatpush1.bf16.msra.mxu0 0
    %2325 = vmatprep.subr.bf16.mxu0 0
    %2326 = vmatpush1.bf16.msra.mxu0 0
    %2327 = vmatprep.subr.bf16.mxu0 0
    %2328 = vmatpush1.bf16.msra.mxu0 0
    %2329 = vmatprep.mubr.bf16.mxu0 0
    %2330 = vmatmul.mubr.bf16.gmra.mrb[0].mxu0 %v2295
    %v2331 = vpop.f32.mrb[0].mxu0
    %v2332 = vadd.f32 %v2292, %v2331
    %v2333 = vpop.f32.mrb[0].mxu0
    %v2334 = vpop.f32.mrb[0].mxu0
    %v2335 = vadd.f32 %v2292, %v2334
    %v2336 = vpop.f32.mrb[0].mxu0
    %2337 = vdwg.mxu0
    %v2338 = vadd.f32 %v2332, %v2200
    %v2339 = vadd.f32 %v2335, %v2201
    %s2340 = scalar_lea.vmem [#allocation25], 1
    %v2341 = vld [vmem:[%s2340] sm:$0x1]
    %s2342 = scalar_lea.vmem [#allocation26], 1
    %v2343 = vld [vmem:[%s2342] sm:$0x1]
    %v2344 = vsel %vm336, %v2338, 0.0
    %2345 = vadd.xlane.f32.xlu0 %v2344
    %v2346 = vpop.xlane.xlu0 %2345
    %v2347 = vsel %vm336, %v2339, 0.0
    %2348 = vadd.xlane.f32.xlu0 %v2347
    %v2349 = vpop.xlane.xlu0 %2348
    %v2350 = vmul.f32 %v2346, %v343
    %v2351 = vmul.f32 %v2349, %v343
    %v2352 = vsub.f32 %v2338, %v2350
    %v2353 = vsub.f32 %v2339, %v2351
    %v2354 = vmul.f32 %v2352, %v2352
    %v2355 = vmul.f32 %v2353, %v2353
    %v2356 = vsel %vm336, %v2354, 0.0
    %2357 = vadd.xlane.f32.xlu0 %v2356
    %v2358 = vpop.xlane.xlu0 %2357
    %v2359 = vsel %vm336, %v2355, 0.0
    %2360 = vadd.xlane.f32.xlu0 %v2359
    %v2361 = vpop.xlane.xlu0 %2360
    %v2362 = vmul.f32 %v2358, %v343
    %v2363 = vmul.f32 %v2361, %v343
    %v2364 = vadd.f32 %v2362, 1e-12
    %v2365 = vadd.f32 %v2363, 1e-12
    %v2366 = vrsqrt.pop %v2364
    %v2367 = vrsqrt.pop %v2365
    %v2368 = vmul.f32 %v2352, %v2366
    %v2369 = vmul.f32 %v2353, %v2367
    %v2371 = vlaneseq
    %v2372 = vshrl.u32 %v2371, 7
    %v2373 = vsub.s32 0, %v2372
    %v2374 = vrot.slane %v2341, %v2373
    %v2376 = vmul.f32 %v2368, %v2374
    %v2377 = vmul.f32 %v2369, %v2374
    %v2379 = vlaneseq
    %v2380 = vshrl.u32 %v2379, 7
    %v2381 = vsub.s32 0, %v2380
    %v2382 = vrot.slane %v2343, %v2381
    %v2384 = vadd.f32 %v2376, %v2382
    %v2385 = vadd.f32 %v2377, %v2382
    %v2387 = vrot.slane %v2385, 7
    %vm2389 = vcmask 1040384
    %v2390 = vsel %vm2389, %v2384, %v2387
    %v2391 = vld [vmem:[#allocation28] sm:$0xff]
    %v2392 = vld [vmem:[#allocation28 + $0x8] sm:$0xff]
    %v2393 = vld [vmem:[#allocation28 + $0x10] sm:$0xff]
    %v2394 = vld [vmem:[#allocation28 + $0x18] sm:$0xff]
    %v2395 = vpack.c.bf16 %v2390, %v2390
    %v2396 = vpack.c.bf16 %v2392, %v2391
    %v2397 = vpack.c.bf16 %v2394, %v2393
    %v2398 = vld [vmem:[#allocation29] sm:$0x1]
    %v2400 = vlaneseq
    %v2401 = vshrl.u32 %v2400, 7
    %v2402 = vsub.s32 0, %v2401
    %v2403 = vrot.slane %v2398, %v2402
    %v2406 = vsel %vm336, %v2395, 0
    %2408 = vmatprep.subr.bf16.mxu0 0
    %2409 = vmatpush1.bf16.msra.mxu0 %v2396
    %2410 = vmatprep.subr.bf16.mxu0 0
    %2411 = vmatpush1.bf16.msra.mxu0 %v2397
    %2412 = vmatprep.subr.bf16.mxu0 0
    %2413 = vmatpush1.bf16.msra.mxu0 0
    %2414 = vmatprep.subr.bf16.mxu0 0
    %2415 = vmatpush1.bf16.msra.mxu0 0
    %2416 = vmatprep.subr.bf16.mxu0 0
    %2417 = vmatpush1.bf16.msra.mxu0 0
    %2418 = vmatprep.subr.bf16.mxu0 0
    %2419 = vmatpush1.bf16.msra.mxu0 0
    %2420 = vmatprep.subr.bf16.mxu0 0
    %2421 = vmatpush1.bf16.msra.mxu0 0
    %2422 = vmatprep.subr.bf16.mxu0 0
    %2423 = vmatpush1.bf16.msra.mxu0 0
    %2424 = vmatprep.subr.bf16.mxu0 0
    %2425 = vmatpush1.bf16.msra.mxu0 0
    %2426 = vmatprep.subr.bf16.mxu0 0
    %2427 = vmatpush1.bf16.msra.mxu0 0
    %2428 = vmatprep.subr.bf16.mxu0 0
    %2429 = vmatpush1.bf16.msra.mxu0 0
    %2430 = vmatprep.subr.bf16.mxu0 0
    %2431 = vmatpush1.bf16.msra.mxu0 0
    %2432 = vmatprep.subr.bf16.mxu0 0
    %2433 = vmatpush1.bf16.msra.mxu0 0
    %2434 = vmatprep.subr.bf16.mxu0 0
    %2435 = vmatpush1.bf16.msra.mxu0 0
    %2436 = vmatprep.subr.bf16.mxu0 0
    %2437 = vmatpush1.bf16.msra.mxu0 0
    %2438 = vmatprep.subr.bf16.mxu0 0
    %2439 = vmatpush1.bf16.msra.mxu0 0
    %2440 = vmatprep.mubr.bf16.mxu0 0
    %2441 = vmatmul.mubr.bf16.gmra.mrb[0].mxu0 %v2406
    %v2442 = vpop.f32.mrb[0].mxu0
    %v2443 = vadd.f32 %v2403, %v2442
    %v2444 = vpop.f32.mrb[0].mxu0
    %v2445 = vpop.f32.mrb[0].mxu0
    %v2446 = vpop.f32.mrb[0].mxu0
    %2447 = vdwg.mxu0
    %v2448 = vtanh.pop %v2443
    %v2449 = vld [vmem:[#allocation31] sm:$0xff]
    %v2450 = vld [vmem:[#allocation31 + $0x8] sm:$0xff]
    %v2451 = vld [vmem:[#allocation31 + $0x10] sm:$0xff]
    %v2452 = vld [vmem:[#allocation31 + $0x18] sm:$0xff]
    %v2453 = vpack.c.bf16 %v2448, %v2448
    %v2454 = vpack.c.bf16 %v2450, %v2449
    %v2455 = vpack.c.bf16 %v2452, %v2451
    %v2456 = vld [vmem:[#allocation32] sm:$0x1]
    %v2458 = vlaneseq
    %v2459 = vshrl.u32 %v2458, 7
    %v2460 = vsub.s32 0, %v2459
    %v2461 = vrot.slane %v2456, %v2460
    %v2464 = vsel %vm336, %v2453, 0
    %2466 = vmatprep.subr.bf16.mxu0 0
    %2467 = vmatpush1.bf16.msra.mxu0 %v2454
    %2468 = vmatprep.subr.bf16.mxu0 0
    %2469 = vmatpush1.bf16.msra.mxu0 %v2455
    %2470 = vmatprep.subr.bf16.mxu0 0
    %2471 = vmatpush1.bf16.msra.mxu0 0
    %2472 = vmatprep.subr.bf16.mxu0 0
    %2473 = vmatpush1.bf16.msra.mxu0 0
    %2474 = vmatprep.subr.bf16.mxu0 0
    %2475 = vmatpush1.bf16.msra.mxu0 0
    %2476 = vmatprep.subr.bf16.mxu0 0
    %2477 = vmatpush1.bf16.msra.mxu0 0
    %2478 = vmatprep.subr.bf16.mxu0 0
    %2479 = vmatpush1.bf16.msra.mxu0 0
    %2480 = vmatprep.subr.bf16.mxu0 0
    %2481 = vmatpush1.bf16.msra.mxu0 0
    %2482 = vmatprep.subr.bf16.mxu0 0
    %2483 = vmatpush1.bf16.msra.mxu0 0
    %2484 = vmatprep.subr.bf16.mxu0 0
    %2485 = vmatpush1.bf16.msra.mxu0 0
    %2486 = vmatprep.subr.bf16.mxu0 0
    %2487 = vmatpush1.bf16.msra.mxu0 0
    %2488 = vmatprep.subr.bf16.mxu0 0
    %2489 = vmatpush1.bf16.msra.mxu0 0
    %2490 = vmatprep.subr.bf16.mxu0 0
    %2491 = vmatpush1.bf16.msra.mxu0 0
    %2492 = vmatprep.subr.bf16.mxu0 0
    %2493 = vmatpush1.bf16.msra.mxu0 0
    %2494 = vmatprep.subr.bf16.mxu0 0
    %2495 = vmatpush1.bf16.msra.mxu0 0
    %2496 = vmatprep.subr.bf16.mxu0 0
    %2497 = vmatpush1.bf16.msra.mxu0 0
    %2498 = vmatprep.mubr.bf16.mxu0 0
    %2499 = vmatmul.mubr.bf16.gmra.mrb[0].mxu0 %v2464
    %v2500 = vpop.f32.mrb[0].mxu0
    %v2501 = vadd.f32 %v2461, %v2500
    %v2502 = vpop.f32.mrb[0].mxu0
    %v2503 = vpop.f32.mrb[0].mxu0
    %v2504 = vpop.f32.mrb[0].mxu0
    %2505 = vdwg.mxu0
    %2506 = vst [vmem:[#allocation34] sm:$0x3] %v2501
    // Predicated region
    $region162: #{kcbert_forward.1} parent=1 // pred_check
      _
    $region163: #{kcbert_forward.1} parent=1 // pred_check_branch
      %2508 = sbr.rel (0) target = $region165
    $region164: #{kcbert_forward.1} parent=1 // pred_region
      %s2510 = ssub.s32 32, 32
      %2511 = vsyncadd [#allocation4], %s2510
      %s2513 = sshll.u32 [#allocation34], 4
      %s2514 = int_to_ptr.vmem [resolvable:$true] %s2513
      %2516 = dma.vmem_to_hbm [thread:$0]  %s2514, 32, %s20, [#allocation4]
    $region165: #{kcbert_forward.1} parent=1 // pred_fallthru
      _
    // Predicated region
    $region166: #{kcbert_forward.1} parent=1 // pred_check
      _
    $region167: #{kcbert_forward.1} parent=1 // pred_check_branch
      %2518 = sbr.rel (0) target = $region169
    $region168: #{kcbert_forward.1} parent=1 // pred_region
      %2519 = dma.done [#allocation4], 32
    $region169: #{kcbert_forward.1} parent=1 // pred_fallthru
      _
    %2520 = vsyncpa [#allocation3], 1
    %2521 = vsyncpa [#allocation6], 1
    %2522 = vsyncpa [#allocation9], 1
    %2523 = vsyncpa [#allocation12], 1
    %2524 = vsyncpa [#allocation15], 1
    %2525 = vsyncpa [#allocation18], 1
    %2526 = vsyncpa [#allocation21], 1
    %2527 = vsyncpa [#allocation24], 1
    %2528 = vsyncpa [#allocation27], 1
    %2529 = vsyncpa [#allocation30], 1
    %2530 = vsyncpa [#allocation33], 1
    %2531 = vsyncpa [#allocation4], 1

</llo_original>
